<compile_context>
chip_gen: v6e
topology: v6e:2x2x1
jax: 0.10.0
libtpu: 0.0.40
codegen_flags: <defaults>
</compile_context>

<pallas_src>
import math

import jax
import jax.numpy as jnp
from jax.experimental import pallas as pl
from jax.experimental.pallas import tpu as pltpu

# ---- model hyper-parameters (consistent with the module's __init__) ----
INPUT_DIM = 4
HIDDEN_DIM = 32
NUM_LAYERS = 2
NUM_HEADS = 4
HEAD_DIM = HIDDEN_DIM // NUM_HEADS
FFN_DIM = 4 * HIDDEN_DIM
OUTPUT_LEN = 1
OUT_PAD = 128                 # lane-dense padded width of the head output
BATCH = 2
SEQ = 8
LN_EPS = 1e-5
LEAKY_SLOPE = 0.01
NEG_INF = -1e30               # finite large negative (robust vs. -inf)


# ----------------------------- in-kernel helpers --------------------------------
def _layernorm(x, gamma, beta):
    mu = jnp.mean(x, axis=-1, keepdims=True)
    var = jnp.mean((x - mu) ** 2, axis=-1, keepdims=True)
    return (x - mu) * jax.lax.rsqrt(var + LN_EPS) * gamma + beta


# --------------------------------- fused kernel ---------------------------------
def fused_forward_kernel(
    x_ref, we_ref, pebias_ref, mask_ref,
    wqkv_ref, bqkv_ref, wo_ref, bo_ref,
    g1_ref, be1_ref, w1_ref, b1_ref, w2_ref, b2_ref, g2_ref, be2_ref,
    sel_ref, fw1_ref, fb1_ref, fw2_ref, fb2_ref,
    o_ref,
):
    # ---- input embedding + positional encoding (bias folded into pebias) ----
    x = x_ref[...]                                              # (B*S, D)
    h = jnp.dot(x, we_ref[...], preferred_element_type=jnp.float32) + pebias_ref[...]
    mask = mask_ref[...]                                        # (B*S, B*S) additive

    # ---- N x TransformerEncoderLayer (post-norm, relu FFN) ----
    for l in range(NUM_LAYERS):
        wqkv = wqkv_ref[l]                                      # (H, 3H)  Q-cols pre-scaled
        bqkv = bqkv_ref[l]                                      # (1, 3H)
        wo = wo_ref[l]                                          # (H, H)
        bo = bo_ref[l]                                          # (1, H)

        qkv = jnp.dot(h, wqkv, preferred_element_type=jnp.float32) + bqkv

        attn = bo                                               # start from out-proj bias
        for hh in range(NUM_HEADS):
            lo = hh * HEAD_DIM
            hi = lo + HEAD_DIM
            qh = qkv[:, lo:hi]                                  # scale already folded in
            kh = qkv[:, HIDDEN_DIM + lo:HIDDEN_DIM + hi]
            vh = qkv[:, 2 * HIDDEN_DIM + lo:2 * HIDDEN_DIM + hi]

            # scores = qh @ kh^T  (contract last dims; block-diag causal mask)
            s = jax.lax.dot_general(
                qh, kh, (((1,), (1,)), ((), ())),
                preferred_element_type=jnp.float32,
            ) + mask
            s = s - jnp.max(s, axis=-1, keepdims=True)
            p = jnp.exp(s)
            p = p * pl.reciprocal(jnp.sum(p, axis=-1, keepdims=True), approx=True)

            oh = jnp.dot(p, vh, preferred_element_type=jnp.float32)        # (B*S, hd)
            # accumulate through the row-slice of the out projection (no concat;
            # row slices are sublane-aligned: lo in {0,8,16,24})
            attn = attn + jnp.dot(oh, wo[lo:hi, :],
                                  preferred_element_type=jnp.float32)

        h = _layernorm(h + attn, g1_ref[l], be1_ref[l])

        ff = jnp.dot(h, w1_ref[l], preferred_element_type=jnp.float32) + b1_ref[l]
        ff = jnp.maximum(ff, 0.0)                               # relu
        ff = jnp.dot(ff, w2_ref[l], preferred_element_type=jnp.float32) + b2_ref[l]

        h = _layernorm(h + ff, g2_ref[l], be2_ref[l])

    # ---- fused last-token selection + FC head (Dropout = identity) ----
    last = jnp.dot(sel_ref[...], h, preferred_element_type=jnp.float32)    # (B, H)
    z = jnp.dot(last, fw1_ref[...], preferred_element_type=jnp.float32) + fb1_ref[...]
    z = jnp.where(z >= 0, z, LEAKY_SLOPE * z)                   # LeakyReLU
    o_ref[...] = jnp.dot(z, fw2_ref[...], preferred_element_type=jnp.float32) + fb2_ref[...]


# ------------------------------ host-side wrapper --------------------------------
def _fused_call(x2, params):
    inputs = (
        x2,
        params["we"], params["pe_bias"], params["mask"],
        params["wqkv"], params["bqkv"], params["wo"], params["bo"],
        params["g1"], params["be1"], params["w1"], params["b1"],
        params["w2"], params["b2"], params["g2"], params["be2"],
        params["sel"],
        params["fw1"], params["fb1"], params["fw2p"], params["fb2p"],
    )
    vmem = pl.BlockSpec(memory_space=pltpu.MemorySpace.VMEM)
    return pl.pallas_call(
        fused_forward_kernel,
        out_shape=jax.ShapeDtypeStruct((BATCH, OUT_PAD), jnp.float32),
        in_specs=[vmem] * len(inputs),
        out_specs=vmem,
    )(*inputs)


@jax.jit
def transformer_forward(x, params):
    B, S, D = x.shape
    x2 = x.reshape(B * S, D)                   # fold batch into the sublane axis
    out_padded = _fused_call(x2, params)       # (B, 128) lane-dense
    out = out_padded[:, :OUTPUT_LEN]           # (B, 1)
    hidden_state = None                        # module always returns None here
    return out, hidden_state


# ------------------------------ parameter setup ---------------------------------
def _linear(key, fan_in, fan_out):
    kw, kb = jax.random.split(key)
    bound = 1.0 / math.sqrt(fan_in)
    w = jax.random.uniform(kw, (fan_in, fan_out), jnp.float32, -bound, bound)
    b = jax.random.uniform(kb, (1, fan_out), jnp.float32, -bound, bound)
    return w, b


def positional_encoding(seq_len, d_model):
    position = jnp.arange(seq_len, dtype=jnp.float32)[:, None]
    div_term = jnp.exp(
        jnp.arange(0, d_model, 2, dtype=jnp.float32) * (-math.log(10000.0) / d_model)
    )
    pe = jnp.zeros((seq_len, d_model), jnp.float32)
    pe = pe.at[:, 0::2].set(jnp.sin(position * div_term))
    pe = pe.at[:, 1::2].set(jnp.cos(position * div_term))
    return pe


def build_additive_mask():
    # block-diagonal (per batch element) + causal; additive 0 / NEG_INF
    idx = jnp.arange(BATCH * SEQ)
    row_b, col_b = idx[:, None] // SEQ, idx[None, :] // SEQ
    row_t, col_t = idx[:, None] % SEQ, idx[None, :] % SEQ
    allowed = (row_b == col_b) & (col_t <= row_t)
    return jnp.where(allowed, 0.0, NEG_INF).astype(jnp.float32)


def build_last_token_selector():
    sel = jnp.zeros((BATCH, BATCH * SEQ), jnp.float32)
    rows = jnp.arange(BATCH)
    cols = rows * SEQ + (SEQ - 1)
    return sel.at[rows, cols].set(1.0)


def init_params(key):
    keys = jax.random.split(key, 3 + 4 * NUM_LAYERS)
    ki = iter(keys)
    p = {}

    we, be = _linear(next(ki), INPUT_DIM, HIDDEN_DIM)
    pe = positional_encoding(SEQ, HIDDEN_DIM)
    p["we"] = we
    p["pe_bias"] = jnp.tile(pe + be, (BATCH, 1))                # (B*S, H) constant

    # fold the 1/sqrt(head_dim) attention scale into the Q part of in_proj
    # (done once at parameter-build time; numerically identical to scaling
    # the scores inside the kernel)
    q_scale = 1.0 / math.sqrt(HEAD_DIM)
    scale_cols = jnp.concatenate(
        [jnp.full((3 * HIDDEN_DIM,), 1.0, jnp.float32).at[:HIDDEN_DIM].set(q_scale)]
    )[None, :]                                                  # (1, 3H)

    stack = {k: [] for k in
             ["wqkv", "bqkv", "wo", "bo", "g1", "be1",
              "w1", "b1", "w2", "b2", "g2", "be2"]}
    for _ in range(NUM_LAYERS):
        wqkv, bqkv = _linear(next(ki), HIDDEN_DIM, 3 * HIDDEN_DIM)   # in_proj (pre-T)
        wqkv = wqkv * scale_cols
        bqkv = bqkv * scale_cols
        wo, bo = _linear(next(ki), HIDDEN_DIM, HIDDEN_DIM)           # out_proj
        w1, b1 = _linear(next(ki), HIDDEN_DIM, FFN_DIM)              # linear1
        w2, b2 = _linear(next(ki), FFN_DIM, HIDDEN_DIM)              # linear2
        stack["wqkv"].append(wqkv); stack["bqkv"].append(bqkv)
        stack["wo"].append(wo);     stack["bo"].append(bo)
        stack["w1"].append(w1);     stack["b1"].append(b1)
        stack["w2"].append(w2);     stack["b2"].append(b2)
        stack["g1"].append(jnp.ones((1, HIDDEN_DIM), jnp.float32))
        stack["be1"].append(jnp.zeros((1, HIDDEN_DIM), jnp.float32))
        stack["g2"].append(jnp.ones((1, HIDDEN_DIM), jnp.float32))
        stack["be2"].append(jnp.zeros((1, HIDDEN_DIM), jnp.float32))
    for k, v in stack.items():
        p[k] = jnp.stack(v)                                     # (L, ...)

    p["fw1"], p["fb1"] = _linear(next(ki), HIDDEN_DIM, HIDDEN_DIM // 2)
    fw2, fb2 = _linear(next(ki), HIDDEN_DIM // 2, OUTPUT_LEN)
    # lane-dense pad of the final head output: 1 -> 128 lanes (zero columns)
    p["fw2p"] = jnp.zeros((HIDDEN_DIM // 2, OUT_PAD), jnp.float32).at[:, :OUTPUT_LEN].set(fw2)
    p["fb2p"] = jnp.zeros((1, OUT_PAD), jnp.float32).at[:, :OUTPUT_LEN].set(fb2)

    p["mask"] = build_additive_mask()
    p["sel"] = build_last_token_selector()
    return p


# ------------------------------------ main ---------------------------------------
if __name__ == "__main__":
    key = jax.random.PRNGKey(0)
    kx, kp = jax.random.split(key)
    x = jax.random.normal(kx, (BATCH, SEQ, INPUT_DIM), dtype=jnp.float32)
    params = init_params(kp)

    out, hidden_state = transformer_forward(x, params)
    out = jax.block_until_ready(out)
    assert out.shape == (BATCH, OUTPUT_LEN)
    assert hidden_state is None
    assert bool(jnp.all(jnp.isfinite(out)))
    print("KERNEL_OK")
</pallas_src>

<mosaic_0001>
module attributes {stable_mosaic.version = 11 : i64} {
  func.func @fused_forward_kernel(%arg0: memref<16x4xf32, #tpu.memory_space<vmem>>, %arg1: memref<4x32xf32, #tpu.memory_space<vmem>>, %arg2: memref<16x32xf32, #tpu.memory_space<vmem>>, %arg3: memref<16x16xf32, #tpu.memory_space<vmem>>, %arg4: memref<2x32x96xf32, #tpu.memory_space<vmem>>, %arg5: memref<2x1x96xf32, #tpu.memory_space<vmem>>, %arg6: memref<2x32x32xf32, #tpu.memory_space<vmem>>, %arg7: memref<2x1x32xf32, #tpu.memory_space<vmem>>, %arg8: memref<2x1x32xf32, #tpu.memory_space<vmem>>, %arg9: memref<2x1x32xf32, #tpu.memory_space<vmem>>, %arg10: memref<2x32x128xf32, #tpu.memory_space<vmem>>, %arg11: memref<2x1x128xf32, #tpu.memory_space<vmem>>, %arg12: memref<2x128x32xf32, #tpu.memory_space<vmem>>, %arg13: memref<2x1x32xf32, #tpu.memory_space<vmem>>, %arg14: memref<2x1x32xf32, #tpu.memory_space<vmem>>, %arg15: memref<2x1x32xf32, #tpu.memory_space<vmem>>, %arg16: memref<2x16xf32, #tpu.memory_space<vmem>>, %arg17: memref<32x16xf32, #tpu.memory_space<vmem>>, %arg18: memref<1x16xf32, #tpu.memory_space<vmem>>, %arg19: memref<16x128xf32, #tpu.memory_space<vmem>>, %arg20: memref<1x128xf32, #tpu.memory_space<vmem>>, %arg21: memref<2x128xf32, #tpu.memory_space<vmem>>) attributes {dimension_semantics = [], scalar_prefetch = 0 : i64, scratch_operands = 0 : i64, tpu.core_type = #tpu.core_type<tc>} {
    %c0 = arith.constant 0 : index
    %c0_0 = arith.constant 0 : index
    %0 = vector.load %arg0[%c0, %c0_0] : memref<16x4xf32, #tpu.memory_space<vmem>>, vector<16x4xf32>
    %c0_1 = arith.constant 0 : index
    %c0_2 = arith.constant 0 : index
    %1 = vector.load %arg1[%c0_1, %c0_2] : memref<4x32xf32, #tpu.memory_space<vmem>>, vector<4x32xf32>
    %cst = arith.constant dense<0.000000e+00> : vector<16x32xf32>
    %2 = tpu.matmul %0, %1, %cst {dimension_numbers = #tpu.dot_dimension_numbers<[1], [0], [0], [1], [0, 0, 1, 1], [], []>} : vector<16x4xf32>, vector<4x32xf32>, vector<16x32xf32> -> vector<16x32xf32>
    %c0_3 = arith.constant 0 : index
    %c0_4 = arith.constant 0 : index
    %3 = vector.load %arg2[%c0_3, %c0_4] : memref<16x32xf32, #tpu.memory_space<vmem>>, vector<16x32xf32>
    %4 = arith.addf %2, %3 : vector<16x32xf32>
    %c0_5 = arith.constant 0 : index
    %c0_6 = arith.constant 0 : index
    %5 = vector.load %arg3[%c0_5, %c0_6] : memref<16x16xf32, #tpu.memory_space<vmem>>, vector<16x16xf32>
    %c0_7 = arith.constant 0 : index
    %c0_8 = arith.constant 0 : index
    %c0_9 = arith.constant 0 : index
    %6 = vector.load %arg4[%c0_7, %c0_8, %c0_9] : memref<2x32x96xf32, #tpu.memory_space<vmem>>, vector<1x32x96xf32>
    %7 = vector.shape_cast %6 : vector<1x32x96xf32> to vector<32x96xf32>
    %c0_10 = arith.constant 0 : index
    %c0_11 = arith.constant 0 : index
    %c0_12 = arith.constant 0 : index
    %8 = vector.load %arg5[%c0_10, %c0_11, %c0_12] : memref<2x1x96xf32, #tpu.memory_space<vmem>>, vector<1x1x96xf32>
    %9 = vector.shape_cast %8 : vector<1x1x96xf32> to vector<1x96xf32>
    %c0_13 = arith.constant 0 : index
    %c0_14 = arith.constant 0 : index
    %c0_15 = arith.constant 0 : index
    %10 = vector.load %arg6[%c0_13, %c0_14, %c0_15] : memref<2x32x32xf32, #tpu.memory_space<vmem>>, vector<1x32x32xf32>
    %11 = vector.shape_cast %10 : vector<1x32x32xf32> to vector<32x32xf32>
    %c0_16 = arith.constant 0 : index
    %c0_17 = arith.constant 0 : index
    %c0_18 = arith.constant 0 : index
    %12 = vector.load %arg7[%c0_16, %c0_17, %c0_18] : memref<2x1x32xf32, #tpu.memory_space<vmem>>, vector<1x1x32xf32>
    %13 = vector.shape_cast %12 : vector<1x1x32xf32> to vector<1x32xf32>
    %cst_19 = arith.constant dense<0.000000e+00> : vector<16x96xf32>
    %14 = tpu.matmul %4, %7, %cst_19 {dimension_numbers = #tpu.dot_dimension_numbers<[1], [0], [0], [1], [0, 0, 1, 1], [], []>} : vector<16x32xf32>, vector<32x96xf32>, vector<16x96xf32> -> vector<16x96xf32>
    %15 = vector.broadcast %9 : vector<1x96xf32> to vector<16x96xf32>
    %16 = arith.addf %14, %15 : vector<16x96xf32>
    %17 = vector.extract_strided_slice %16 {offsets = [0, 0], sizes = [16, 8], strides = [1, 1]} : vector<16x96xf32> to vector<16x8xf32>
    %18 = vector.extract_strided_slice %16 {offsets = [0, 32], sizes = [16, 8], strides = [1, 1]} : vector<16x96xf32> to vector<16x8xf32>
    %19 = vector.extract_strided_slice %16 {offsets = [0, 64], sizes = [16, 8], strides = [1, 1]} : vector<16x96xf32> to vector<16x8xf32>
    %cst_20 = arith.constant dense<0.000000e+00> : vector<16x16xf32>
    %20 = tpu.matmul %17, %18, %cst_20 {dimension_numbers = #tpu.dot_dimension_numbers<[1], [1], [0], [0], [0, 0, 1, 0], [], []>} : vector<16x8xf32>, vector<16x8xf32>, vector<16x16xf32> -> vector<16x16xf32>
    %21 = arith.addf %20, %5 : vector<16x16xf32>
    %cst_21 = arith.constant dense<0xFF800000> : vector<16xf32>
    %22 = vector.multi_reduction <maximumf>, %21, %cst_21 [1] : vector<16x16xf32> to vector<16xf32>
    %23 = vector.shape_cast %22 : vector<16xf32> to vector<16x1xf32>
    %24 = vector.broadcast %23 : vector<16x1xf32> to vector<16x16xf32>
    %25 = arith.subf %21, %24 : vector<16x16xf32>
    %26 = math.exp %25 : vector<16x16xf32>
    %cst_22 = arith.constant dense<0.000000e+00> : vector<16xf32>
    %27 = vector.multi_reduction <add>, %26, %cst_22 [1] : vector<16x16xf32> to vector<16xf32>
    %28 = vector.shape_cast %27 : vector<16xf32> to vector<16x1xf32>
    %29 = tpu.reciprocal %28 {approx = true} : vector<16x1xf32> -> vector<16x1xf32>
    %30 = vector.broadcast %29 : vector<16x1xf32> to vector<16x16xf32>
    %31 = arith.mulf %26, %30 : vector<16x16xf32>
    %cst_23 = arith.constant dense<0.000000e+00> : vector<16x8xf32>
    %32 = tpu.matmul %31, %19, %cst_23 {dimension_numbers = #tpu.dot_dimension_numbers<[1], [0], [0], [1], [0, 0, 1, 1], [], []>} : vector<16x16xf32>, vector<16x8xf32>, vector<16x8xf32> -> vector<16x8xf32>
    %33 = vector.extract_strided_slice %11 {offsets = [0, 0], sizes = [8, 32], strides = [1, 1]} : vector<32x32xf32> to vector<8x32xf32>
    %cst_24 = arith.constant dense<0.000000e+00> : vector<16x32xf32>
    %34 = tpu.matmul %32, %33, %cst_24 {dimension_numbers = #tpu.dot_dimension_numbers<[1], [0], [0], [1], [0, 0, 1, 1], [], []>} : vector<16x8xf32>, vector<8x32xf32>, vector<16x32xf32> -> vector<16x32xf32>
    %35 = vector.broadcast %13 : vector<1x32xf32> to vector<16x32xf32>
    %36 = arith.addf %35, %34 : vector<16x32xf32>
    %37 = vector.extract_strided_slice %16 {offsets = [0, 8], sizes = [16, 8], strides = [1, 1]} : vector<16x96xf32> to vector<16x8xf32>
    %38 = vector.extract_strided_slice %16 {offsets = [0, 40], sizes = [16, 8], strides = [1, 1]} : vector<16x96xf32> to vector<16x8xf32>
    %39 = vector.extract_strided_slice %16 {offsets = [0, 72], sizes = [16, 8], strides = [1, 1]} : vector<16x96xf32> to vector<16x8xf32>
    %cst_25 = arith.constant dense<0.000000e+00> : vector<16x16xf32>
    %40 = tpu.matmul %37, %38, %cst_25 {dimension_numbers = #tpu.dot_dimension_numbers<[1], [1], [0], [0], [0, 0, 1, 0], [], []>} : vector<16x8xf32>, vector<16x8xf32>, vector<16x16xf32> -> vector<16x16xf32>
    %41 = arith.addf %40, %5 : vector<16x16xf32>
    %cst_26 = arith.constant dense<0xFF800000> : vector<16xf32>
    %42 = vector.multi_reduction <maximumf>, %41, %cst_26 [1] : vector<16x16xf32> to vector<16xf32>
    %43 = vector.shape_cast %42 : vector<16xf32> to vector<16x1xf32>
    %44 = vector.broadcast %43 : vector<16x1xf32> to vector<16x16xf32>
    %45 = arith.subf %41, %44 : vector<16x16xf32>
    %46 = math.exp %45 : vector<16x16xf32>
    %cst_27 = arith.constant dense<0.000000e+00> : vector<16xf32>
    %47 = vector.multi_reduction <add>, %46, %cst_27 [1] : vector<16x16xf32> to vector<16xf32>
    %48 = vector.shape_cast %47 : vector<16xf32> to vector<16x1xf32>
    %49 = tpu.reciprocal %48 {approx = true} : vector<16x1xf32> -> vector<16x1xf32>
    %50 = vector.broadcast %49 : vector<16x1xf32> to vector<16x16xf32>
    %51 = arith.mulf %46, %50 : vector<16x16xf32>
    %cst_28 = arith.constant dense<0.000000e+00> : vector<16x8xf32>
    %52 = tpu.matmul %51, %39, %cst_28 {dimension_numbers = #tpu.dot_dimension_numbers<[1], [0], [0], [1], [0, 0, 1, 1], [], []>} : vector<16x16xf32>, vector<16x8xf32>, vector<16x8xf32> -> vector<16x8xf32>
    %53 = vector.extract_strided_slice %11 {offsets = [8, 0], sizes = [8, 32], strides = [1, 1]} : vector<32x32xf32> to vector<8x32xf32>
    %cst_29 = arith.constant dense<0.000000e+00> : vector<16x32xf32>
    %54 = tpu.matmul %52, %53, %cst_29 {dimension_numbers = #tpu.dot_dimension_numbers<[1], [0], [0], [1], [0, 0, 1, 1], [], []>} : vector<16x8xf32>, vector<8x32xf32>, vector<16x32xf32> -> vector<16x32xf32>
    %55 = arith.addf %36, %54 : vector<16x32xf32>
    %56 = vector.extract_strided_slice %16 {offsets = [0, 16], sizes = [16, 8], strides = [1, 1]} : vector<16x96xf32> to vector<16x8xf32>
    %57 = vector.extract_strided_slice %16 {offsets = [0, 48], sizes = [16, 8], strides = [1, 1]} : vector<16x96xf32> to vector<16x8xf32>
    %58 = vector.extract_strided_slice %16 {offsets = [0, 80], sizes = [16, 8], strides = [1, 1]} : vector<16x96xf32> to vector<16x8xf32>
    %cst_30 = arith.constant dense<0.000000e+00> : vector<16x16xf32>
    %59 = tpu.matmul %56, %57, %cst_30 {dimension_numbers = #tpu.dot_dimension_numbers<[1], [1], [0], [0], [0, 0, 1, 0], [], []>} : vector<16x8xf32>, vector<16x8xf32>, vector<16x16xf32> -> vector<16x16xf32>
    %60 = arith.addf %59, %5 : vector<16x16xf32>
    %cst_31 = arith.constant dense<0xFF800000> : vector<16xf32>
    %61 = vector.multi_reduction <maximumf>, %60, %cst_31 [1] : vector<16x16xf32> to vector<16xf32>
    %62 = vector.shape_cast %61 : vector<16xf32> to vector<16x1xf32>
    %63 = vector.broadcast %62 : vector<16x1xf32> to vector<16x16xf32>
    %64 = arith.subf %60, %63 : vector<16x16xf32>
    %65 = math.exp %64 : vector<16x16xf32>
    %cst_32 = arith.constant dense<0.000000e+00> : vector<16xf32>
    %66 = vector.multi_reduction <add>, %65, %cst_32 [1] : vector<16x16xf32> to vector<16xf32>
    %67 = vector.shape_cast %66 : vector<16xf32> to vector<16x1xf32>
    %68 = tpu.reciprocal %67 {approx = true} : vector<16x1xf32> -> vector<16x1xf32>
    %69 = vector.broadcast %68 : vector<16x1xf32> to vector<16x16xf32>
    %70 = arith.mulf %65, %69 : vector<16x16xf32>
    %cst_33 = arith.constant dense<0.000000e+00> : vector<16x8xf32>
    %71 = tpu.matmul %70, %58, %cst_33 {dimension_numbers = #tpu.dot_dimension_numbers<[1], [0], [0], [1], [0, 0, 1, 1], [], []>} : vector<16x16xf32>, vector<16x8xf32>, vector<16x8xf32> -> vector<16x8xf32>
    %72 = vector.extract_strided_slice %11 {offsets = [16, 0], sizes = [8, 32], strides = [1, 1]} : vector<32x32xf32> to vector<8x32xf32>
    %cst_34 = arith.constant dense<0.000000e+00> : vector<16x32xf32>
    %73 = tpu.matmul %71, %72, %cst_34 {dimension_numbers = #tpu.dot_dimension_numbers<[1], [0], [0], [1], [0, 0, 1, 1], [], []>} : vector<16x8xf32>, vector<8x32xf32>, vector<16x32xf32> -> vector<16x32xf32>
    %74 = arith.addf %55, %73 : vector<16x32xf32>
    %75 = vector.extract_strided_slice %16 {offsets = [0, 24], sizes = [16, 8], strides = [1, 1]} : vector<16x96xf32> to vector<16x8xf32>
    %76 = vector.extract_strided_slice %16 {offsets = [0, 56], sizes = [16, 8], strides = [1, 1]} : vector<16x96xf32> to vector<16x8xf32>
    %77 = vector.extract_strided_slice %16 {offsets = [0, 88], sizes = [16, 8], strides = [1, 1]} : vector<16x96xf32> to vector<16x8xf32>
    %cst_35 = arith.constant dense<0.000000e+00> : vector<16x16xf32>
    %78 = tpu.matmul %75, %76, %cst_35 {dimension_numbers = #tpu.dot_dimension_numbers<[1], [1], [0], [0], [0, 0, 1, 0], [], []>} : vector<16x8xf32>, vector<16x8xf32>, vector<16x16xf32> -> vector<16x16xf32>
    %79 = arith.addf %78, %5 : vector<16x16xf32>
    %cst_36 = arith.constant dense<0xFF800000> : vector<16xf32>
    %80 = vector.multi_reduction <maximumf>, %79, %cst_36 [1] : vector<16x16xf32> to vector<16xf32>
    %81 = vector.shape_cast %80 : vector<16xf32> to vector<16x1xf32>
    %82 = vector.broadcast %81 : vector<16x1xf32> to vector<16x16xf32>
    %83 = arith.subf %79, %82 : vector<16x16xf32>
    %84 = math.exp %83 : vector<16x16xf32>
    %cst_37 = arith.constant dense<0.000000e+00> : vector<16xf32>
    %85 = vector.multi_reduction <add>, %84, %cst_37 [1] : vector<16x16xf32> to vector<16xf32>
    %86 = vector.shape_cast %85 : vector<16xf32> to vector<16x1xf32>
    %87 = tpu.reciprocal %86 {approx = true} : vector<16x1xf32> -> vector<16x1xf32>
    %88 = vector.broadcast %87 : vector<16x1xf32> to vector<16x16xf32>
    %89 = arith.mulf %84, %88 : vector<16x16xf32>
    %cst_38 = arith.constant dense<0.000000e+00> : vector<16x8xf32>
    %90 = tpu.matmul %89, %77, %cst_38 {dimension_numbers = #tpu.dot_dimension_numbers<[1], [0], [0], [1], [0, 0, 1, 1], [], []>} : vector<16x16xf32>, vector<16x8xf32>, vector<16x8xf32> -> vector<16x8xf32>
    %91 = vector.extract_strided_slice %11 {offsets = [24, 0], sizes = [8, 32], strides = [1, 1]} : vector<32x32xf32> to vector<8x32xf32>
    %cst_39 = arith.constant dense<0.000000e+00> : vector<16x32xf32>
    %92 = tpu.matmul %90, %91, %cst_39 {dimension_numbers = #tpu.dot_dimension_numbers<[1], [0], [0], [1], [0, 0, 1, 1], [], []>} : vector<16x8xf32>, vector<8x32xf32>, vector<16x32xf32> -> vector<16x32xf32>
    %93 = arith.addf %74, %92 : vector<16x32xf32>
    %94 = arith.addf %4, %93 : vector<16x32xf32>
    %c0_40 = arith.constant 0 : index
    %c0_41 = arith.constant 0 : index
    %c0_42 = arith.constant 0 : index
    %95 = vector.load %arg8[%c0_40, %c0_41, %c0_42] : memref<2x1x32xf32, #tpu.memory_space<vmem>>, vector<1x1x32xf32>
    %96 = vector.shape_cast %95 : vector<1x1x32xf32> to vector<1x32xf32>
    %c0_43 = arith.constant 0 : index
    %c0_44 = arith.constant 0 : index
    %c0_45 = arith.constant 0 : index
    %97 = vector.load %arg9[%c0_43, %c0_44, %c0_45] : memref<2x1x32xf32, #tpu.memory_space<vmem>>, vector<1x1x32xf32>
    %98 = vector.shape_cast %97 : vector<1x1x32xf32> to vector<1x32xf32>
    %cst_46 = arith.constant dense<0.000000e+00> : vector<16xf32>
    %99 = vector.multi_reduction <add>, %94, %cst_46 [1] : vector<16x32xf32> to vector<16xf32>
    %100 = vector.shape_cast %99 : vector<16xf32> to vector<16x1xf32>
    %cst_47 = arith.constant 3.200000e+01 : f32
    %101 = vector.broadcast %cst_47 : f32 to vector<16x1xf32>
    %102 = arith.divf %100, %101 : vector<16x1xf32>
    %103 = vector.broadcast %102 : vector<16x1xf32> to vector<16x32xf32>
    %104 = arith.subf %94, %103 : vector<16x32xf32>
    %105 = arith.mulf %104, %104 : vector<16x32xf32>
    %cst_48 = arith.constant dense<0.000000e+00> : vector<16xf32>
    %106 = vector.multi_reduction <add>, %105, %cst_48 [1] : vector<16x32xf32> to vector<16xf32>
    %107 = vector.shape_cast %106 : vector<16xf32> to vector<16x1xf32>
    %cst_49 = arith.constant 3.200000e+01 : f32
    %108 = vector.broadcast %cst_49 : f32 to vector<16x1xf32>
    %109 = arith.divf %107, %108 : vector<16x1xf32>
    %110 = vector.broadcast %102 : vector<16x1xf32> to vector<16x32xf32>
    %111 = arith.subf %94, %110 : vector<16x32xf32>
    %cst_50 = arith.constant 9.99999974E-6 : f32
    %112 = vector.broadcast %cst_50 : f32 to vector<16x1xf32>
    %113 = arith.addf %109, %112 : vector<16x1xf32>
    %114 = math.rsqrt %113 : vector<16x1xf32>
    %115 = vector.broadcast %114 : vector<16x1xf32> to vector<16x32xf32>
    %116 = arith.mulf %111, %115 : vector<16x32xf32>
    %117 = vector.broadcast %96 : vector<1x32xf32> to vector<16x32xf32>
    %118 = arith.mulf %116, %117 : vector<16x32xf32>
    %119 = vector.broadcast %98 : vector<1x32xf32> to vector<16x32xf32>
    %120 = arith.addf %118, %119 : vector<16x32xf32>
    %c0_51 = arith.constant 0 : index
    %c0_52 = arith.constant 0 : index
    %c0_53 = arith.constant 0 : index
    %121 = vector.load %arg10[%c0_51, %c0_52, %c0_53] : memref<2x32x128xf32, #tpu.memory_space<vmem>>, vector<1x32x128xf32>
    %122 = vector.shape_cast %121 : vector<1x32x128xf32> to vector<32x128xf32>
    %cst_54 = arith.constant dense<0.000000e+00> : vector<16x128xf32>
    %123 = tpu.matmul %120, %122, %cst_54 {dimension_numbers = #tpu.dot_dimension_numbers<[1], [0], [0], [1], [0, 0, 1, 1], [], []>} : vector<16x32xf32>, vector<32x128xf32>, vector<16x128xf32> -> vector<16x128xf32>
    %c0_55 = arith.constant 0 : index
    %c0_56 = arith.constant 0 : index
    %c0_57 = arith.constant 0 : index
    %124 = vector.load %arg11[%c0_55, %c0_56, %c0_57] : memref<2x1x128xf32, #tpu.memory_space<vmem>>, vector<1x1x128xf32>
    %125 = vector.shape_cast %124 : vector<1x1x128xf32> to vector<1x128xf32>
    %126 = vector.broadcast %125 : vector<1x128xf32> to vector<16x128xf32>
    %127 = arith.addf %123, %126 : vector<16x128xf32>
    %cst_58 = arith.constant 0.000000e+00 : f32
    %128 = vector.broadcast %cst_58 : f32 to vector<16x128xf32>
    %129 = arith.maximumf %127, %128 : vector<16x128xf32>
    %c0_59 = arith.constant 0 : index
    %c0_60 = arith.constant 0 : index
    %c0_61 = arith.constant 0 : index
    %130 = vector.load %arg12[%c0_59, %c0_60, %c0_61] : memref<2x128x32xf32, #tpu.memory_space<vmem>>, vector<1x128x32xf32>
    %131 = vector.shape_cast %130 : vector<1x128x32xf32> to vector<128x32xf32>
    %cst_62 = arith.constant dense<0.000000e+00> : vector<16x32xf32>
    %132 = tpu.matmul %129, %131, %cst_62 {dimension_numbers = #tpu.dot_dimension_numbers<[1], [0], [0], [1], [0, 0, 1, 1], [], []>} : vector<16x128xf32>, vector<128x32xf32>, vector<16x32xf32> -> vector<16x32xf32>
    %c0_63 = arith.constant 0 : index
    %c0_64 = arith.constant 0 : index
    %c0_65 = arith.constant 0 : index
    %133 = vector.load %arg13[%c0_63, %c0_64, %c0_65] : memref<2x1x32xf32, #tpu.memory_space<vmem>>, vector<1x1x32xf32>
    %134 = vector.shape_cast %133 : vector<1x1x32xf32> to vector<1x32xf32>
    %135 = vector.broadcast %134 : vector<1x32xf32> to vector<16x32xf32>
    %136 = arith.addf %132, %135 : vector<16x32xf32>
    %137 = arith.addf %120, %136 : vector<16x32xf32>
    %c0_66 = arith.constant 0 : index
    %c0_67 = arith.constant 0 : index
    %c0_68 = arith.constant 0 : index
    %138 = vector.load %arg14[%c0_66, %c0_67, %c0_68] : memref<2x1x32xf32, #tpu.memory_space<vmem>>, vector<1x1x32xf32>
    %139 = vector.shape_cast %138 : vector<1x1x32xf32> to vector<1x32xf32>
    %c0_69 = arith.constant 0 : index
    %c0_70 = arith.constant 0 : index
    %c0_71 = arith.constant 0 : index
    %140 = vector.load %arg15[%c0_69, %c0_70, %c0_71] : memref<2x1x32xf32, #tpu.memory_space<vmem>>, vector<1x1x32xf32>
    %141 = vector.shape_cast %140 : vector<1x1x32xf32> to vector<1x32xf32>
    %cst_72 = arith.constant dense<0.000000e+00> : vector<16xf32>
    %142 = vector.multi_reduction <add>, %137, %cst_72 [1] : vector<16x32xf32> to vector<16xf32>
    %143 = vector.shape_cast %142 : vector<16xf32> to vector<16x1xf32>
    %cst_73 = arith.constant 3.200000e+01 : f32
    %144 = vector.broadcast %cst_73 : f32 to vector<16x1xf32>
    %145 = arith.divf %143, %144 : vector<16x1xf32>
    %146 = vector.broadcast %145 : vector<16x1xf32> to vector<16x32xf32>
    %147 = arith.subf %137, %146 : vector<16x32xf32>
    %148 = arith.mulf %147, %147 : vector<16x32xf32>
    %cst_74 = arith.constant dense<0.000000e+00> : vector<16xf32>
    %149 = vector.multi_reduction <add>, %148, %cst_74 [1] : vector<16x32xf32> to vector<16xf32>
    %150 = vector.shape_cast %149 : vector<16xf32> to vector<16x1xf32>
    %cst_75 = arith.constant 3.200000e+01 : f32
    %151 = vector.broadcast %cst_75 : f32 to vector<16x1xf32>
    %152 = arith.divf %150, %151 : vector<16x1xf32>
    %153 = vector.broadcast %145 : vector<16x1xf32> to vector<16x32xf32>
    %154 = arith.subf %137, %153 : vector<16x32xf32>
    %cst_76 = arith.constant 9.99999974E-6 : f32
    %155 = vector.broadcast %cst_76 : f32 to vector<16x1xf32>
    %156 = arith.addf %152, %155 : vector<16x1xf32>
    %157 = math.rsqrt %156 : vector<16x1xf32>
    %158 = vector.broadcast %157 : vector<16x1xf32> to vector<16x32xf32>
    %159 = arith.mulf %154, %158 : vector<16x32xf32>
    %160 = vector.broadcast %139 : vector<1x32xf32> to vector<16x32xf32>
    %161 = arith.mulf %159, %160 : vector<16x32xf32>
    %162 = vector.broadcast %141 : vector<1x32xf32> to vector<16x32xf32>
    %163 = arith.addf %161, %162 : vector<16x32xf32>
    %c1 = arith.constant 1 : index
    %c0_77 = arith.constant 0 : index
    %c0_78 = arith.constant 0 : index
    %164 = vector.load %arg4[%c1, %c0_77, %c0_78] : memref<2x32x96xf32, #tpu.memory_space<vmem>>, vector<1x32x96xf32>
    %165 = vector.shape_cast %164 : vector<1x32x96xf32> to vector<32x96xf32>
    %c1_79 = arith.constant 1 : index
    %c0_80 = arith.constant 0 : index
    %c0_81 = arith.constant 0 : index
    %166 = vector.load %arg5[%c1_79, %c0_80, %c0_81] : memref<2x1x96xf32, #tpu.memory_space<vmem>>, vector<1x1x96xf32>
    %167 = vector.shape_cast %166 : vector<1x1x96xf32> to vector<1x96xf32>
    %c1_82 = arith.constant 1 : index
    %c0_83 = arith.constant 0 : index
    %c0_84 = arith.constant 0 : index
    %168 = vector.load %arg6[%c1_82, %c0_83, %c0_84] : memref<2x32x32xf32, #tpu.memory_space<vmem>>, vector<1x32x32xf32>
    %169 = vector.shape_cast %168 : vector<1x32x32xf32> to vector<32x32xf32>
    %c1_85 = arith.constant 1 : index
    %c0_86 = arith.constant 0 : index
    %c0_87 = arith.constant 0 : index
    %170 = vector.load %arg7[%c1_85, %c0_86, %c0_87] : memref<2x1x32xf32, #tpu.memory_space<vmem>>, vector<1x1x32xf32>
    %171 = vector.shape_cast %170 : vector<1x1x32xf32> to vector<1x32xf32>
    %cst_88 = arith.constant dense<0.000000e+00> : vector<16x96xf32>
    %172 = tpu.matmul %163, %165, %cst_88 {dimension_numbers = #tpu.dot_dimension_numbers<[1], [0], [0], [1], [0, 0, 1, 1], [], []>} : vector<16x32xf32>, vector<32x96xf32>, vector<16x96xf32> -> vector<16x96xf32>
    %173 = vector.broadcast %167 : vector<1x96xf32> to vector<16x96xf32>
    %174 = arith.addf %172, %173 : vector<16x96xf32>
    %175 = vector.extract_strided_slice %174 {offsets = [0, 0], sizes = [16, 8], strides = [1, 1]} : vector<16x96xf32> to vector<16x8xf32>
    %176 = vector.extract_strided_slice %174 {offsets = [0, 32], sizes = [16, 8], strides = [1, 1]} : vector<16x96xf32> to vector<16x8xf32>
    %177 = vector.extract_strided_slice %174 {offsets = [0, 64], sizes = [16, 8], strides = [1, 1]} : vector<16x96xf32> to vector<16x8xf32>
    %cst_89 = arith.constant dense<0.000000e+00> : vector<16x16xf32>
    %178 = tpu.matmul %175, %176, %cst_89 {dimension_numbers = #tpu.dot_dimension_numbers<[1], [1], [0], [0], [0, 0, 1, 0], [], []>} : vector<16x8xf32>, vector<16x8xf32>, vector<16x16xf32> -> vector<16x16xf32>
    %179 = arith.addf %178, %5 : vector<16x16xf32>
    %cst_90 = arith.constant dense<0xFF800000> : vector<16xf32>
    %180 = vector.multi_reduction <maximumf>, %179, %cst_90 [1] : vector<16x16xf32> to vector<16xf32>
    %181 = vector.shape_cast %180 : vector<16xf32> to vector<16x1xf32>
    %182 = vector.broadcast %181 : vector<16x1xf32> to vector<16x16xf32>
    %183 = arith.subf %179, %182 : vector<16x16xf32>
    %184 = math.exp %183 : vector<16x16xf32>
    %cst_91 = arith.constant dense<0.000000e+00> : vector<16xf32>
    %185 = vector.multi_reduction <add>, %184, %cst_91 [1] : vector<16x16xf32> to vector<16xf32>
    %186 = vector.shape_cast %185 : vector<16xf32> to vector<16x1xf32>
    %187 = tpu.reciprocal %186 {approx = true} : vector<16x1xf32> -> vector<16x1xf32>
    %188 = vector.broadcast %187 : vector<16x1xf32> to vector<16x16xf32>
    %189 = arith.mulf %184, %188 : vector<16x16xf32>
    %cst_92 = arith.constant dense<0.000000e+00> : vector<16x8xf32>
    %190 = tpu.matmul %189, %177, %cst_92 {dimension_numbers = #tpu.dot_dimension_numbers<[1], [0], [0], [1], [0, 0, 1, 1], [], []>} : vector<16x16xf32>, vector<16x8xf32>, vector<16x8xf32> -> vector<16x8xf32>
    %191 = vector.extract_strided_slice %169 {offsets = [0, 0], sizes = [8, 32], strides = [1, 1]} : vector<32x32xf32> to vector<8x32xf32>
    %cst_93 = arith.constant dense<0.000000e+00> : vector<16x32xf32>
    %192 = tpu.matmul %190, %191, %cst_93 {dimension_numbers = #tpu.dot_dimension_numbers<[1], [0], [0], [1], [0, 0, 1, 1], [], []>} : vector<16x8xf32>, vector<8x32xf32>, vector<16x32xf32> -> vector<16x32xf32>
    %193 = vector.broadcast %171 : vector<1x32xf32> to vector<16x32xf32>
    %194 = arith.addf %193, %192 : vector<16x32xf32>
    %195 = vector.extract_strided_slice %174 {offsets = [0, 8], sizes = [16, 8], strides = [1, 1]} : vector<16x96xf32> to vector<16x8xf32>
    %196 = vector.extract_strided_slice %174 {offsets = [0, 40], sizes = [16, 8], strides = [1, 1]} : vector<16x96xf32> to vector<16x8xf32>
    %197 = vector.extract_strided_slice %174 {offsets = [0, 72], sizes = [16, 8], strides = [1, 1]} : vector<16x96xf32> to vector<16x8xf32>
    %cst_94 = arith.constant dense<0.000000e+00> : vector<16x16xf32>
    %198 = tpu.matmul %195, %196, %cst_94 {dimension_numbers = #tpu.dot_dimension_numbers<[1], [1], [0], [0], [0, 0, 1, 0], [], []>} : vector<16x8xf32>, vector<16x8xf32>, vector<16x16xf32> -> vector<16x16xf32>
    %199 = arith.addf %198, %5 : vector<16x16xf32>
    %cst_95 = arith.constant dense<0xFF800000> : vector<16xf32>
    %200 = vector.multi_reduction <maximumf>, %199, %cst_95 [1] : vector<16x16xf32> to vector<16xf32>
    %201 = vector.shape_cast %200 : vector<16xf32> to vector<16x1xf32>
    %202 = vector.broadcast %201 : vector<16x1xf32> to vector<16x16xf32>
    %203 = arith.subf %199, %202 : vector<16x16xf32>
    %204 = math.exp %203 : vector<16x16xf32>
    %cst_96 = arith.constant dense<0.000000e+00> : vector<16xf32>
    %205 = vector.multi_reduction <add>, %204, %cst_96 [1] : vector<16x16xf32> to vector<16xf32>
    %206 = vector.shape_cast %205 : vector<16xf32> to vector<16x1xf32>
    %207 = tpu.reciprocal %206 {approx = true} : vector<16x1xf32> -> vector<16x1xf32>
    %208 = vector.broadcast %207 : vector<16x1xf32> to vector<16x16xf32>
    %209 = arith.mulf %204, %208 : vector<16x16xf32>
    %cst_97 = arith.constant dense<0.000000e+00> : vector<16x8xf32>
    %210 = tpu.matmul %209, %197, %cst_97 {dimension_numbers = #tpu.dot_dimension_numbers<[1], [0], [0], [1], [0, 0, 1, 1], [], []>} : vector<16x16xf32>, vector<16x8xf32>, vector<16x8xf32> -> vector<16x8xf32>
    %211 = vector.extract_strided_slice %169 {offsets = [8, 0], sizes = [8, 32], strides = [1, 1]} : vector<32x32xf32> to vector<8x32xf32>
    %cst_98 = arith.constant dense<0.000000e+00> : vector<16x32xf32>
    %212 = tpu.matmul %210, %211, %cst_98 {dimension_numbers = #tpu.dot_dimension_numbers<[1], [0], [0], [1], [0, 0, 1, 1], [], []>} : vector<16x8xf32>, vector<8x32xf32>, vector<16x32xf32> -> vector<16x32xf32>
    %213 = arith.addf %194, %212 : vector<16x32xf32>
    %214 = vector.extract_strided_slice %174 {offsets = [0, 16], sizes = [16, 8], strides = [1, 1]} : vector<16x96xf32> to vector<16x8xf32>
    %215 = vector.extract_strided_slice %174 {offsets = [0, 48], sizes = [16, 8], strides = [1, 1]} : vector<16x96xf32> to vector<16x8xf32>
    %216 = vector.extract_strided_slice %174 {offsets = [0, 80], sizes = [16, 8], strides = [1, 1]} : vector<16x96xf32> to vector<16x8xf32>
    %cst_99 = arith.constant dense<0.000000e+00> : vector<16x16xf32>
    %217 = tpu.matmul %214, %215, %cst_99 {dimension_numbers = #tpu.dot_dimension_numbers<[1], [1], [0], [0], [0, 0, 1, 0], [], []>} : vector<16x8xf32>, vector<16x8xf32>, vector<16x16xf32> -> vector<16x16xf32>
    %218 = arith.addf %217, %5 : vector<16x16xf32>
    %cst_100 = arith.constant dense<0xFF800000> : vector<16xf32>
    %219 = vector.multi_reduction <maximumf>, %218, %cst_100 [1] : vector<16x16xf32> to vector<16xf32>
    %220 = vector.shape_cast %219 : vector<16xf32> to vector<16x1xf32>
    %221 = vector.broadcast %220 : vector<16x1xf32> to vector<16x16xf32>
    %222 = arith.subf %218, %221 : vector<16x16xf32>
    %223 = math.exp %222 : vector<16x16xf32>
    %cst_101 = arith.constant dense<0.000000e+00> : vector<16xf32>
    %224 = vector.multi_reduction <add>, %223, %cst_101 [1] : vector<16x16xf32> to vector<16xf32>
    %225 = vector.shape_cast %224 : vector<16xf32> to vector<16x1xf32>
    %226 = tpu.reciprocal %225 {approx = true} : vector<16x1xf32> -> vector<16x1xf32>
    %227 = vector.broadcast %226 : vector<16x1xf32> to vector<16x16xf32>
    %228 = arith.mulf %223, %227 : vector<16x16xf32>
    %cst_102 = arith.constant dense<0.000000e+00> : vector<16x8xf32>
    %229 = tpu.matmul %228, %216, %cst_102 {dimension_numbers = #tpu.dot_dimension_numbers<[1], [0], [0], [1], [0, 0, 1, 1], [], []>} : vector<16x16xf32>, vector<16x8xf32>, vector<16x8xf32> -> vector<16x8xf32>
    %230 = vector.extract_strided_slice %169 {offsets = [16, 0], sizes = [8, 32], strides = [1, 1]} : vector<32x32xf32> to vector<8x32xf32>
    %cst_103 = arith.constant dense<0.000000e+00> : vector<16x32xf32>
    %231 = tpu.matmul %229, %230, %cst_103 {dimension_numbers = #tpu.dot_dimension_numbers<[1], [0], [0], [1], [0, 0, 1, 1], [], []>} : vector<16x8xf32>, vector<8x32xf32>, vector<16x32xf32> -> vector<16x32xf32>
    %232 = arith.addf %213, %231 : vector<16x32xf32>
    %233 = vector.extract_strided_slice %174 {offsets = [0, 24], sizes = [16, 8], strides = [1, 1]} : vector<16x96xf32> to vector<16x8xf32>
    %234 = vector.extract_strided_slice %174 {offsets = [0, 56], sizes = [16, 8], strides = [1, 1]} : vector<16x96xf32> to vector<16x8xf32>
    %235 = vector.extract_strided_slice %174 {offsets = [0, 88], sizes = [16, 8], strides = [1, 1]} : vector<16x96xf32> to vector<16x8xf32>
    %cst_104 = arith.constant dense<0.000000e+00> : vector<16x16xf32>
    %236 = tpu.matmul %233, %234, %cst_104 {dimension_numbers = #tpu.dot_dimension_numbers<[1], [1], [0], [0], [0, 0, 1, 0], [], []>} : vector<16x8xf32>, vector<16x8xf32>, vector<16x16xf32> -> vector<16x16xf32>
    %237 = arith.addf %236, %5 : vector<16x16xf32>
    %cst_105 = arith.constant dense<0xFF800000> : vector<16xf32>
    %238 = vector.multi_reduction <maximumf>, %237, %cst_105 [1] : vector<16x16xf32> to vector<16xf32>
    %239 = vector.shape_cast %238 : vector<16xf32> to vector<16x1xf32>
    %240 = vector.broadcast %239 : vector<16x1xf32> to vector<16x16xf32>
    %241 = arith.subf %237, %240 : vector<16x16xf32>
    %242 = math.exp %241 : vector<16x16xf32>
    %cst_106 = arith.constant dense<0.000000e+00> : vector<16xf32>
    %243 = vector.multi_reduction <add>, %242, %cst_106 [1] : vector<16x16xf32> to vector<16xf32>
    %244 = vector.shape_cast %243 : vector<16xf32> to vector<16x1xf32>
    %245 = tpu.reciprocal %244 {approx = true} : vector<16x1xf32> -> vector<16x1xf32>
    %246 = vector.broadcast %245 : vector<16x1xf32> to vector<16x16xf32>
    %247 = arith.mulf %242, %246 : vector<16x16xf32>
    %cst_107 = arith.constant dense<0.000000e+00> : vector<16x8xf32>
    %248 = tpu.matmul %247, %235, %cst_107 {dimension_numbers = #tpu.dot_dimension_numbers<[1], [0], [0], [1], [0, 0, 1, 1], [], []>} : vector<16x16xf32>, vector<16x8xf32>, vector<16x8xf32> -> vector<16x8xf32>
    %249 = vector.extract_strided_slice %169 {offsets = [24, 0], sizes = [8, 32], strides = [1, 1]} : vector<32x32xf32> to vector<8x32xf32>
    %cst_108 = arith.constant dense<0.000000e+00> : vector<16x32xf32>
    %250 = tpu.matmul %248, %249, %cst_108 {dimension_numbers = #tpu.dot_dimension_numbers<[1], [0], [0], [1], [0, 0, 1, 1], [], []>} : vector<16x8xf32>, vector<8x32xf32>, vector<16x32xf32> -> vector<16x32xf32>
    %251 = arith.addf %232, %250 : vector<16x32xf32>
    %252 = arith.addf %163, %251 : vector<16x32xf32>
    %c1_109 = arith.constant 1 : index
    %c0_110 = arith.constant 0 : index
    %c0_111 = arith.constant 0 : index
    %253 = vector.load %arg8[%c1_109, %c0_110, %c0_111] : memref<2x1x32xf32, #tpu.memory_space<vmem>>, vector<1x1x32xf32>
    %254 = vector.shape_cast %253 : vector<1x1x32xf32> to vector<1x32xf32>
    %c1_112 = arith.constant 1 : index
    %c0_113 = arith.constant 0 : index
    %c0_114 = arith.constant 0 : index
    %255 = vector.load %arg9[%c1_112, %c0_113, %c0_114] : memref<2x1x32xf32, #tpu.memory_space<vmem>>, vector<1x1x32xf32>
    %256 = vector.shape_cast %255 : vector<1x1x32xf32> to vector<1x32xf32>
    %cst_115 = arith.constant dense<0.000000e+00> : vector<16xf32>
    %257 = vector.multi_reduction <add>, %252, %cst_115 [1] : vector<16x32xf32> to vector<16xf32>
    %258 = vector.shape_cast %257 : vector<16xf32> to vector<16x1xf32>
    %cst_116 = arith.constant 3.200000e+01 : f32
    %259 = vector.broadcast %cst_116 : f32 to vector<16x1xf32>
    %260 = arith.divf %258, %259 : vector<16x1xf32>
    %261 = vector.broadcast %260 : vector<16x1xf32> to vector<16x32xf32>
    %262 = arith.subf %252, %261 : vector<16x32xf32>
    %263 = arith.mulf %262, %262 : vector<16x32xf32>
    %cst_117 = arith.constant dense<0.000000e+00> : vector<16xf32>
    %264 = vector.multi_reduction <add>, %263, %cst_117 [1] : vector<16x32xf32> to vector<16xf32>
    %265 = vector.shape_cast %264 : vector<16xf32> to vector<16x1xf32>
    %cst_118 = arith.constant 3.200000e+01 : f32
    %266 = vector.broadcast %cst_118 : f32 to vector<16x1xf32>
    %267 = arith.divf %265, %266 : vector<16x1xf32>
    %268 = vector.broadcast %260 : vector<16x1xf32> to vector<16x32xf32>
    %269 = arith.subf %252, %268 : vector<16x32xf32>
    %cst_119 = arith.constant 9.99999974E-6 : f32
    %270 = vector.broadcast %cst_119 : f32 to vector<16x1xf32>
    %271 = arith.addf %267, %270 : vector<16x1xf32>
    %272 = math.rsqrt %271 : vector<16x1xf32>
    %273 = vector.broadcast %272 : vector<16x1xf32> to vector<16x32xf32>
    %274 = arith.mulf %269, %273 : vector<16x32xf32>
    %275 = vector.broadcast %254 : vector<1x32xf32> to vector<16x32xf32>
    %276 = arith.mulf %274, %275 : vector<16x32xf32>
    %277 = vector.broadcast %256 : vector<1x32xf32> to vector<16x32xf32>
    %278 = arith.addf %276, %277 : vector<16x32xf32>
    %c1_120 = arith.constant 1 : index
    %c0_121 = arith.constant 0 : index
    %c0_122 = arith.constant 0 : index
    %279 = vector.load %arg10[%c1_120, %c0_121, %c0_122] : memref<2x32x128xf32, #tpu.memory_space<vmem>>, vector<1x32x128xf32>
    %280 = vector.shape_cast %279 : vector<1x32x128xf32> to vector<32x128xf32>
    %cst_123 = arith.constant dense<0.000000e+00> : vector<16x128xf32>
    %281 = tpu.matmul %278, %280, %cst_123 {dimension_numbers = #tpu.dot_dimension_numbers<[1], [0], [0], [1], [0, 0, 1, 1], [], []>} : vector<16x32xf32>, vector<32x128xf32>, vector<16x128xf32> -> vector<16x128xf32>
    %c1_124 = arith.constant 1 : index
    %c0_125 = arith.constant 0 : index
    %c0_126 = arith.constant 0 : index
    %282 = vector.load %arg11[%c1_124, %c0_125, %c0_126] : memref<2x1x128xf32, #tpu.memory_space<vmem>>, vector<1x1x128xf32>
    %283 = vector.shape_cast %282 : vector<1x1x128xf32> to vector<1x128xf32>
    %284 = vector.broadcast %283 : vector<1x128xf32> to vector<16x128xf32>
    %285 = arith.addf %281, %284 : vector<16x128xf32>
    %cst_127 = arith.constant 0.000000e+00 : f32
    %286 = vector.broadcast %cst_127 : f32 to vector<16x128xf32>
    %287 = arith.maximumf %285, %286 : vector<16x128xf32>
    %c1_128 = arith.constant 1 : index
    %c0_129 = arith.constant 0 : index
    %c0_130 = arith.constant 0 : index
    %288 = vector.load %arg12[%c1_128, %c0_129, %c0_130] : memref<2x128x32xf32, #tpu.memory_space<vmem>>, vector<1x128x32xf32>
    %289 = vector.shape_cast %288 : vector<1x128x32xf32> to vector<128x32xf32>
    %cst_131 = arith.constant dense<0.000000e+00> : vector<16x32xf32>
    %290 = tpu.matmul %287, %289, %cst_131 {dimension_numbers = #tpu.dot_dimension_numbers<[1], [0], [0], [1], [0, 0, 1, 1], [], []>} : vector<16x128xf32>, vector<128x32xf32>, vector<16x32xf32> -> vector<16x32xf32>
    %c1_132 = arith.constant 1 : index
    %c0_133 = arith.constant 0 : index
    %c0_134 = arith.constant 0 : index
    %291 = vector.load %arg13[%c1_132, %c0_133, %c0_134] : memref<2x1x32xf32, #tpu.memory_space<vmem>>, vector<1x1x32xf32>
    %292 = vector.shape_cast %291 : vector<1x1x32xf32> to vector<1x32xf32>
    %293 = vector.broadcast %292 : vector<1x32xf32> to vector<16x32xf32>
    %294 = arith.addf %290, %293 : vector<16x32xf32>
    %295 = arith.addf %278, %294 : vector<16x32xf32>
    %c1_135 = arith.constant 1 : index
    %c0_136 = arith.constant 0 : index
    %c0_137 = arith.constant 0 : index
    %296 = vector.load %arg14[%c1_135, %c0_136, %c0_137] : memref<2x1x32xf32, #tpu.memory_space<vmem>>, vector<1x1x32xf32>
    %297 = vector.shape_cast %296 : vector<1x1x32xf32> to vector<1x32xf32>
    %c1_138 = arith.constant 1 : index
    %c0_139 = arith.constant 0 : index
    %c0_140 = arith.constant 0 : index
    %298 = vector.load %arg15[%c1_138, %c0_139, %c0_140] : memref<2x1x32xf32, #tpu.memory_space<vmem>>, vector<1x1x32xf32>
    %299 = vector.shape_cast %298 : vector<1x1x32xf32> to vector<1x32xf32>
    %cst_141 = arith.constant dense<0.000000e+00> : vector<16xf32>
    %300 = vector.multi_reduction <add>, %295, %cst_141 [1] : vector<16x32xf32> to vector<16xf32>
    %301 = vector.shape_cast %300 : vector<16xf32> to vector<16x1xf32>
    %cst_142 = arith.constant 3.200000e+01 : f32
    %302 = vector.broadcast %cst_142 : f32 to vector<16x1xf32>
    %303 = arith.divf %301, %302 : vector<16x1xf32>
    %304 = vector.broadcast %303 : vector<16x1xf32> to vector<16x32xf32>
    %305 = arith.subf %295, %304 : vector<16x32xf32>
    %306 = arith.mulf %305, %305 : vector<16x32xf32>
    %cst_143 = arith.constant dense<0.000000e+00> : vector<16xf32>
    %307 = vector.multi_reduction <add>, %306, %cst_143 [1] : vector<16x32xf32> to vector<16xf32>
    %308 = vector.shape_cast %307 : vector<16xf32> to vector<16x1xf32>
    %cst_144 = arith.constant 3.200000e+01 : f32
    %309 = vector.broadcast %cst_144 : f32 to vector<16x1xf32>
    %310 = arith.divf %308, %309 : vector<16x1xf32>
    %311 = vector.broadcast %303 : vector<16x1xf32> to vector<16x32xf32>
    %312 = arith.subf %295, %311 : vector<16x32xf32>
    %cst_145 = arith.constant 9.99999974E-6 : f32
    %313 = vector.broadcast %cst_145 : f32 to vector<16x1xf32>
    %314 = arith.addf %310, %313 : vector<16x1xf32>
    %315 = math.rsqrt %314 : vector<16x1xf32>
    %316 = vector.broadcast %315 : vector<16x1xf32> to vector<16x32xf32>
    %317 = arith.mulf %312, %316 : vector<16x32xf32>
    %318 = vector.broadcast %297 : vector<1x32xf32> to vector<16x32xf32>
    %319 = arith.mulf %317, %318 : vector<16x32xf32>
    %320 = vector.broadcast %299 : vector<1x32xf32> to vector<16x32xf32>
    %321 = arith.addf %319, %320 : vector<16x32xf32>
    %c0_146 = arith.constant 0 : index
    %c0_147 = arith.constant 0 : index
    %322 = vector.load %arg16[%c0_146, %c0_147] : memref<2x16xf32, #tpu.memory_space<vmem>>, vector<2x16xf32>
    %cst_148 = arith.constant dense<0.000000e+00> : vector<2x32xf32>
    %323 = tpu.matmul %322, %321, %cst_148 {dimension_numbers = #tpu.dot_dimension_numbers<[1], [0], [0], [1], [0, 0, 1, 1], [], []>} : vector<2x16xf32>, vector<16x32xf32>, vector<2x32xf32> -> vector<2x32xf32>
    %c0_149 = arith.constant 0 : index
    %c0_150 = arith.constant 0 : index
    %324 = vector.load %arg17[%c0_149, %c0_150] : memref<32x16xf32, #tpu.memory_space<vmem>>, vector<32x16xf32>
    %cst_151 = arith.constant dense<0.000000e+00> : vector<2x16xf32>
    %325 = tpu.matmul %323, %324, %cst_151 {dimension_numbers = #tpu.dot_dimension_numbers<[1], [0], [0], [1], [0, 0, 1, 1], [], []>} : vector<2x32xf32>, vector<32x16xf32>, vector<2x16xf32> -> vector<2x16xf32>
    %c0_152 = arith.constant 0 : index
    %c0_153 = arith.constant 0 : index
    %326 = vector.load %arg18[%c0_152, %c0_153] : memref<1x16xf32, #tpu.memory_space<vmem>>, vector<1x16xf32>
    %327 = vector.broadcast %326 : vector<1x16xf32> to vector<2x16xf32>
    %328 = arith.addf %325, %327 : vector<2x16xf32>
    %cst_154 = arith.constant 0.000000e+00 : f32
    %329 = vector.broadcast %cst_154 : f32 to vector<2x16xf32>
    %330 = arith.cmpf oge, %328, %329 : vector<2x16xf32>
    %cst_155 = arith.constant 0.00999999977 : f32
    %331 = vector.broadcast %cst_155 : f32 to vector<2x16xf32>
    %332 = arith.mulf %331, %328 : vector<2x16xf32>
    %333 = arith.select %330, %328, %332 : vector<2x16xi1>, vector<2x16xf32>
    %c0_156 = arith.constant 0 : index
    %c0_157 = arith.constant 0 : index
    %334 = vector.load %arg19[%c0_156, %c0_157] : memref<16x128xf32, #tpu.memory_space<vmem>>, vector<16x128xf32>
    %cst_158 = arith.constant dense<0.000000e+00> : vector<2x128xf32>
    %335 = tpu.matmul %333, %334, %cst_158 {dimension_numbers = #tpu.dot_dimension_numbers<[1], [0], [0], [1], [0, 0, 1, 1], [], []>} : vector<2x16xf32>, vector<16x128xf32>, vector<2x128xf32> -> vector<2x128xf32>
    %c0_159 = arith.constant 0 : index
    %c0_160 = arith.constant 0 : index
    %336 = vector.load %arg20[%c0_159, %c0_160] : memref<1x128xf32, #tpu.memory_space<vmem>>, vector<1x128xf32>
    %337 = vector.broadcast %336 : vector<1x128xf32> to vector<2x128xf32>
    %338 = arith.addf %335, %337 : vector<2x128xf32>
    %c0_161 = arith.constant 0 : index
    %c0_162 = arith.constant 0 : index
    %339 = vector.load %arg21[%c0_161, %c0_162] : memref<2x128xf32, #tpu.memory_space<vmem>>, vector<2x128xf32>
    tpu.vector_store %arg21[%c0_161, %c0_162], %338 {strides = array<i32>} : memref<2x128xf32, #tpu.memory_space<vmem>>, vector<2x128xf32>,
    return
  }
}

</mosaic_0001>

<llo_original>
// kernel: transformer_forward.1
$region0: #{transformer_forward.1}
  #allocation0 [shape = 'u32[]', space=smem, size = 0x4, offset = 0x4, fixed_abs, tag = 'smem constant byte address 0x4 - core index']
  #allocation1 [shape = 'u32[144,128]{1,0:T(1,128)}', space=vmem, size = 0x12000, scoped, tag = 'internal scratch']
  %s0 = inlined_call_operand.vmem [shape: f32[16,4], index: 0, kind: input, shape index: {}]
  %s1 = inlined_call_operand.vmem [shape: f32[4,32], index: 1, kind: input, shape index: {}]
  %s2 = inlined_call_operand.vmem [shape: f32[16,32], index: 2, kind: input, shape index: {}]
  %s3 = inlined_call_operand.vmem [shape: f32[16,16], index: 3, kind: input, shape index: {}]
  %s4 = inlined_call_operand.vmem [shape: f32[2,32,96], index: 4, kind: input, shape index: {}]
  %s5 = inlined_call_operand.vmem [shape: f32[2,1,96], index: 5, kind: input, shape index: {}]
  %s6 = inlined_call_operand.vmem [shape: f32[2,32,32], index: 6, kind: input, shape index: {}]
  %s7 = inlined_call_operand.vmem [shape: f32[2,1,32], index: 7, kind: input, shape index: {}]
  %s8 = inlined_call_operand.vmem [shape: f32[2,1,32], index: 8, kind: input, shape index: {}]
  %s9 = inlined_call_operand.vmem [shape: f32[2,1,32], index: 9, kind: input, shape index: {}]
  %s10 = inlined_call_operand.vmem [shape: f32[2,32,128], index: 10, kind: input, shape index: {}]
  %s11 = inlined_call_operand.vmem [shape: f32[2,1,128], index: 11, kind: input, shape index: {}]
  %s12 = inlined_call_operand.vmem [shape: f32[2,128,32], index: 12, kind: input, shape index: {}]
  %s13 = inlined_call_operand.vmem [shape: f32[2,1,32], index: 13, kind: input, shape index: {}]
  %s14 = inlined_call_operand.vmem [shape: f32[2,1,32], index: 14, kind: input, shape index: {}]
  %s15 = inlined_call_operand.vmem [shape: f32[2,1,32], index: 15, kind: input, shape index: {}]
  %s16 = inlined_call_operand.vmem [shape: f32[2,16], index: 16, kind: input, shape index: {}]
  %s17 = inlined_call_operand.vmem [shape: f32[32,16], index: 17, kind: input, shape index: {}]
  %s18 = inlined_call_operand.vmem [shape: f32[1,16], index: 18, kind: input, shape index: {}]
  %s19 = inlined_call_operand.vmem [shape: f32[16,128], index: 19, kind: input, shape index: {}]
  %s20 = inlined_call_operand.vmem [shape: f32[1,128], index: 20, kind: input, shape index: {}]
  %s21 = inlined_call_operand.vmem [shape: f32[2,128], index: 21, kind: output, shape index: {}]
  %s22 = sld [smem:[#allocation0]]
  $region94: #{transformer_forward.1} parent=0
    _
  %s24 = ssub.s32 1, %s22
  %s25 = scalar_select 0, %s24, %s22
  // Predicated region
  $region2: #{transformer_forward.1} parent=0 // pred_check
    _
  $region3: #{transformer_forward.1} parent=0 // pred_check_branch
    %27 = sbr.rel (0) target = $region5
  $region4: #{transformer_forward.1} parent=0 // pred_region
    _
  $region5: #{transformer_forward.1} parent=0 // pred_fallthru
    _
  // Predicated region
  $region6: #{transformer_forward.1} parent=0 // pred_check
    _
  $region7: #{transformer_forward.1} parent=0 // pred_check_branch
    %29 = sbr.rel (0) target = $region9
  $region8: #{transformer_forward.1} parent=0 // pred_region
    _
  $region9: #{transformer_forward.1} parent=0 // pred_fallthru
    _
  // Predicated region
  $region10: #{transformer_forward.1} parent=0 // pred_check
    _
  $region11: #{transformer_forward.1} parent=0 // pred_check_branch
    %31 = sbr.rel (0) target = $region13
  $region12: #{transformer_forward.1} parent=0 // pred_region
    _
  $region13: #{transformer_forward.1} parent=0 // pred_fallthru
    _
  // Predicated region
  $region14: #{transformer_forward.1} parent=0 // pred_check
    _
  $region15: #{transformer_forward.1} parent=0 // pred_check_branch
    %33 = sbr.rel (0) target = $region17
  $region16: #{transformer_forward.1} parent=0 // pred_region
    _
  $region17: #{transformer_forward.1} parent=0 // pred_fallthru
    _
  // Predicated region
  $region18: #{transformer_forward.1} parent=0 // pred_check
    _
  $region19: #{transformer_forward.1} parent=0 // pred_check_branch
    %35 = sbr.rel (0) target = $region21
  $region20: #{transformer_forward.1} parent=0 // pred_region
    _
  $region21: #{transformer_forward.1} parent=0 // pred_fallthru
    _
  // Predicated region
  $region22: #{transformer_forward.1} parent=0 // pred_check
    _
  $region23: #{transformer_forward.1} parent=0 // pred_check_branch
    %37 = sbr.rel (0) target = $region25
  $region24: #{transformer_forward.1} parent=0 // pred_region
    _
  $region25: #{transformer_forward.1} parent=0 // pred_fallthru
    _
  // Predicated region
  $region26: #{transformer_forward.1} parent=0 // pred_check
    _
  $region27: #{transformer_forward.1} parent=0 // pred_check_branch
    %39 = sbr.rel (0) target = $region29
  $region28: #{transformer_forward.1} parent=0 // pred_region
    _
  $region29: #{transformer_forward.1} parent=0 // pred_fallthru
    _
  // Predicated region
  $region30: #{transformer_forward.1} parent=0 // pred_check
    _
  $region31: #{transformer_forward.1} parent=0 // pred_check_branch
    %41 = sbr.rel (0) target = $region33
  $region32: #{transformer_forward.1} parent=0 // pred_region
    _
  $region33: #{transformer_forward.1} parent=0 // pred_fallthru
    _
  // Predicated region
  $region34: #{transformer_forward.1} parent=0 // pred_check
    _
  $region35: #{transformer_forward.1} parent=0 // pred_check_branch
    %43 = sbr.rel (0) target = $region37
  $region36: #{transformer_forward.1} parent=0 // pred_region
    _
  $region37: #{transformer_forward.1} parent=0 // pred_fallthru
    _
  // Predicated region
  $region38: #{transformer_forward.1} parent=0 // pred_check
    _
  $region39: #{transformer_forward.1} parent=0 // pred_check_branch
    %45 = sbr.rel (0) target = $region41
  $region40: #{transformer_forward.1} parent=0 // pred_region
    _
  $region41: #{transformer_forward.1} parent=0 // pred_fallthru
    _
  // Predicated region
  $region42: #{transformer_forward.1} parent=0 // pred_check
    _
  $region43: #{transformer_forward.1} parent=0 // pred_check_branch
    %47 = sbr.rel (0) target = $region45
  $region44: #{transformer_forward.1} parent=0 // pred_region
    _
  $region45: #{transformer_forward.1} parent=0 // pred_fallthru
    _
  // Predicated region
  $region46: #{transformer_forward.1} parent=0 // pred_check
    _
  $region47: #{transformer_forward.1} parent=0 // pred_check_branch
    %49 = sbr.rel (0) target = $region49
  $region48: #{transformer_forward.1} parent=0 // pred_region
    _
  $region49: #{transformer_forward.1} parent=0 // pred_fallthru
    _
  // Predicated region
  $region50: #{transformer_forward.1} parent=0 // pred_check
    _
  $region51: #{transformer_forward.1} parent=0 // pred_check_branch
    %51 = sbr.rel (0) target = $region53
  $region52: #{transformer_forward.1} parent=0 // pred_region
    _
  $region53: #{transformer_forward.1} parent=0 // pred_fallthru
    _
  // Predicated region
  $region54: #{transformer_forward.1} parent=0 // pred_check
    _
  $region55: #{transformer_forward.1} parent=0 // pred_check_branch
    %53 = sbr.rel (0) target = $region57
  $region56: #{transformer_forward.1} parent=0 // pred_region
    _
  $region57: #{transformer_forward.1} parent=0 // pred_fallthru
    _
  // Predicated region
  $region58: #{transformer_forward.1} parent=0 // pred_check
    _
  $region59: #{transformer_forward.1} parent=0 // pred_check_branch
    %55 = sbr.rel (0) target = $region61
  $region60: #{transformer_forward.1} parent=0 // pred_region
    _
  $region61: #{transformer_forward.1} parent=0 // pred_fallthru
    _
  // Predicated region
  $region62: #{transformer_forward.1} parent=0 // pred_check
    _
  $region63: #{transformer_forward.1} parent=0 // pred_check_branch
    %57 = sbr.rel (0) target = $region65
  $region64: #{transformer_forward.1} parent=0 // pred_region
    _
  $region65: #{transformer_forward.1} parent=0 // pred_fallthru
    _
  // Predicated region
  $region66: #{transformer_forward.1} parent=0 // pred_check
    _
  $region67: #{transformer_forward.1} parent=0 // pred_check_branch
    %59 = sbr.rel (0) target = $region69
  $region68: #{transformer_forward.1} parent=0 // pred_region
    _
  $region69: #{transformer_forward.1} parent=0 // pred_fallthru
    _
  // Predicated region
  $region70: #{transformer_forward.1} parent=0 // pred_check
    _
  $region71: #{transformer_forward.1} parent=0 // pred_check_branch
    %61 = sbr.rel (0) target = $region73
  $region72: #{transformer_forward.1} parent=0 // pred_region
    _
  $region73: #{transformer_forward.1} parent=0 // pred_fallthru
    _
  // Predicated region
  $region74: #{transformer_forward.1} parent=0 // pred_check
    _
  $region75: #{transformer_forward.1} parent=0 // pred_check_branch
    %63 = sbr.rel (0) target = $region77
  $region76: #{transformer_forward.1} parent=0 // pred_region
    _
  $region77: #{transformer_forward.1} parent=0 // pred_fallthru
    _
  // Predicated region
  $region78: #{transformer_forward.1} parent=0 // pred_check
    _
  $region79: #{transformer_forward.1} parent=0 // pred_check_branch
    %65 = sbr.rel (0) target = $region81
  $region80: #{transformer_forward.1} parent=0 // pred_region
    _
  $region81: #{transformer_forward.1} parent=0 // pred_fallthru
    _
  // Predicated region
  $region82: #{transformer_forward.1} parent=0 // pred_check
    _
  $region83: #{transformer_forward.1} parent=0 // pred_check_branch
    %67 = sbr.rel (0) target = $region85
  $region84: #{transformer_forward.1} parent=0 // pred_region
    _
  $region85: #{transformer_forward.1} parent=0 // pred_fallthru
    _
  %v68 = vld [vmem:[%s0] sm:$0xff]
  %v69 = vld [vmem:[%s0 + $0x8] sm:$0xff]
  %v70 = vld [vmem:[%s1] sm:$0xf]
  %v71 = vld [vmem:[%s2] sm:$0xff]
  %v72 = vld [vmem:[%s2 + $0x8] sm:$0xff]
  %vm73 = vcmask 31744
  %v75 = vsel %vm73, %v68, 0
  %v78 = vsel %vm73, %v69, 0
  %vm80 = vcmask 1043456
  %v82 = vsel %vm80, %v70, 0
  %84 = vmatprep.subr.mxu0 0.0
  %85 = vmatpush1.msra.mxu0 0.0
  %86 = vmatprep.subr.mxu0 0.0
  %87 = vmatpush1.msra.mxu0 0.0
  %88 = vmatprep.subr.mxu0 0.0
  %89 = vmatpush1.msra.mxu0 0.0
  %90 = vmatprep.subr.mxu0 0.0
  %91 = vmatpush1.msra.mxu0 0.0
  %92 = vmatprep.subr.mxu0 0.0
  %93 = vmatpush1.msra.mxu0 0.0
  %94 = vmatprep.subr.mxu0 0.0
  %95 = vmatpush1.msra.mxu0 0.0
  %96 = vmatprep.subr.mxu0 0.0
  %97 = vmatpush1.msra.mxu0 0.0
  %98 = vmatprep.subr.mxu0 0.0
  %99 = vmatpush1.msra.mxu0 0.0
  %100 = vmatprep.subr.mxu0 0.0
  %101 = vmatpush1.msra.mxu0 0.0
  %102 = vmatprep.subr.mxu0 0.0
  %103 = vmatpush1.msra.mxu0 0.0
  %104 = vmatprep.subr.mxu0 0.0
  %105 = vmatpush1.msra.mxu0 0.0
  %106 = vmatprep.subr.mxu0 0.0
  %107 = vmatpush1.msra.mxu0 0.0
  %108 = vmatprep.subr.mxu0 0.0
  %109 = vmatpush1.msra.mxu0 0.0
  %110 = vmatprep.subr.mxu0 0.0
  %111 = vmatpush1.msra.mxu0 0.0
  %112 = vmatprep.subr.mxu0 0.0
  %113 = vmatpush1.msra.mxu0 0.0
  %114 = vmatprep.subr.mxu0 0.0
  %115 = vmatpush1.msra.mxu0 %v82
  %116 = vmatprep.subr.mxu0 0.0
  %117 = vmatpush2.msra.mxu0 0.0
  %118 = vmatprep.subr.mxu0 0.0
  %119 = vmatpush2.msra.mxu0 0.0
  %120 = vmatprep.subr.mxu0 0.0
  %121 = vmatpush2.msra.mxu0 0.0
  %122 = vmatprep.subr.mxu0 0.0
  %123 = vmatpush2.msra.mxu0 0.0
  %124 = vmatprep.subr.mxu0 0.0
  %125 = vmatpush2.msra.mxu0 0.0
  %126 = vmatprep.subr.mxu0 0.0
  %127 = vmatpush2.msra.mxu0 0.0
  %128 = vmatprep.subr.mxu0 0.0
  %129 = vmatpush2.msra.mxu0 0.0
  %130 = vmatprep.subr.mxu0 0.0
  %131 = vmatpush2.msra.mxu0 0.0
  %132 = vmatprep.subr.mxu0 0.0
  %133 = vmatpush2.msra.mxu0 0.0
  %134 = vmatprep.subr.mxu0 0.0
  %135 = vmatpush2.msra.mxu0 0.0
  %136 = vmatprep.subr.mxu0 0.0
  %137 = vmatpush2.msra.mxu0 0.0
  %138 = vmatprep.subr.mxu0 0.0
  %139 = vmatpush2.msra.mxu0 0.0
  %140 = vmatprep.subr.mxu0 0.0
  %141 = vmatpush2.msra.mxu0 0.0
  %142 = vmatprep.subr.mxu0 0.0
  %143 = vmatpush2.msra.mxu0 0.0
  %144 = vmatprep.subr.mxu0 0.0
  %145 = vmatpush2.msra.mxu0 0.0
  %146 = vmatprep.subr.mxu0 0.0
  %147 = vmatpush2.msra.mxu0 0.0
  %148 = vmatprep.mubr.f32.mxu0 0.0
  %149 = vmatmul.mubr.f32.gmra.mxu0 %v75
  %v150 = vpop.f32.mrf.mxu0
  %v151 = vadd.f32 %v71, %v150
  %v152 = vpop.f32.mrf.mxu0
  %153 = vmatprep.mubr.f32.mxu0 0.0
  %154 = vmatmul.mubr.f32.gmra.mxu0 %v78
  %v155 = vpop.f32.mrf.mxu0
  %v156 = vadd.f32 %v72, %v155
  %v157 = vpop.f32.mrf.mxu0
  %158 = vdwg.mxu0
  %v159 = vld [vmem:[%s3] sm:$0xff]
  %v160 = vld [vmem:[%s3 + $0x8] sm:$0xff]
  %v161 = vld [vmem:[%s4] sm:$0xff]
  %v162 = vld [vmem:[%s4 + $0x8] sm:$0xff]
  %v163 = vld [vmem:[%s4 + $0x10] sm:$0xff]
  %v164 = vld [vmem:[%s4 + $0x18] sm:$0xff]
  %v165 = vld [vmem:[%s5] sm:$0x1]
  %v166 = vld [vmem:[%s6] sm:$0xff]
  %v167 = vld [vmem:[%s6 + $0x8] sm:$0xff]
  %v168 = vld [vmem:[%s6 + $0x10] sm:$0xff]
  %v169 = vld [vmem:[%s6 + $0x18] sm:$0xff]
  %v170 = vld [vmem:[%s7] sm:$0x1]
  %v172 = vlaneseq
  %v173 = vshrl.u32 %v172, 7
  %v174 = vsub.s32 0, %v173
  %v175 = vrot.slane %v165, %v174
  %vm177 = vcmask 261120
  %v179 = vsel %vm177, %v151, 0
  %v182 = vsel %vm177, %v156, 0
  %184 = vmatprep.subr.mxu0 0.0
  %185 = vmatpush1.msra.mxu0 0.0
  %186 = vmatprep.subr.mxu0 0.0
  %187 = vmatpush1.msra.mxu0 0.0
  %188 = vmatprep.subr.mxu0 0.0
  %189 = vmatpush1.msra.mxu0 0.0
  %190 = vmatprep.subr.mxu0 0.0
  %191 = vmatpush1.msra.mxu0 0.0
  %192 = vmatprep.subr.mxu0 0.0
  %193 = vmatpush1.msra.mxu0 0.0
  %194 = vmatprep.subr.mxu0 0.0
  %195 = vmatpush1.msra.mxu0 0.0
  %196 = vmatprep.subr.mxu0 0.0
  %197 = vmatpush1.msra.mxu0 0.0
  %198 = vmatprep.subr.mxu0 0.0
  %199 = vmatpush1.msra.mxu0 0.0
  %200 = vmatprep.subr.mxu0 0.0
  %201 = vmatpush1.msra.mxu0 0.0
  %202 = vmatprep.subr.mxu0 0.0
  %203 = vmatpush1.msra.mxu0 0.0
  %204 = vmatprep.subr.mxu0 0.0
  %205 = vmatpush1.msra.mxu0 0.0
  %206 = vmatprep.subr.mxu0 0.0
  %207 = vmatpush1.msra.mxu0 0.0
  %208 = vmatprep.subr.mxu0 0.0
  %209 = vmatpush1.msra.mxu0 %v164
  %210 = vmatprep.subr.mxu0 0.0
  %211 = vmatpush1.msra.mxu0 %v163
  %212 = vmatprep.subr.mxu0 0.0
  %213 = vmatpush1.msra.mxu0 %v162
  %214 = vmatprep.subr.mxu0 0.0
  %215 = vmatpush1.msra.mxu0 %v161
  %216 = vmatprep.subr.mxu0 0.0
  %217 = vmatpush2.msra.mxu0 0.0
  %218 = vmatprep.subr.mxu0 0.0
  %219 = vmatpush2.msra.mxu0 0.0
  %220 = vmatprep.subr.mxu0 0.0
  %221 = vmatpush2.msra.mxu0 0.0
  %222 = vmatprep.subr.mxu0 0.0
  %223 = vmatpush2.msra.mxu0 0.0
  %224 = vmatprep.subr.mxu0 0.0
  %225 = vmatpush2.msra.mxu0 0.0
  %226 = vmatprep.subr.mxu0 0.0
  %227 = vmatpush2.msra.mxu0 0.0
  %228 = vmatprep.subr.mxu0 0.0
  %229 = vmatpush2.msra.mxu0 0.0
  %230 = vmatprep.subr.mxu0 0.0
  %231 = vmatpush2.msra.mxu0 0.0
  %232 = vmatprep.subr.mxu0 0.0
  %233 = vmatpush2.msra.mxu0 0.0
  %234 = vmatprep.subr.mxu0 0.0
  %235 = vmatpush2.msra.mxu0 0.0
  %236 = vmatprep.subr.mxu0 0.0
  %237 = vmatpush2.msra.mxu0 0.0
  %238 = vmatprep.subr.mxu0 0.0
  %239 = vmatpush2.msra.mxu0 0.0
  %240 = vmatprep.subr.mxu0 0.0
  %241 = vmatpush2.msra.mxu0 0.0
  %242 = vmatprep.subr.mxu0 0.0
  %243 = vmatpush2.msra.mxu0 0.0
  %244 = vmatprep.subr.mxu0 0.0
  %245 = vmatpush2.msra.mxu0 0.0
  %246 = vmatprep.subr.mxu0 0.0
  %247 = vmatpush2.msra.mxu0 0.0
  %248 = vmatprep.mubr.f32.mxu0 0.0
  %249 = vmatmul.mubr.f32.gmra.mxu0 %v179
  %v250 = vpop.f32.mrf.mxu0
  %v251 = vadd.f32 %v175, %v250
  %v252 = vpop.f32.mrf.mxu0
  %253 = vmatprep.mubr.f32.mxu0 0.0
  %254 = vmatmul.mubr.f32.gmra.mxu0 %v182
  %v255 = vpop.f32.mrf.mxu0
  %v256 = vadd.f32 %v175, %v255
  %v257 = vpop.f32.mrf.mxu0
  %258 = vdwg.mxu0
  %261 = vrot.lane.b32.xlu0 %v251, 96
  %v262 = vpop.permute.xlu0 %261
  %263 = vrot.lane.b32.xlu0 %v256, 96
  %v264 = vpop.permute.xlu0 %263
  %vm265 = vcmask 64512
  %v266 = vsel %vm265, %v251, 0
  %v268 = vsel %vm265, %v256, 0
  %v270 = vsel %vm265, %v262, 0
  %v272 = vsel %vm265, %v264, 0
  %274 = vmatprep.subr.mxu0 0.0
  %275 = vmatpush1.xpose.msra.mxu0 0.0
  %276 = vmatprep.subr.mxu0 0.0
  %277 = vmatpush1.xpose.msra.mxu0 0.0
  %278 = vmatprep.subr.mxu0 0.0
  %279 = vmatpush1.xpose.msra.mxu0 0.0
  %280 = vmatprep.subr.mxu0 0.0
  %281 = vmatpush1.xpose.msra.mxu0 0.0
  %282 = vmatprep.subr.mxu0 0.0
  %283 = vmatpush1.xpose.msra.mxu0 0.0
  %284 = vmatprep.subr.mxu0 0.0
  %285 = vmatpush1.xpose.msra.mxu0 0.0
  %286 = vmatprep.subr.mxu0 0.0
  %287 = vmatpush1.xpose.msra.mxu0 0.0
  %288 = vmatprep.subr.mxu0 0.0
  %289 = vmatpush1.xpose.msra.mxu0 0.0
  %290 = vmatprep.subr.mxu0 0.0
  %291 = vmatpush1.xpose.msra.mxu0 0.0
  %292 = vmatprep.subr.mxu0 0.0
  %293 = vmatpush1.xpose.msra.mxu0 0.0
  %294 = vmatprep.subr.mxu0 0.0
  %295 = vmatpush1.xpose.msra.mxu0 0.0
  %296 = vmatprep.subr.mxu0 0.0
  %297 = vmatpush1.xpose.msra.mxu0 0.0
  %298 = vmatprep.subr.mxu0 0.0
  %299 = vmatpush1.xpose.msra.mxu0 0.0
  %300 = vmatprep.subr.mxu0 0.0
  %301 = vmatpush1.xpose.msra.mxu0 0.0
  %302 = vmatprep.subr.mxu0 0.0
  %303 = vmatpush1.xpose.msra.mxu0 %v272
  %304 = vmatprep.subr.mxu0 0.0
  %305 = vmatpush1.xpose.msra.mxu0 %v270
  %306 = vmatprep.subr.mxu0 0.0
  %307 = vmatpush2.xpose.msra.mxu0 0.0
  %308 = vmatprep.subr.mxu0 0.0
  %309 = vmatpush2.xpose.msra.mxu0 0.0
  %310 = vmatprep.subr.mxu0 0.0
  %311 = vmatpush2.xpose.msra.mxu0 0.0
  %312 = vmatprep.subr.mxu0 0.0
  %313 = vmatpush2.xpose.msra.mxu0 0.0
  %314 = vmatprep.subr.mxu0 0.0
  %315 = vmatpush2.xpose.msra.mxu0 0.0
  %316 = vmatprep.subr.mxu0 0.0
  %317 = vmatpush2.xpose.msra.mxu0 0.0
  %318 = vmatprep.subr.mxu0 0.0
  %319 = vmatpush2.xpose.msra.mxu0 0.0
  %320 = vmatprep.subr.mxu0 0.0
  %321 = vmatpush2.xpose.msra.mxu0 0.0
  %322 = vmatprep.subr.mxu0 0.0
  %323 = vmatpush2.xpose.msra.mxu0 0.0
  %324 = vmatprep.subr.mxu0 0.0
  %325 = vmatpush2.xpose.msra.mxu0 0.0
  %326 = vmatprep.subr.mxu0 0.0
  %327 = vmatpush2.xpose.msra.mxu0 0.0
  %328 = vmatprep.subr.mxu0 0.0
  %329 = vmatpush2.xpose.msra.mxu0 0.0
  %330 = vmatprep.subr.mxu0 0.0
  %331 = vmatpush2.xpose.msra.mxu0 0.0
  %332 = vmatprep.subr.mxu0 0.0
  %333 = vmatpush2.xpose.msra.mxu0 0.0
  %334 = vmatprep.subr.mxu0 0.0
  %335 = vmatpush2.xpose.msra.mxu0 0.0
  %336 = vmatprep.subr.mxu0 0.0
  %337 = vmatpush2.xpose.msra.mxu0 0.0
  %338 = vmatprep.mubr.f32.mxu0 0.0
  %339 = vmatmul.mubr.f32.gmra.mxu0 %v266
  %v340 = vpop.f32.mrf.mxu0
  %v341 = vadd.f32 %v159, %v340
  %v342 = vpop.f32.mrf.mxu0
  %343 = vmatprep.mubr.f32.mxu0 0.0
  %344 = vmatmul.mubr.f32.gmra.mxu0 %v268
  %v345 = vpop.f32.mrf.mxu0
  %v346 = vadd.f32 %v160, %v345
  %v347 = vpop.f32.mrf.mxu0
  %348 = vdwg.mxu0
  %vm349 = vcmask 130048
  %v350 = vsel %vm349, %v341, -inf
  %351 = vmax.xlane.f32.xlu0 %v350
  %v352 = vpop.xlane.xlu0 %351
  %v353 = vsel %vm349, %v346, -inf
  %354 = vmax.xlane.f32.xlu0 %v353
  %v355 = vpop.xlane.xlu0 %354
  %v356 = vsub.f32 %v341, %v352
  %v357 = vsub.f32 %v346, %v355
  %v358 = vmul.f32 %v356, 1.442695
  %v359 = vpow.pop %v358
  %v360 = vmul.f32 %v357, 1.442695
  %v361 = vpow.pop %v360
  %v362 = vsel %vm349, %v359, 0.0
  %363 = vadd.xlane.f32.xlu0 %v362
  %v364 = vpop.xlane.xlu0 %363
  %v365 = vsel %vm349, %v361, 0.0
  %366 = vadd.xlane.f32.xlu0 %v365
  %v367 = vpop.xlane.xlu0 %366
  %v368 = vrcp.pop %v364
  %v369 = vrcp.pop %v367
  %v370 = vmul.f32 %v359, %v368
  %v371 = vmul.f32 %v361, %v369
  %372 = vrot.lane.b32.xlu0 %v251, 64
  %v373 = vpop.permute.xlu0 %372
  %374 = vrot.lane.b32.xlu0 %v256, 64
  %v375 = vpop.permute.xlu0 %374
  %v379 = vsel %vm349, %v370, 0
  %v382 = vsel %vm349, %v371, 0
  %384 = vmatprep.subr.mxu0 0.0
  %385 = vmatpush1.msra.mxu0 0.0
  %386 = vmatprep.subr.mxu0 0.0
  %387 = vmatpush1.msra.mxu0 0.0
  %388 = vmatprep.subr.mxu0 0.0
  %389 = vmatpush1.msra.mxu0 0.0
  %390 = vmatprep.subr.mxu0 0.0
  %391 = vmatpush1.msra.mxu0 0.0
  %392 = vmatprep.subr.mxu0 0.0
  %393 = vmatpush1.msra.mxu0 0.0
  %394 = vmatprep.subr.mxu0 0.0
  %395 = vmatpush1.msra.mxu0 0.0
  %396 = vmatprep.subr.mxu0 0.0
  %397 = vmatpush1.msra.mxu0 0.0
  %398 = vmatprep.subr.mxu0 0.0
  %399 = vmatpush1.msra.mxu0 0.0
  %400 = vmatprep.subr.mxu0 0.0
  %401 = vmatpush1.msra.mxu0 0.0
  %402 = vmatprep.subr.mxu0 0.0
  %403 = vmatpush1.msra.mxu0 0.0
  %404 = vmatprep.subr.mxu0 0.0
  %405 = vmatpush1.msra.mxu0 0.0
  %406 = vmatprep.subr.mxu0 0.0
  %407 = vmatpush1.msra.mxu0 0.0
  %408 = vmatprep.subr.mxu0 0.0
  %409 = vmatpush1.msra.mxu0 0.0
  %410 = vmatprep.subr.mxu0 0.0
  %411 = vmatpush1.msra.mxu0 0.0
  %412 = vmatprep.subr.mxu0 0.0
  %413 = vmatpush1.msra.mxu0 %v375
  %414 = vmatprep.subr.mxu0 0.0
  %415 = vmatpush1.msra.mxu0 %v373
  %416 = vmatprep.subr.mxu0 0.0
  %417 = vmatpush2.msra.mxu0 0.0
  %418 = vmatprep.subr.mxu0 0.0
  %419 = vmatpush2.msra.mxu0 0.0
  %420 = vmatprep.subr.mxu0 0.0
  %421 = vmatpush2.msra.mxu0 0.0
  %422 = vmatprep.subr.mxu0 0.0
  %423 = vmatpush2.msra.mxu0 0.0
  %424 = vmatprep.subr.mxu0 0.0
  %425 = vmatpush2.msra.mxu0 0.0
  %426 = vmatprep.subr.mxu0 0.0
  %427 = vmatpush2.msra.mxu0 0.0
  %428 = vmatprep.subr.mxu0 0.0
  %429 = vmatpush2.msra.mxu0 0.0
  %430 = vmatprep.subr.mxu0 0.0
  %431 = vmatpush2.msra.mxu0 0.0
  %432 = vmatprep.subr.mxu0 0.0
  %433 = vmatpush2.msra.mxu0 0.0
  %434 = vmatprep.subr.mxu0 0.0
  %435 = vmatpush2.msra.mxu0 0.0
  %436 = vmatprep.subr.mxu0 0.0
  %437 = vmatpush2.msra.mxu0 0.0
  %438 = vmatprep.subr.mxu0 0.0
  %439 = vmatpush2.msra.mxu0 0.0
  %440 = vmatprep.subr.mxu0 0.0
  %441 = vmatpush2.msra.mxu0 0.0
  %442 = vmatprep.subr.mxu0 0.0
  %443 = vmatpush2.msra.mxu0 0.0
  %444 = vmatprep.subr.mxu0 0.0
  %445 = vmatpush2.msra.mxu0 0.0
  %446 = vmatprep.subr.mxu0 0.0
  %447 = vmatpush2.msra.mxu0 0.0
  %448 = vmatprep.mubr.f32.mxu0 0.0
  %449 = vmatmul.mubr.f32.gmra.mxu0 %v379
  %v450 = vpop.f32.mrf.mxu0
  %v451 = vadd.f32 0.0, %v450
  %v452 = vpop.f32.mrf.mxu0
  %453 = vmatprep.mubr.f32.mxu0 0.0
  %454 = vmatmul.mubr.f32.gmra.mxu0 %v382
  %v455 = vpop.f32.mrf.mxu0
  %v456 = vadd.f32 0.0, %v455
  %v457 = vpop.f32.mrf.mxu0
  %458 = vdwg.mxu0
  %v460 = vsel %vm265, %v451, 0
  %v463 = vsel %vm265, %v456, 0
  %465 = vmatprep.subr.mxu0 0.0
  %466 = vmatpush1.msra.mxu0 0.0
  %467 = vmatprep.subr.mxu0 0.0
  %468 = vmatpush1.msra.mxu0 0.0
  %469 = vmatprep.subr.mxu0 0.0
  %470 = vmatpush1.msra.mxu0 0.0
  %471 = vmatprep.subr.mxu0 0.0
  %472 = vmatpush1.msra.mxu0 0.0
  %473 = vmatprep.subr.mxu0 0.0
  %474 = vmatpush1.msra.mxu0 0.0
  %475 = vmatprep.subr.mxu0 0.0
  %476 = vmatpush1.msra.mxu0 0.0
  %477 = vmatprep.subr.mxu0 0.0
  %478 = vmatpush1.msra.mxu0 0.0
  %479 = vmatprep.subr.mxu0 0.0
  %480 = vmatpush1.msra.mxu0 0.0
  %481 = vmatprep.subr.mxu0 0.0
  %482 = vmatpush1.msra.mxu0 0.0
  %483 = vmatprep.subr.mxu0 0.0
  %484 = vmatpush1.msra.mxu0 0.0
  %485 = vmatprep.subr.mxu0 0.0
  %486 = vmatpush1.msra.mxu0 0.0
  %487 = vmatprep.subr.mxu0 0.0
  %488 = vmatpush1.msra.mxu0 0.0
  %489 = vmatprep.subr.mxu0 0.0
  %490 = vmatpush1.msra.mxu0 0.0
  %491 = vmatprep.subr.mxu0 0.0
  %492 = vmatpush1.msra.mxu0 0.0
  %493 = vmatprep.subr.mxu0 0.0
  %494 = vmatpush1.msra.mxu0 0.0
  %495 = vmatprep.subr.mxu0 0.0
  %496 = vmatpush1.msra.mxu0 %v166
  %497 = vmatprep.subr.mxu0 0.0
  %498 = vmatpush2.msra.mxu0 0.0
  %499 = vmatprep.subr.mxu0 0.0
  %500 = vmatpush2.msra.mxu0 0.0
  %501 = vmatprep.subr.mxu0 0.0
  %502 = vmatpush2.msra.mxu0 0.0
  %503 = vmatprep.subr.mxu0 0.0
  %504 = vmatpush2.msra.mxu0 0.0
  %505 = vmatprep.subr.mxu0 0.0
  %506 = vmatpush2.msra.mxu0 0.0
  %507 = vmatprep.subr.mxu0 0.0
  %508 = vmatpush2.msra.mxu0 0.0
  %509 = vmatprep.subr.mxu0 0.0
  %510 = vmatpush2.msra.mxu0 0.0
  %511 = vmatprep.subr.mxu0 0.0
  %512 = vmatpush2.msra.mxu0 0.0
  %513 = vmatprep.subr.mxu0 0.0
  %514 = vmatpush2.msra.mxu0 0.0
  %515 = vmatprep.subr.mxu0 0.0
  %516 = vmatpush2.msra.mxu0 0.0
  %517 = vmatprep.subr.mxu0 0.0
  %518 = vmatpush2.msra.mxu0 0.0
  %519 = vmatprep.subr.mxu0 0.0
  %520 = vmatpush2.msra.mxu0 0.0
  %521 = vmatprep.subr.mxu0 0.0
  %522 = vmatpush2.msra.mxu0 0.0
  %523 = vmatprep.subr.mxu0 0.0
  %524 = vmatpush2.msra.mxu0 0.0
  %525 = vmatprep.subr.mxu0 0.0
  %526 = vmatpush2.msra.mxu0 0.0
  %527 = vmatprep.subr.mxu0 0.0
  %528 = vmatpush2.msra.mxu0 0.0
  %529 = vmatprep.mubr.f32.mxu0 0.0
  %530 = vmatmul.mubr.f32.gmra.mxu0 %v460
  %v531 = vpop.f32.mrf.mxu0
  %v532 = vadd.f32 0.0, %v531
  %v533 = vpop.f32.mrf.mxu0
  %534 = vmatprep.mubr.f32.mxu0 0.0
  %535 = vmatmul.mubr.f32.gmra.mxu0 %v463
  %v536 = vpop.f32.mrf.mxu0
  %v537 = vadd.f32 0.0, %v536
  %v538 = vpop.f32.mrf.mxu0
  %539 = vdwg.mxu0
  %v541 = vlaneseq
  %v542 = vshrl.u32 %v541, 7
  %v543 = vsub.s32 0, %v542
  %v544 = vrot.slane %v170, %v543
  %v546 = vadd.f32 %v544, %v532
  %v547 = vadd.f32 %v544, %v537
  %548 = vrot.lane.b32.xlu0 %v251, 120
  %v549 = vpop.permute.xlu0 %548
  %550 = vrot.lane.b32.xlu0 %v256, 120
  %v551 = vpop.permute.xlu0 %550
  %552 = vrot.lane.b32.xlu0 %v251, 88
  %v553 = vpop.permute.xlu0 %552
  %554 = vrot.lane.b32.xlu0 %v256, 88
  %v555 = vpop.permute.xlu0 %554
  %v556 = vsel %vm265, %v549, 0
  %v558 = vsel %vm265, %v551, 0
  %v560 = vsel %vm265, %v553, 0
  %v562 = vsel %vm265, %v555, 0
  %564 = vmatprep.subr.mxu0 0.0
  %565 = vmatpush1.xpose.msra.mxu0 0.0
  %566 = vmatprep.subr.mxu0 0.0
  %567 = vmatpush1.xpose.msra.mxu0 0.0
  %568 = vmatprep.subr.mxu0 0.0
  %569 = vmatpush1.xpose.msra.mxu0 0.0
  %570 = vmatprep.subr.mxu0 0.0
  %571 = vmatpush1.xpose.msra.mxu0 0.0
  %572 = vmatprep.subr.mxu0 0.0
  %573 = vmatpush1.xpose.msra.mxu0 0.0
  %574 = vmatprep.subr.mxu0 0.0
  %575 = vmatpush1.xpose.msra.mxu0 0.0
  %576 = vmatprep.subr.mxu0 0.0
  %577 = vmatpush1.xpose.msra.mxu0 0.0
  %578 = vmatprep.subr.mxu0 0.0
  %579 = vmatpush1.xpose.msra.mxu0 0.0
  %580 = vmatprep.subr.mxu0 0.0
  %581 = vmatpush1.xpose.msra.mxu0 0.0
  %582 = vmatprep.subr.mxu0 0.0
  %583 = vmatpush1.xpose.msra.mxu0 0.0
  %584 = vmatprep.subr.mxu0 0.0
  %585 = vmatpush1.xpose.msra.mxu0 0.0
  %586 = vmatprep.subr.mxu0 0.0
  %587 = vmatpush1.xpose.msra.mxu0 0.0
  %588 = vmatprep.subr.mxu0 0.0
  %589 = vmatpush1.xpose.msra.mxu0 0.0
  %590 = vmatprep.subr.mxu0 0.0
  %591 = vmatpush1.xpose.msra.mxu0 0.0
  %592 = vmatprep.subr.mxu0 0.0
  %593 = vmatpush1.xpose.msra.mxu0 %v562
  %594 = vmatprep.subr.mxu0 0.0
  %595 = vmatpush1.xpose.msra.mxu0 %v560
  %596 = vmatprep.subr.mxu0 0.0
  %597 = vmatpush2.xpose.msra.mxu0 0.0
  %598 = vmatprep.subr.mxu0 0.0
  %599 = vmatpush2.xpose.msra.mxu0 0.0
  %600 = vmatprep.subr.mxu0 0.0
  %601 = vmatpush2.xpose.msra.mxu0 0.0
  %602 = vmatprep.subr.mxu0 0.0
  %603 = vmatpush2.xpose.msra.mxu0 0.0
  %604 = vmatprep.subr.mxu0 0.0
  %605 = vmatpush2.xpose.msra.mxu0 0.0
  %606 = vmatprep.subr.mxu0 0.0
  %607 = vmatpush2.xpose.msra.mxu0 0.0
  %608 = vmatprep.subr.mxu0 0.0
  %609 = vmatpush2.xpose.msra.mxu0 0.0
  %610 = vmatprep.subr.mxu0 0.0
  %611 = vmatpush2.xpose.msra.mxu0 0.0
  %612 = vmatprep.subr.mxu0 0.0
  %613 = vmatpush2.xpose.msra.mxu0 0.0
  %614 = vmatprep.subr.mxu0 0.0
  %615 = vmatpush2.xpose.msra.mxu0 0.0
  %616 = vmatprep.subr.mxu0 0.0
  %617 = vmatpush2.xpose.msra.mxu0 0.0
  %618 = vmatprep.subr.mxu0 0.0
  %619 = vmatpush2.xpose.msra.mxu0 0.0
  %620 = vmatprep.subr.mxu0 0.0
  %621 = vmatpush2.xpose.msra.mxu0 0.0
  %622 = vmatprep.subr.mxu0 0.0
  %623 = vmatpush2.xpose.msra.mxu0 0.0
  %624 = vmatprep.subr.mxu0 0.0
  %625 = vmatpush2.xpose.msra.mxu0 0.0
  %626 = vmatprep.subr.mxu0 0.0
  %627 = vmatpush2.xpose.msra.mxu0 0.0
  %628 = vmatprep.mubr.f32.mxu0 0.0
  %629 = vmatmul.mubr.f32.gmra.mxu0 %v556
  %v630 = vpop.f32.mrf.mxu0
  %v631 = vadd.f32 %v159, %v630
  %v632 = vpop.f32.mrf.mxu0
  %633 = vmatprep.mubr.f32.mxu0 0.0
  %634 = vmatmul.mubr.f32.gmra.mxu0 %v558
  %v635 = vpop.f32.mrf.mxu0
  %v636 = vadd.f32 %v160, %v635
  %v637 = vpop.f32.mrf.mxu0
  %638 = vdwg.mxu0
  %v639 = vsel %vm349, %v631, -inf
  %640 = vmax.xlane.f32.xlu0 %v639
  %v641 = vpop.xlane.xlu0 %640
  %v642 = vsel %vm349, %v636, -inf
  %643 = vmax.xlane.f32.xlu0 %v642
  %v644 = vpop.xlane.xlu0 %643
  %v645 = vsub.f32 %v631, %v641
  %v646 = vsub.f32 %v636, %v644
  %v647 = vmul.f32 %v645, 1.442695
  %v648 = vpow.pop %v647
  %v649 = vmul.f32 %v646, 1.442695
  %v650 = vpow.pop %v649
  %v651 = vsel %vm349, %v648, 0.0
  %652 = vadd.xlane.f32.xlu0 %v651
  %v653 = vpop.xlane.xlu0 %652
  %v654 = vsel %vm349, %v650, 0.0
  %655 = vadd.xlane.f32.xlu0 %v654
  %v656 = vpop.xlane.xlu0 %655
  %v657 = vrcp.pop %v653
  %v658 = vrcp.pop %v656
  %v659 = vmul.f32 %v648, %v657
  %v660 = vmul.f32 %v650, %v658
  %661 = vrot.lane.b32.xlu0 %v251, 56
  %v662 = vpop.permute.xlu0 %661
  %663 = vrot.lane.b32.xlu0 %v256, 56
  %v664 = vpop.permute.xlu0 %663
  %v668 = vsel %vm349, %v659, 0
  %v671 = vsel %vm349, %v660, 0
  %673 = vmatprep.subr.mxu0 0.0
  %674 = vmatpush1.msra.mxu0 0.0
  %675 = vmatprep.subr.mxu0 0.0
  %676 = vmatpush1.msra.mxu0 0.0
  %677 = vmatprep.subr.mxu0 0.0
  %678 = vmatpush1.msra.mxu0 0.0
  %679 = vmatprep.subr.mxu0 0.0
  %680 = vmatpush1.msra.mxu0 0.0
  %681 = vmatprep.subr.mxu0 0.0
  %682 = vmatpush1.msra.mxu0 0.0
  %683 = vmatprep.subr.mxu0 0.0
  %684 = vmatpush1.msra.mxu0 0.0
  %685 = vmatprep.subr.mxu0 0.0
  %686 = vmatpush1.msra.mxu0 0.0
  %687 = vmatprep.subr.mxu0 0.0
  %688 = vmatpush1.msra.mxu0 0.0
  %689 = vmatprep.subr.mxu0 0.0
  %690 = vmatpush1.msra.mxu0 0.0
  %691 = vmatprep.subr.mxu0 0.0
  %692 = vmatpush1.msra.mxu0 0.0
  %693 = vmatprep.subr.mxu0 0.0
  %694 = vmatpush1.msra.mxu0 0.0
  %695 = vmatprep.subr.mxu0 0.0
  %696 = vmatpush1.msra.mxu0 0.0
  %697 = vmatprep.subr.mxu0 0.0
  %698 = vmatpush1.msra.mxu0 0.0
  %699 = vmatprep.subr.mxu0 0.0
  %700 = vmatpush1.msra.mxu0 0.0
  %701 = vmatprep.subr.mxu0 0.0
  %702 = vmatpush1.msra.mxu0 %v664
  %703 = vmatprep.subr.mxu0 0.0
  %704 = vmatpush1.msra.mxu0 %v662
  %705 = vmatprep.subr.mxu0 0.0
  %706 = vmatpush2.msra.mxu0 0.0
  %707 = vmatprep.subr.mxu0 0.0
  %708 = vmatpush2.msra.mxu0 0.0
  %709 = vmatprep.subr.mxu0 0.0
  %710 = vmatpush2.msra.mxu0 0.0
  %711 = vmatprep.subr.mxu0 0.0
  %712 = vmatpush2.msra.mxu0 0.0
  %713 = vmatprep.subr.mxu0 0.0
  %714 = vmatpush2.msra.mxu0 0.0
  %715 = vmatprep.subr.mxu0 0.0
  %716 = vmatpush2.msra.mxu0 0.0
  %717 = vmatprep.subr.mxu0 0.0
  %718 = vmatpush2.msra.mxu0 0.0
  %719 = vmatprep.subr.mxu0 0.0
  %720 = vmatpush2.msra.mxu0 0.0
  %721 = vmatprep.subr.mxu0 0.0
  %722 = vmatpush2.msra.mxu0 0.0
  %723 = vmatprep.subr.mxu0 0.0
  %724 = vmatpush2.msra.mxu0 0.0
  %725 = vmatprep.subr.mxu0 0.0
  %726 = vmatpush2.msra.mxu0 0.0
  %727 = vmatprep.subr.mxu0 0.0
  %728 = vmatpush2.msra.mxu0 0.0
  %729 = vmatprep.subr.mxu0 0.0
  %730 = vmatpush2.msra.mxu0 0.0
  %731 = vmatprep.subr.mxu0 0.0
  %732 = vmatpush2.msra.mxu0 0.0
  %733 = vmatprep.subr.mxu0 0.0
  %734 = vmatpush2.msra.mxu0 0.0
  %735 = vmatprep.subr.mxu0 0.0
  %736 = vmatpush2.msra.mxu0 0.0
  %737 = vmatprep.mubr.f32.mxu0 0.0
  %738 = vmatmul.mubr.f32.gmra.mxu0 %v668
  %v739 = vpop.f32.mrf.mxu0
  %v740 = vadd.f32 0.0, %v739
  %v741 = vpop.f32.mrf.mxu0
  %742 = vmatprep.mubr.f32.mxu0 0.0
  %743 = vmatmul.mubr.f32.gmra.mxu0 %v671
  %v744 = vpop.f32.mrf.mxu0
  %v745 = vadd.f32 0.0, %v744
  %v746 = vpop.f32.mrf.mxu0
  %747 = vdwg.mxu0
  %v749 = vsel %vm265, %v740, 0
  %v752 = vsel %vm265, %v745, 0
  %754 = vmatprep.subr.mxu0 0.0
  %755 = vmatpush1.msra.mxu0 0.0
  %756 = vmatprep.subr.mxu0 0.0
  %757 = vmatpush1.msra.mxu0 0.0
  %758 = vmatprep.subr.mxu0 0.0
  %759 = vmatpush1.msra.mxu0 0.0
  %760 = vmatprep.subr.mxu0 0.0
  %761 = vmatpush1.msra.mxu0 0.0
  %762 = vmatprep.subr.mxu0 0.0
  %763 = vmatpush1.msra.mxu0 0.0
  %764 = vmatprep.subr.mxu0 0.0
  %765 = vmatpush1.msra.mxu0 0.0
  %766 = vmatprep.subr.mxu0 0.0
  %767 = vmatpush1.msra.mxu0 0.0
  %768 = vmatprep.subr.mxu0 0.0
  %769 = vmatpush1.msra.mxu0 0.0
  %770 = vmatprep.subr.mxu0 0.0
  %771 = vmatpush1.msra.mxu0 0.0
  %772 = vmatprep.subr.mxu0 0.0
  %773 = vmatpush1.msra.mxu0 0.0
  %774 = vmatprep.subr.mxu0 0.0
  %775 = vmatpush1.msra.mxu0 0.0
  %776 = vmatprep.subr.mxu0 0.0
  %777 = vmatpush1.msra.mxu0 0.0
  %778 = vmatprep.subr.mxu0 0.0
  %779 = vmatpush1.msra.mxu0 0.0
  %780 = vmatprep.subr.mxu0 0.0
  %781 = vmatpush1.msra.mxu0 0.0
  %782 = vmatprep.subr.mxu0 0.0
  %783 = vmatpush1.msra.mxu0 0.0
  %784 = vmatprep.subr.mxu0 0.0
  %785 = vmatpush1.msra.mxu0 %v167
  %786 = vmatprep.subr.mxu0 0.0
  %787 = vmatpush2.msra.mxu0 0.0
  %788 = vmatprep.subr.mxu0 0.0
  %789 = vmatpush2.msra.mxu0 0.0
  %790 = vmatprep.subr.mxu0 0.0
  %791 = vmatpush2.msra.mxu0 0.0
  %792 = vmatprep.subr.mxu0 0.0
  %793 = vmatpush2.msra.mxu0 0.0
  %794 = vmatprep.subr.mxu0 0.0
  %795 = vmatpush2.msra.mxu0 0.0
  %796 = vmatprep.subr.mxu0 0.0
  %797 = vmatpush2.msra.mxu0 0.0
  %798 = vmatprep.subr.mxu0 0.0
  %799 = vmatpush2.msra.mxu0 0.0
  %800 = vmatprep.subr.mxu0 0.0
  %801 = vmatpush2.msra.mxu0 0.0
  %802 = vmatprep.subr.mxu0 0.0
  %803 = vmatpush2.msra.mxu0 0.0
  %804 = vmatprep.subr.mxu0 0.0
  %805 = vmatpush2.msra.mxu0 0.0
  %806 = vmatprep.subr.mxu0 0.0
  %807 = vmatpush2.msra.mxu0 0.0
  %808 = vmatprep.subr.mxu0 0.0
  %809 = vmatpush2.msra.mxu0 0.0
  %810 = vmatprep.subr.mxu0 0.0
  %811 = vmatpush2.msra.mxu0 0.0
  %812 = vmatprep.subr.mxu0 0.0
  %813 = vmatpush2.msra.mxu0 0.0
  %814 = vmatprep.subr.mxu0 0.0
  %815 = vmatpush2.msra.mxu0 0.0
  %816 = vmatprep.subr.mxu0 0.0
  %817 = vmatpush2.msra.mxu0 0.0
  %818 = vmatprep.mubr.f32.mxu0 0.0
  %819 = vmatmul.mubr.f32.gmra.mxu0 %v749
  %v820 = vpop.f32.mrf.mxu0
  %v821 = vadd.f32 0.0, %v820
  %v822 = vpop.f32.mrf.mxu0
  %823 = vmatprep.mubr.f32.mxu0 0.0
  %824 = vmatmul.mubr.f32.gmra.mxu0 %v752
  %v825 = vpop.f32.mrf.mxu0
  %v826 = vadd.f32 0.0, %v825
  %v827 = vpop.f32.mrf.mxu0
  %828 = vdwg.mxu0
  %v829 = vadd.f32 %v546, %v821
  %v830 = vadd.f32 %v547, %v826
  %831 = vrot.lane.b32.xlu0 %v251, 112
  %v832 = vpop.permute.xlu0 %831
  %833 = vrot.lane.b32.xlu0 %v256, 112
  %v834 = vpop.permute.xlu0 %833
  %835 = vrot.lane.b32.xlu0 %v251, 80
  %v836 = vpop.permute.xlu0 %835
  %837 = vrot.lane.b32.xlu0 %v256, 80
  %v838 = vpop.permute.xlu0 %837
  %v839 = vsel %vm265, %v832, 0
  %v841 = vsel %vm265, %v834, 0
  %v843 = vsel %vm265, %v836, 0
  %v845 = vsel %vm265, %v838, 0
  %847 = vmatprep.subr.mxu0 0.0
  %848 = vmatpush1.xpose.msra.mxu0 0.0
  %849 = vmatprep.subr.mxu0 0.0
  %850 = vmatpush1.xpose.msra.mxu0 0.0
  %851 = vmatprep.subr.mxu0 0.0
  %852 = vmatpush1.xpose.msra.mxu0 0.0
  %853 = vmatprep.subr.mxu0 0.0
  %854 = vmatpush1.xpose.msra.mxu0 0.0
  %855 = vmatprep.subr.mxu0 0.0
  %856 = vmatpush1.xpose.msra.mxu0 0.0
  %857 = vmatprep.subr.mxu0 0.0
  %858 = vmatpush1.xpose.msra.mxu0 0.0
  %859 = vmatprep.subr.mxu0 0.0
  %860 = vmatpush1.xpose.msra.mxu0 0.0
  %861 = vmatprep.subr.mxu0 0.0
  %862 = vmatpush1.xpose.msra.mxu0 0.0
  %863 = vmatprep.subr.mxu0 0.0
  %864 = vmatpush1.xpose.msra.mxu0 0.0
  %865 = vmatprep.subr.mxu0 0.0
  %866 = vmatpush1.xpose.msra.mxu0 0.0
  %867 = vmatprep.subr.mxu0 0.0
  %868 = vmatpush1.xpose.msra.mxu0 0.0
  %869 = vmatprep.subr.mxu0 0.0
  %870 = vmatpush1.xpose.msra.mxu0 0.0
  %871 = vmatprep.subr.mxu0 0.0
  %872 = vmatpush1.xpose.msra.mxu0 0.0
  %873 = vmatprep.subr.mxu0 0.0
  %874 = vmatpush1.xpose.msra.mxu0 0.0
  %875 = vmatprep.subr.mxu0 0.0
  %876 = vmatpush1.xpose.msra.mxu0 %v845
  %877 = vmatprep.subr.mxu0 0.0
  %878 = vmatpush1.xpose.msra.mxu0 %v843
  %879 = vmatprep.subr.mxu0 0.0
  %880 = vmatpush2.xpose.msra.mxu0 0.0
  %881 = vmatprep.subr.mxu0 0.0
  %882 = vmatpush2.xpose.msra.mxu0 0.0
  %883 = vmatprep.subr.mxu0 0.0
  %884 = vmatpush2.xpose.msra.mxu0 0.0
  %885 = vmatprep.subr.mxu0 0.0
  %886 = vmatpush2.xpose.msra.mxu0 0.0
  %887 = vmatprep.subr.mxu0 0.0
  %888 = vmatpush2.xpose.msra.mxu0 0.0
  %889 = vmatprep.subr.mxu0 0.0
  %890 = vmatpush2.xpose.msra.mxu0 0.0
  %891 = vmatprep.subr.mxu0 0.0
  %892 = vmatpush2.xpose.msra.mxu0 0.0
  %893 = vmatprep.subr.mxu0 0.0
  %894 = vmatpush2.xpose.msra.mxu0 0.0
  %895 = vmatprep.subr.mxu0 0.0
  %896 = vmatpush2.xpose.msra.mxu0 0.0
  %897 = vmatprep.subr.mxu0 0.0
  %898 = vmatpush2.xpose.msra.mxu0 0.0
  %899 = vmatprep.subr.mxu0 0.0
  %900 = vmatpush2.xpose.msra.mxu0 0.0
  %901 = vmatprep.subr.mxu0 0.0
  %902 = vmatpush2.xpose.msra.mxu0 0.0
  %903 = vmatprep.subr.mxu0 0.0
  %904 = vmatpush2.xpose.msra.mxu0 0.0
  %905 = vmatprep.subr.mxu0 0.0
  %906 = vmatpush2.xpose.msra.mxu0 0.0
  %907 = vmatprep.subr.mxu0 0.0
  %908 = vmatpush2.xpose.msra.mxu0 0.0
  %909 = vmatprep.subr.mxu0 0.0
  %910 = vmatpush2.xpose.msra.mxu0 0.0
  %911 = vmatprep.mubr.f32.mxu0 0.0
  %912 = vmatmul.mubr.f32.gmra.mxu0 %v839
  %v913 = vpop.f32.mrf.mxu0
  %v914 = vadd.f32 %v159, %v913
  %v915 = vpop.f32.mrf.mxu0
  %916 = vmatprep.mubr.f32.mxu0 0.0
  %917 = vmatmul.mubr.f32.gmra.mxu0 %v841
  %v918 = vpop.f32.mrf.mxu0
  %v919 = vadd.f32 %v160, %v918
  %v920 = vpop.f32.mrf.mxu0
  %921 = vdwg.mxu0
  %v922 = vsel %vm349, %v914, -inf
  %923 = vmax.xlane.f32.xlu0 %v922
  %v924 = vpop.xlane.xlu0 %923
  %v925 = vsel %vm349, %v919, -inf
  %926 = vmax.xlane.f32.xlu0 %v925
  %v927 = vpop.xlane.xlu0 %926
  %v928 = vsub.f32 %v914, %v924
  %v929 = vsub.f32 %v919, %v927
  %v930 = vmul.f32 %v928, 1.442695
  %v931 = vpow.pop %v930
  %v932 = vmul.f32 %v929, 1.442695
  %v933 = vpow.pop %v932
  %v934 = vsel %vm349, %v931, 0.0
  %935 = vadd.xlane.f32.xlu0 %v934
  %v936 = vpop.xlane.xlu0 %935
  %v937 = vsel %vm349, %v933, 0.0
  %938 = vadd.xlane.f32.xlu0 %v937
  %v939 = vpop.xlane.xlu0 %938
  %v940 = vrcp.pop %v936
  %v941 = vrcp.pop %v939
  %v942 = vmul.f32 %v931, %v940
  %v943 = vmul.f32 %v933, %v941
  %944 = vrot.lane.b32.xlu0 %v251, 48
  %v945 = vpop.permute.xlu0 %944
  %946 = vrot.lane.b32.xlu0 %v256, 48
  %v947 = vpop.permute.xlu0 %946
  %v951 = vsel %vm349, %v942, 0
  %v954 = vsel %vm349, %v943, 0
  %956 = vmatprep.subr.mxu0 0.0
  %957 = vmatpush1.msra.mxu0 0.0
  %958 = vmatprep.subr.mxu0 0.0
  %959 = vmatpush1.msra.mxu0 0.0
  %960 = vmatprep.subr.mxu0 0.0
  %961 = vmatpush1.msra.mxu0 0.0
  %962 = vmatprep.subr.mxu0 0.0
  %963 = vmatpush1.msra.mxu0 0.0
  %964 = vmatprep.subr.mxu0 0.0
  %965 = vmatpush1.msra.mxu0 0.0
  %966 = vmatprep.subr.mxu0 0.0
  %967 = vmatpush1.msra.mxu0 0.0
  %968 = vmatprep.subr.mxu0 0.0
  %969 = vmatpush1.msra.mxu0 0.0
  %970 = vmatprep.subr.mxu0 0.0
  %971 = vmatpush1.msra.mxu0 0.0
  %972 = vmatprep.subr.mxu0 0.0
  %973 = vmatpush1.msra.mxu0 0.0
  %974 = vmatprep.subr.mxu0 0.0
  %975 = vmatpush1.msra.mxu0 0.0
  %976 = vmatprep.subr.mxu0 0.0
  %977 = vmatpush1.msra.mxu0 0.0
  %978 = vmatprep.subr.mxu0 0.0
  %979 = vmatpush1.msra.mxu0 0.0
  %980 = vmatprep.subr.mxu0 0.0
  %981 = vmatpush1.msra.mxu0 0.0
  %982 = vmatprep.subr.mxu0 0.0
  %983 = vmatpush1.msra.mxu0 0.0
  %984 = vmatprep.subr.mxu0 0.0
  %985 = vmatpush1.msra.mxu0 %v947
  %986 = vmatprep.subr.mxu0 0.0
  %987 = vmatpush1.msra.mxu0 %v945
  %988 = vmatprep.subr.mxu0 0.0
  %989 = vmatpush2.msra.mxu0 0.0
  %990 = vmatprep.subr.mxu0 0.0
  %991 = vmatpush2.msra.mxu0 0.0
  %992 = vmatprep.subr.mxu0 0.0
  %993 = vmatpush2.msra.mxu0 0.0
  %994 = vmatprep.subr.mxu0 0.0
  %995 = vmatpush2.msra.mxu0 0.0
  %996 = vmatprep.subr.mxu0 0.0
  %997 = vmatpush2.msra.mxu0 0.0
  %998 = vmatprep.subr.mxu0 0.0
  %999 = vmatpush2.msra.mxu0 0.0
  %1000 = vmatprep.subr.mxu0 0.0
  %1001 = vmatpush2.msra.mxu0 0.0
  %1002 = vmatprep.subr.mxu0 0.0
  %1003 = vmatpush2.msra.mxu0 0.0
  %1004 = vmatprep.subr.mxu0 0.0
  %1005 = vmatpush2.msra.mxu0 0.0
  %1006 = vmatprep.subr.mxu0 0.0
  %1007 = vmatpush2.msra.mxu0 0.0
  %1008 = vmatprep.subr.mxu0 0.0
  %1009 = vmatpush2.msra.mxu0 0.0
  %1010 = vmatprep.subr.mxu0 0.0
  %1011 = vmatpush2.msra.mxu0 0.0
  %1012 = vmatprep.subr.mxu0 0.0
  %1013 = vmatpush2.msra.mxu0 0.0
  %1014 = vmatprep.subr.mxu0 0.0
  %1015 = vmatpush2.msra.mxu0 0.0
  %1016 = vmatprep.subr.mxu0 0.0
  %1017 = vmatpush2.msra.mxu0 0.0
  %1018 = vmatprep.subr.mxu0 0.0
  %1019 = vmatpush2.msra.mxu0 0.0
  %1020 = vmatprep.mubr.f32.mxu0 0.0
  %1021 = vmatmul.mubr.f32.gmra.mxu0 %v951
  %v1022 = vpop.f32.mrf.mxu0
  %v1023 = vadd.f32 0.0, %v1022
  %v1024 = vpop.f32.mrf.mxu0
  %1025 = vmatprep.mubr.f32.mxu0 0.0
  %1026 = vmatmul.mubr.f32.gmra.mxu0 %v954
  %v1027 = vpop.f32.mrf.mxu0
  %v1028 = vadd.f32 0.0, %v1027
  %v1029 = vpop.f32.mrf.mxu0
  %1030 = vdwg.mxu0
  %v1032 = vsel %vm265, %v1023, 0
  %v1035 = vsel %vm265, %v1028, 0
  %1037 = vmatprep.subr.mxu0 0.0
  %1038 = vmatpush1.msra.mxu0 0.0
  %1039 = vmatprep.subr.mxu0 0.0
  %1040 = vmatpush1.msra.mxu0 0.0
  %1041 = vmatprep.subr.mxu0 0.0
  %1042 = vmatpush1.msra.mxu0 0.0
  %1043 = vmatprep.subr.mxu0 0.0
  %1044 = vmatpush1.msra.mxu0 0.0
  %1045 = vmatprep.subr.mxu0 0.0
  %1046 = vmatpush1.msra.mxu0 0.0
  %1047 = vmatprep.subr.mxu0 0.0
  %1048 = vmatpush1.msra.mxu0 0.0
  %1049 = vmatprep.subr.mxu0 0.0
  %1050 = vmatpush1.msra.mxu0 0.0
  %1051 = vmatprep.subr.mxu0 0.0
  %1052 = vmatpush1.msra.mxu0 0.0
  %1053 = vmatprep.subr.mxu0 0.0
  %1054 = vmatpush1.msra.mxu0 0.0
  %1055 = vmatprep.subr.mxu0 0.0
  %1056 = vmatpush1.msra.mxu0 0.0
  %1057 = vmatprep.subr.mxu0 0.0
  %1058 = vmatpush1.msra.mxu0 0.0
  %1059 = vmatprep.subr.mxu0 0.0
  %1060 = vmatpush1.msra.mxu0 0.0
  %1061 = vmatprep.subr.mxu0 0.0
  %1062 = vmatpush1.msra.mxu0 0.0
  %1063 = vmatprep.subr.mxu0 0.0
  %1064 = vmatpush1.msra.mxu0 0.0
  %1065 = vmatprep.subr.mxu0 0.0
  %1066 = vmatpush1.msra.mxu0 0.0
  %1067 = vmatprep.subr.mxu0 0.0
  %1068 = vmatpush1.msra.mxu0 %v168
  %1069 = vmatprep.subr.mxu0 0.0
  %1070 = vmatpush2.msra.mxu0 0.0
  %1071 = vmatprep.subr.mxu0 0.0
  %1072 = vmatpush2.msra.mxu0 0.0
  %1073 = vmatprep.subr.mxu0 0.0
  %1074 = vmatpush2.msra.mxu0 0.0
  %1075 = vmatprep.subr.mxu0 0.0
  %1076 = vmatpush2.msra.mxu0 0.0
  %1077 = vmatprep.subr.mxu0 0.0
  %1078 = vmatpush2.msra.mxu0 0.0
  %1079 = vmatprep.subr.mxu0 0.0
  %1080 = vmatpush2.msra.mxu0 0.0
  %1081 = vmatprep.subr.mxu0 0.0
  %1082 = vmatpush2.msra.mxu0 0.0
  %1083 = vmatprep.subr.mxu0 0.0
  %1084 = vmatpush2.msra.mxu0 0.0
  %1085 = vmatprep.subr.mxu0 0.0
  %1086 = vmatpush2.msra.mxu0 0.0
  %1087 = vmatprep.subr.mxu0 0.0
  %1088 = vmatpush2.msra.mxu0 0.0
  %1089 = vmatprep.subr.mxu0 0.0
  %1090 = vmatpush2.msra.mxu0 0.0
  %1091 = vmatprep.subr.mxu0 0.0
  %1092 = vmatpush2.msra.mxu0 0.0
  %1093 = vmatprep.subr.mxu0 0.0
  %1094 = vmatpush2.msra.mxu0 0.0
  %1095 = vmatprep.subr.mxu0 0.0
  %1096 = vmatpush2.msra.mxu0 0.0
  %1097 = vmatprep.subr.mxu0 0.0
  %1098 = vmatpush2.msra.mxu0 0.0
  %1099 = vmatprep.subr.mxu0 0.0
  %1100 = vmatpush2.msra.mxu0 0.0
  %1101 = vmatprep.mubr.f32.mxu0 0.0
  %1102 = vmatmul.mubr.f32.gmra.mxu0 %v1032
  %v1103 = vpop.f32.mrf.mxu0
  %v1104 = vadd.f32 0.0, %v1103
  %v1105 = vpop.f32.mrf.mxu0
  %1106 = vmatprep.mubr.f32.mxu0 0.0
  %1107 = vmatmul.mubr.f32.gmra.mxu0 %v1035
  %v1108 = vpop.f32.mrf.mxu0
  %v1109 = vadd.f32 0.0, %v1108
  %v1110 = vpop.f32.mrf.mxu0
  %1111 = vdwg.mxu0
  %v1112 = vadd.f32 %v829, %v1104
  %v1113 = vadd.f32 %v830, %v1109
  %1114 = vrot.lane.b32.xlu0 %v251, 104
  %v1115 = vpop.permute.xlu0 %1114
  %1116 = vrot.lane.b32.xlu0 %v256, 104
  %v1117 = vpop.permute.xlu0 %1116
  %1118 = vrot.lane.b32.xlu0 %v251, 72
  %v1119 = vpop.permute.xlu0 %1118
  %1120 = vrot.lane.b32.xlu0 %v256, 72
  %v1121 = vpop.permute.xlu0 %1120
  %v1122 = vsel %vm265, %v1115, 0
  %v1124 = vsel %vm265, %v1117, 0
  %v1126 = vsel %vm265, %v1119, 0
  %v1128 = vsel %vm265, %v1121, 0
  %1130 = vmatprep.subr.mxu0 0.0
  %1131 = vmatpush1.xpose.msra.mxu0 0.0
  %1132 = vmatprep.subr.mxu0 0.0
  %1133 = vmatpush1.xpose.msra.mxu0 0.0
  %1134 = vmatprep.subr.mxu0 0.0
  %1135 = vmatpush1.xpose.msra.mxu0 0.0
  %1136 = vmatprep.subr.mxu0 0.0
  %1137 = vmatpush1.xpose.msra.mxu0 0.0
  %1138 = vmatprep.subr.mxu0 0.0
  %1139 = vmatpush1.xpose.msra.mxu0 0.0
  %1140 = vmatprep.subr.mxu0 0.0
  %1141 = vmatpush1.xpose.msra.mxu0 0.0
  %1142 = vmatprep.subr.mxu0 0.0
  %1143 = vmatpush1.xpose.msra.mxu0 0.0
  %1144 = vmatprep.subr.mxu0 0.0
  %1145 = vmatpush1.xpose.msra.mxu0 0.0
  %1146 = vmatprep.subr.mxu0 0.0
  %1147 = vmatpush1.xpose.msra.mxu0 0.0
  %1148 = vmatprep.subr.mxu0 0.0
  %1149 = vmatpush1.xpose.msra.mxu0 0.0
  %1150 = vmatprep.subr.mxu0 0.0
  %1151 = vmatpush1.xpose.msra.mxu0 0.0
  %1152 = vmatprep.subr.mxu0 0.0
  %1153 = vmatpush1.xpose.msra.mxu0 0.0
  %1154 = vmatprep.subr.mxu0 0.0
  %1155 = vmatpush1.xpose.msra.mxu0 0.0
  %1156 = vmatprep.subr.mxu0 0.0
  %1157 = vmatpush1.xpose.msra.mxu0 0.0
  %1158 = vmatprep.subr.mxu0 0.0
  %1159 = vmatpush1.xpose.msra.mxu0 %v1128
  %1160 = vmatprep.subr.mxu0 0.0
  %1161 = vmatpush1.xpose.msra.mxu0 %v1126
  %1162 = vmatprep.subr.mxu0 0.0
  %1163 = vmatpush2.xpose.msra.mxu0 0.0
  %1164 = vmatprep.subr.mxu0 0.0
  %1165 = vmatpush2.xpose.msra.mxu0 0.0
  %1166 = vmatprep.subr.mxu0 0.0
  %1167 = vmatpush2.xpose.msra.mxu0 0.0
  %1168 = vmatprep.subr.mxu0 0.0
  %1169 = vmatpush2.xpose.msra.mxu0 0.0
  %1170 = vmatprep.subr.mxu0 0.0
  %1171 = vmatpush2.xpose.msra.mxu0 0.0
  %1172 = vmatprep.subr.mxu0 0.0
  %1173 = vmatpush2.xpose.msra.mxu0 0.0
  %1174 = vmatprep.subr.mxu0 0.0
  %1175 = vmatpush2.xpose.msra.mxu0 0.0
  %1176 = vmatprep.subr.mxu0 0.0
  %1177 = vmatpush2.xpose.msra.mxu0 0.0
  %1178 = vmatprep.subr.mxu0 0.0
  %1179 = vmatpush2.xpose.msra.mxu0 0.0
  %1180 = vmatprep.subr.mxu0 0.0
  %1181 = vmatpush2.xpose.msra.mxu0 0.0
  %1182 = vmatprep.subr.mxu0 0.0
  %1183 = vmatpush2.xpose.msra.mxu0 0.0
  %1184 = vmatprep.subr.mxu0 0.0
  %1185 = vmatpush2.xpose.msra.mxu0 0.0
  %1186 = vmatprep.subr.mxu0 0.0
  %1187 = vmatpush2.xpose.msra.mxu0 0.0
  %1188 = vmatprep.subr.mxu0 0.0
  %1189 = vmatpush2.xpose.msra.mxu0 0.0
  %1190 = vmatprep.subr.mxu0 0.0
  %1191 = vmatpush2.xpose.msra.mxu0 0.0
  %1192 = vmatprep.subr.mxu0 0.0
  %1193 = vmatpush2.xpose.msra.mxu0 0.0
  %1194 = vmatprep.mubr.f32.mxu0 0.0
  %1195 = vmatmul.mubr.f32.gmra.mxu0 %v1122
  %v1196 = vpop.f32.mrf.mxu0
  %v1197 = vadd.f32 %v159, %v1196
  %v1198 = vpop.f32.mrf.mxu0
  %1199 = vmatprep.mubr.f32.mxu0 0.0
  %1200 = vmatmul.mubr.f32.gmra.mxu0 %v1124
  %v1201 = vpop.f32.mrf.mxu0
  %v1202 = vadd.f32 %v160, %v1201
  %v1203 = vpop.f32.mrf.mxu0
  %1204 = vdwg.mxu0
  %v1205 = vsel %vm349, %v1197, -inf
  %1206 = vmax.xlane.f32.xlu0 %v1205
  %v1207 = vpop.xlane.xlu0 %1206
  %v1208 = vsel %vm349, %v1202, -inf
  %1209 = vmax.xlane.f32.xlu0 %v1208
  %v1210 = vpop.xlane.xlu0 %1209
  %v1211 = vsub.f32 %v1197, %v1207
  %v1212 = vsub.f32 %v1202, %v1210
  %v1213 = vmul.f32 %v1211, 1.442695
  %v1214 = vpow.pop %v1213
  %v1215 = vmul.f32 %v1212, 1.442695
  %v1216 = vpow.pop %v1215
  %v1217 = vsel %vm349, %v1214, 0.0
  %1218 = vadd.xlane.f32.xlu0 %v1217
  %v1219 = vpop.xlane.xlu0 %1218
  %v1220 = vsel %vm349, %v1216, 0.0
  %1221 = vadd.xlane.f32.xlu0 %v1220
  %v1222 = vpop.xlane.xlu0 %1221
  %v1223 = vrcp.pop %v1219
  %v1224 = vrcp.pop %v1222
  %v1225 = vmul.f32 %v1214, %v1223
  %v1226 = vmul.f32 %v1216, %v1224
  %1227 = vrot.lane.b32.xlu0 %v251, 40
  %v1228 = vpop.permute.xlu0 %1227
  %1229 = vrot.lane.b32.xlu0 %v256, 40
  %v1230 = vpop.permute.xlu0 %1229
  %v1234 = vsel %vm349, %v1225, 0
  %v1237 = vsel %vm349, %v1226, 0
  %1239 = vmatprep.subr.mxu0 0.0
  %1240 = vmatpush1.msra.mxu0 0.0
  %1241 = vmatprep.subr.mxu0 0.0
  %1242 = vmatpush1.msra.mxu0 0.0
  %1243 = vmatprep.subr.mxu0 0.0
  %1244 = vmatpush1.msra.mxu0 0.0
  %1245 = vmatprep.subr.mxu0 0.0
  %1246 = vmatpush1.msra.mxu0 0.0
  %1247 = vmatprep.subr.mxu0 0.0
  %1248 = vmatpush1.msra.mxu0 0.0
  %1249 = vmatprep.subr.mxu0 0.0
  %1250 = vmatpush1.msra.mxu0 0.0
  %1251 = vmatprep.subr.mxu0 0.0
  %1252 = vmatpush1.msra.mxu0 0.0
  %1253 = vmatprep.subr.mxu0 0.0
  %1254 = vmatpush1.msra.mxu0 0.0
  %1255 = vmatprep.subr.mxu0 0.0
  %1256 = vmatpush1.msra.mxu0 0.0
  %1257 = vmatprep.subr.mxu0 0.0
  %1258 = vmatpush1.msra.mxu0 0.0
  %1259 = vmatprep.subr.mxu0 0.0
  %1260 = vmatpush1.msra.mxu0 0.0
  %1261 = vmatprep.subr.mxu0 0.0
  %1262 = vmatpush1.msra.mxu0 0.0
  %1263 = vmatprep.subr.mxu0 0.0
  %1264 = vmatpush1.msra.mxu0 0.0
  %1265 = vmatprep.subr.mxu0 0.0
  %1266 = vmatpush1.msra.mxu0 0.0
  %1267 = vmatprep.subr.mxu0 0.0
  %1268 = vmatpush1.msra.mxu0 %v1230
  %1269 = vmatprep.subr.mxu0 0.0
  %1270 = vmatpush1.msra.mxu0 %v1228
  %1271 = vmatprep.subr.mxu0 0.0
  %1272 = vmatpush2.msra.mxu0 0.0
  %1273 = vmatprep.subr.mxu0 0.0
  %1274 = vmatpush2.msra.mxu0 0.0
  %1275 = vmatprep.subr.mxu0 0.0
  %1276 = vmatpush2.msra.mxu0 0.0
  %1277 = vmatprep.subr.mxu0 0.0
  %1278 = vmatpush2.msra.mxu0 0.0
  %1279 = vmatprep.subr.mxu0 0.0
  %1280 = vmatpush2.msra.mxu0 0.0
  %1281 = vmatprep.subr.mxu0 0.0
  %1282 = vmatpush2.msra.mxu0 0.0
  %1283 = vmatprep.subr.mxu0 0.0
  %1284 = vmatpush2.msra.mxu0 0.0
  %1285 = vmatprep.subr.mxu0 0.0
  %1286 = vmatpush2.msra.mxu0 0.0
  %1287 = vmatprep.subr.mxu0 0.0
  %1288 = vmatpush2.msra.mxu0 0.0
  %1289 = vmatprep.subr.mxu0 0.0
  %1290 = vmatpush2.msra.mxu0 0.0
  %1291 = vmatprep.subr.mxu0 0.0
  %1292 = vmatpush2.msra.mxu0 0.0
  %1293 = vmatprep.subr.mxu0 0.0
  %1294 = vmatpush2.msra.mxu0 0.0
  %1295 = vmatprep.subr.mxu0 0.0
  %1296 = vmatpush2.msra.mxu0 0.0
  %1297 = vmatprep.subr.mxu0 0.0
  %1298 = vmatpush2.msra.mxu0 0.0
  %1299 = vmatprep.subr.mxu0 0.0
  %1300 = vmatpush2.msra.mxu0 0.0
  %1301 = vmatprep.subr.mxu0 0.0
  %1302 = vmatpush2.msra.mxu0 0.0
  %1303 = vmatprep.mubr.f32.mxu0 0.0
  %1304 = vmatmul.mubr.f32.gmra.mxu0 %v1234
  %v1305 = vpop.f32.mrf.mxu0
  %v1306 = vadd.f32 0.0, %v1305
  %v1307 = vpop.f32.mrf.mxu0
  %1308 = vmatprep.mubr.f32.mxu0 0.0
  %1309 = vmatmul.mubr.f32.gmra.mxu0 %v1237
  %v1310 = vpop.f32.mrf.mxu0
  %v1311 = vadd.f32 0.0, %v1310
  %v1312 = vpop.f32.mrf.mxu0
  %1313 = vdwg.mxu0
  %v1315 = vsel %vm265, %v1306, 0
  %v1318 = vsel %vm265, %v1311, 0
  %1320 = vmatprep.subr.mxu0 0.0
  %1321 = vmatpush1.msra.mxu0 0.0
  %1322 = vmatprep.subr.mxu0 0.0
  %1323 = vmatpush1.msra.mxu0 0.0
  %1324 = vmatprep.subr.mxu0 0.0
  %1325 = vmatpush1.msra.mxu0 0.0
  %1326 = vmatprep.subr.mxu0 0.0
  %1327 = vmatpush1.msra.mxu0 0.0
  %1328 = vmatprep.subr.mxu0 0.0
  %1329 = vmatpush1.msra.mxu0 0.0
  %1330 = vmatprep.subr.mxu0 0.0
  %1331 = vmatpush1.msra.mxu0 0.0
  %1332 = vmatprep.subr.mxu0 0.0
  %1333 = vmatpush1.msra.mxu0 0.0
  %1334 = vmatprep.subr.mxu0 0.0
  %1335 = vmatpush1.msra.mxu0 0.0
  %1336 = vmatprep.subr.mxu0 0.0
  %1337 = vmatpush1.msra.mxu0 0.0
  %1338 = vmatprep.subr.mxu0 0.0
  %1339 = vmatpush1.msra.mxu0 0.0
  %1340 = vmatprep.subr.mxu0 0.0
  %1341 = vmatpush1.msra.mxu0 0.0
  %1342 = vmatprep.subr.mxu0 0.0
  %1343 = vmatpush1.msra.mxu0 0.0
  %1344 = vmatprep.subr.mxu0 0.0
  %1345 = vmatpush1.msra.mxu0 0.0
  %1346 = vmatprep.subr.mxu0 0.0
  %1347 = vmatpush1.msra.mxu0 0.0
  %1348 = vmatprep.subr.mxu0 0.0
  %1349 = vmatpush1.msra.mxu0 0.0
  %1350 = vmatprep.subr.mxu0 0.0
  %1351 = vmatpush1.msra.mxu0 %v169
  %1352 = vmatprep.subr.mxu0 0.0
  %1353 = vmatpush2.msra.mxu0 0.0
  %1354 = vmatprep.subr.mxu0 0.0
  %1355 = vmatpush2.msra.mxu0 0.0
  %1356 = vmatprep.subr.mxu0 0.0
  %1357 = vmatpush2.msra.mxu0 0.0
  %1358 = vmatprep.subr.mxu0 0.0
  %1359 = vmatpush2.msra.mxu0 0.0
  %1360 = vmatprep.subr.mxu0 0.0
  %1361 = vmatpush2.msra.mxu0 0.0
  %1362 = vmatprep.subr.mxu0 0.0
  %1363 = vmatpush2.msra.mxu0 0.0
  %1364 = vmatprep.subr.mxu0 0.0
  %1365 = vmatpush2.msra.mxu0 0.0
  %1366 = vmatprep.subr.mxu0 0.0
  %1367 = vmatpush2.msra.mxu0 0.0
  %1368 = vmatprep.subr.mxu0 0.0
  %1369 = vmatpush2.msra.mxu0 0.0
  %1370 = vmatprep.subr.mxu0 0.0
  %1371 = vmatpush2.msra.mxu0 0.0
  %1372 = vmatprep.subr.mxu0 0.0
  %1373 = vmatpush2.msra.mxu0 0.0
  %1374 = vmatprep.subr.mxu0 0.0
  %1375 = vmatpush2.msra.mxu0 0.0
  %1376 = vmatprep.subr.mxu0 0.0
  %1377 = vmatpush2.msra.mxu0 0.0
  %1378 = vmatprep.subr.mxu0 0.0
  %1379 = vmatpush2.msra.mxu0 0.0
  %1380 = vmatprep.subr.mxu0 0.0
  %1381 = vmatpush2.msra.mxu0 0.0
  %1382 = vmatprep.subr.mxu0 0.0
  %1383 = vmatpush2.msra.mxu0 0.0
  %1384 = vmatprep.mubr.f32.mxu0 0.0
  %1385 = vmatmul.mubr.f32.gmra.mxu0 %v1315
  %v1386 = vpop.f32.mrf.mxu0
  %v1387 = vadd.f32 0.0, %v1386
  %v1388 = vpop.f32.mrf.mxu0
  %1389 = vmatprep.mubr.f32.mxu0 0.0
  %1390 = vmatmul.mubr.f32.gmra.mxu0 %v1318
  %v1391 = vpop.f32.mrf.mxu0
  %v1392 = vadd.f32 0.0, %v1391
  %v1393 = vpop.f32.mrf.mxu0
  %1394 = vdwg.mxu0
  %v1395 = vadd.f32 %v1112, %v1387
  %v1396 = vadd.f32 %v1113, %v1392
  %v1397 = vadd.f32 %v151, %v1395
  %v1398 = vadd.f32 %v156, %v1396
  %v1399 = vld [vmem:[%s8] sm:$0x1]
  %v1400 = vld [vmem:[%s9] sm:$0x1]
  %v1401 = vsel %vm177, %v1397, 0.0
  %1402 = vadd.xlane.f32.xlu0 %v1401
  %v1403 = vpop.xlane.xlu0 %1402
  %v1404 = vsel %vm177, %v1398, 0.0
  %1405 = vadd.xlane.f32.xlu0 %v1404
  %v1406 = vpop.xlane.xlu0 %1405
  %v1407 = vrcp.pop 32.0
  %v1408 = vmul.f32 %v1403, %v1407
  %v1409 = vmul.f32 %v1406, %v1407
  %v1410 = vsub.f32 %v1397, %v1408
  %v1411 = vsub.f32 %v1398, %v1409
  %v1412 = vmul.f32 %v1410, %v1410
  %v1413 = vmul.f32 %v1411, %v1411
  %v1414 = vsel %vm177, %v1412, 0.0
  %1415 = vadd.xlane.f32.xlu0 %v1414
  %v1416 = vpop.xlane.xlu0 %1415
  %v1417 = vsel %vm177, %v1413, 0.0
  %1418 = vadd.xlane.f32.xlu0 %v1417
  %v1419 = vpop.xlane.xlu0 %1418
  %v1420 = vmul.f32 %v1416, %v1407
  %v1421 = vmul.f32 %v1419, %v1407
  %v1422 = vadd.f32 %v1420, 1e-05
  %v1423 = vadd.f32 %v1421, 1e-05
  %v1424 = vrsqrt.pop %v1422
  %v1425 = vrsqrt.pop %v1423
  %v1426 = vmul.f32 %v1410, %v1424
  %v1427 = vmul.f32 %v1411, %v1425
  %v1429 = vlaneseq
  %v1430 = vshrl.u32 %v1429, 7
  %v1431 = vsub.s32 0, %v1430
  %v1432 = vrot.slane %v1399, %v1431
  %v1434 = vmul.f32 %v1426, %v1432
  %v1435 = vmul.f32 %v1427, %v1432
  %v1437 = vlaneseq
  %v1438 = vshrl.u32 %v1437, 7
  %v1439 = vsub.s32 0, %v1438
  %v1440 = vrot.slane %v1400, %v1439
  %v1442 = vadd.f32 %v1434, %v1440
  %v1443 = vadd.f32 %v1435, %v1440
  %v1444 = vld [vmem:[%s10] sm:$0xff]
  %v1445 = vld [vmem:[%s10 + $0x8] sm:$0xff]
  %v1446 = vld [vmem:[%s10 + $0x10] sm:$0xff]
  %v1447 = vld [vmem:[%s10 + $0x18] sm:$0xff]
  %v1448 = vld [vmem:[%s11] sm:$0x1]
  %v1450 = vlaneseq
  %v1451 = vshrl.u32 %v1450, 7
  %v1452 = vsub.s32 0, %v1451
  %v1453 = vrot.slane %v1448, %v1452
  %v1456 = vsel %vm177, %v1442, 0
  %v1459 = vsel %vm177, %v1443, 0
  %1461 = vmatprep.subr.mxu0 0.0
  %1462 = vmatpush1.msra.mxu0 0.0
  %1463 = vmatprep.subr.mxu0 0.0
  %1464 = vmatpush1.msra.mxu0 0.0
  %1465 = vmatprep.subr.mxu0 0.0
  %1466 = vmatpush1.msra.mxu0 0.0
  %1467 = vmatprep.subr.mxu0 0.0
  %1468 = vmatpush1.msra.mxu0 0.0
  %1469 = vmatprep.subr.mxu0 0.0
  %1470 = vmatpush1.msra.mxu0 0.0
  %1471 = vmatprep.subr.mxu0 0.0
  %1472 = vmatpush1.msra.mxu0 0.0
  %1473 = vmatprep.subr.mxu0 0.0
  %1474 = vmatpush1.msra.mxu0 0.0
  %1475 = vmatprep.subr.mxu0 0.0
  %1476 = vmatpush1.msra.mxu0 0.0
  %1477 = vmatprep.subr.mxu0 0.0
  %1478 = vmatpush1.msra.mxu0 0.0
  %1479 = vmatprep.subr.mxu0 0.0
  %1480 = vmatpush1.msra.mxu0 0.0
  %1481 = vmatprep.subr.mxu0 0.0
  %1482 = vmatpush1.msra.mxu0 0.0
  %1483 = vmatprep.subr.mxu0 0.0
  %1484 = vmatpush1.msra.mxu0 0.0
  %1485 = vmatprep.subr.mxu0 0.0
  %1486 = vmatpush1.msra.mxu0 %v1447
  %1487 = vmatprep.subr.mxu0 0.0
  %1488 = vmatpush1.msra.mxu0 %v1446
  %1489 = vmatprep.subr.mxu0 0.0
  %1490 = vmatpush1.msra.mxu0 %v1445
  %1491 = vmatprep.subr.mxu0 0.0
  %1492 = vmatpush1.msra.mxu0 %v1444
  %1493 = vmatprep.subr.mxu0 0.0
  %1494 = vmatpush2.msra.mxu0 0.0
  %1495 = vmatprep.subr.mxu0 0.0
  %1496 = vmatpush2.msra.mxu0 0.0
  %1497 = vmatprep.subr.mxu0 0.0
  %1498 = vmatpush2.msra.mxu0 0.0
  %1499 = vmatprep.subr.mxu0 0.0
  %1500 = vmatpush2.msra.mxu0 0.0
  %1501 = vmatprep.subr.mxu0 0.0
  %1502 = vmatpush2.msra.mxu0 0.0
  %1503 = vmatprep.subr.mxu0 0.0
  %1504 = vmatpush2.msra.mxu0 0.0
  %1505 = vmatprep.subr.mxu0 0.0
  %1506 = vmatpush2.msra.mxu0 0.0
  %1507 = vmatprep.subr.mxu0 0.0
  %1508 = vmatpush2.msra.mxu0 0.0
  %1509 = vmatprep.subr.mxu0 0.0
  %1510 = vmatpush2.msra.mxu0 0.0
  %1511 = vmatprep.subr.mxu0 0.0
  %1512 = vmatpush2.msra.mxu0 0.0
  %1513 = vmatprep.subr.mxu0 0.0
  %1514 = vmatpush2.msra.mxu0 0.0
  %1515 = vmatprep.subr.mxu0 0.0
  %1516 = vmatpush2.msra.mxu0 0.0
  %1517 = vmatprep.subr.mxu0 0.0
  %1518 = vmatpush2.msra.mxu0 0.0
  %1519 = vmatprep.subr.mxu0 0.0
  %1520 = vmatpush2.msra.mxu0 0.0
  %1521 = vmatprep.subr.mxu0 0.0
  %1522 = vmatpush2.msra.mxu0 0.0
  %1523 = vmatprep.subr.mxu0 0.0
  %1524 = vmatpush2.msra.mxu0 0.0
  %1525 = vmatprep.mubr.f32.mxu0 0.0
  %1526 = vmatmul.mubr.f32.gmra.mxu0 %v1456
  %v1527 = vpop.f32.mrf.mxu0
  %v1528 = vadd.f32 %v1453, %v1527
  %v1529 = vpop.f32.mrf.mxu0
  %1530 = vmatprep.mubr.f32.mxu0 0.0
  %1531 = vmatmul.mubr.f32.gmra.mxu0 %v1459
  %v1532 = vpop.f32.mrf.mxu0
  %v1533 = vadd.f32 %v1453, %v1532
  %v1534 = vpop.f32.mrf.mxu0
  %1535 = vdwg.mxu0
  %v1536 = vmax.f32 %v1528, 0.0
  %v1537 = vmax.f32 %v1533, 0.0
  %v1538 = vld [vmem:[%s12] sm:$0xff]
  %v1539 = vld [vmem:[%s12 + $0x8] sm:$0xff]
  %v1540 = vld [vmem:[%s12 + $0x10] sm:$0xff]
  %v1541 = vld [vmem:[%s12 + $0x18] sm:$0xff]
  %v1542 = vld [vmem:[%s12 + $0x20] sm:$0xff]
  %v1543 = vld [vmem:[%s12 + $0x28] sm:$0xff]
  %v1544 = vld [vmem:[%s12 + $0x30] sm:$0xff]
  %v1545 = vld [vmem:[%s12 + $0x38] sm:$0xff]
  %v1546 = vld [vmem:[%s12 + $0x40] sm:$0xff]
  %v1547 = vld [vmem:[%s12 + $0x48] sm:$0xff]
  %v1548 = vld [vmem:[%s12 + $0x50] sm:$0xff]
  %v1549 = vld [vmem:[%s12 + $0x58] sm:$0xff]
  %v1550 = vld [vmem:[%s12 + $0x60] sm:$0xff]
  %v1551 = vld [vmem:[%s12 + $0x68] sm:$0xff]
  %v1552 = vld [vmem:[%s12 + $0x70] sm:$0xff]
  %v1553 = vld [vmem:[%s12 + $0x78] sm:$0xff]
  %v1554 = vld [vmem:[%s13] sm:$0x1]
  %v1556 = vlaneseq
  %v1557 = vshrl.u32 %v1556, 7
  %v1558 = vsub.s32 0, %v1557
  %v1559 = vrot.slane %v1554, %v1558
  %1561 = vmatprep.subr.mxu0 0.0
  %1562 = vmatpush1.msra.mxu0 %v1553
  %1563 = vmatprep.subr.mxu0 0.0
  %1564 = vmatpush1.msra.mxu0 %v1552
  %1565 = vmatprep.subr.mxu0 0.0
  %1566 = vmatpush1.msra.mxu0 %v1551
  %1567 = vmatprep.subr.mxu0 0.0
  %1568 = vmatpush1.msra.mxu0 %v1550
  %1569 = vmatprep.subr.mxu0 0.0
  %1570 = vmatpush1.msra.mxu0 %v1549
  %1571 = vmatprep.subr.mxu0 0.0
  %1572 = vmatpush1.msra.mxu0 %v1548
  %1573 = vmatprep.subr.mxu0 0.0
  %1574 = vmatpush1.msra.mxu0 %v1547
  %1575 = vmatprep.subr.mxu0 0.0
  %1576 = vmatpush1.msra.mxu0 %v1546
  %1577 = vmatprep.subr.mxu0 0.0
  %1578 = vmatpush1.msra.mxu0 %v1545
  %1579 = vmatprep.subr.mxu0 0.0
  %1580 = vmatpush1.msra.mxu0 %v1544
  %1581 = vmatprep.subr.mxu0 0.0
  %1582 = vmatpush1.msra.mxu0 %v1543
  %1583 = vmatprep.subr.mxu0 0.0
  %1584 = vmatpush1.msra.mxu0 %v1542
  %1585 = vmatprep.subr.mxu0 0.0
  %1586 = vmatpush1.msra.mxu0 %v1541
  %1587 = vmatprep.subr.mxu0 0.0
  %1588 = vmatpush1.msra.mxu0 %v1540
  %1589 = vmatprep.subr.mxu0 0.0
  %1590 = vmatpush1.msra.mxu0 %v1539
  %1591 = vmatprep.subr.mxu0 0.0
  %1592 = vmatpush1.msra.mxu0 %v1538
  %1593 = vmatprep.subr.mxu0 0.0
  %1594 = vmatpush2.msra.mxu0 0.0
  %1595 = vmatprep.subr.mxu0 0.0
  %1596 = vmatpush2.msra.mxu0 0.0
  %1597 = vmatprep.subr.mxu0 0.0
  %1598 = vmatpush2.msra.mxu0 0.0
  %1599 = vmatprep.subr.mxu0 0.0
  %1600 = vmatpush2.msra.mxu0 0.0
  %1601 = vmatprep.subr.mxu0 0.0
  %1602 = vmatpush2.msra.mxu0 0.0
  %1603 = vmatprep.subr.mxu0 0.0
  %1604 = vmatpush2.msra.mxu0 0.0
  %1605 = vmatprep.subr.mxu0 0.0
  %1606 = vmatpush2.msra.mxu0 0.0
  %1607 = vmatprep.subr.mxu0 0.0
  %1608 = vmatpush2.msra.mxu0 0.0
  %1609 = vmatprep.subr.mxu0 0.0
  %1610 = vmatpush2.msra.mxu0 0.0
  %1611 = vmatprep.subr.mxu0 0.0
  %1612 = vmatpush2.msra.mxu0 0.0
  %1613 = vmatprep.subr.mxu0 0.0
  %1614 = vmatpush2.msra.mxu0 0.0
  %1615 = vmatprep.subr.mxu0 0.0
  %1616 = vmatpush2.msra.mxu0 0.0
  %1617 = vmatprep.subr.mxu0 0.0
  %1618 = vmatpush2.msra.mxu0 0.0
  %1619 = vmatprep.subr.mxu0 0.0
  %1620 = vmatpush2.msra.mxu0 0.0
  %1621 = vmatprep.subr.mxu0 0.0
  %1622 = vmatpush2.msra.mxu0 0.0
  %1623 = vmatprep.subr.mxu0 0.0
  %1624 = vmatpush2.msra.mxu0 0.0
  %1625 = vmatprep.mubr.f32.mxu0 0.0
  %1626 = vmatmul.mubr.f32.gmra.mxu0 %v1536
  %v1627 = vpop.f32.mrf.mxu0
  %v1628 = vadd.f32 %v1559, %v1627
  %v1629 = vpop.f32.mrf.mxu0
  %1630 = vmatprep.mubr.f32.mxu0 0.0
  %1631 = vmatmul.mubr.f32.gmra.mxu0 %v1537
  %v1632 = vpop.f32.mrf.mxu0
  %v1633 = vadd.f32 %v1559, %v1632
  %v1634 = vpop.f32.mrf.mxu0
  %1635 = vdwg.mxu0
  %v1636 = vadd.f32 %v1442, %v1628
  %v1637 = vadd.f32 %v1443, %v1633
  %v1638 = vld [vmem:[%s14] sm:$0x1]
  %v1639 = vld [vmem:[%s15] sm:$0x1]
  %v1640 = vsel %vm177, %v1636, 0.0
  %1641 = vadd.xlane.f32.xlu0 %v1640
  %v1642 = vpop.xlane.xlu0 %1641
  %v1643 = vsel %vm177, %v1637, 0.0
  %1644 = vadd.xlane.f32.xlu0 %v1643
  %v1645 = vpop.xlane.xlu0 %1644
  %v1646 = vmul.f32 %v1642, %v1407
  %v1647 = vmul.f32 %v1645, %v1407
  %v1648 = vsub.f32 %v1636, %v1646
  %v1649 = vsub.f32 %v1637, %v1647
  %v1650 = vmul.f32 %v1648, %v1648
  %v1651 = vmul.f32 %v1649, %v1649
  %v1652 = vsel %vm177, %v1650, 0.0
  %1653 = vadd.xlane.f32.xlu0 %v1652
  %v1654 = vpop.xlane.xlu0 %1653
  %v1655 = vsel %vm177, %v1651, 0.0
  %1656 = vadd.xlane.f32.xlu0 %v1655
  %v1657 = vpop.xlane.xlu0 %1656
  %v1658 = vmul.f32 %v1654, %v1407
  %v1659 = vmul.f32 %v1657, %v1407
  %v1660 = vadd.f32 %v1658, 1e-05
  %v1661 = vadd.f32 %v1659, 1e-05
  %v1662 = vrsqrt.pop %v1660
  %v1663 = vrsqrt.pop %v1661
  %v1664 = vmul.f32 %v1648, %v1662
  %v1665 = vmul.f32 %v1649, %v1663
  %v1667 = vlaneseq
  %v1668 = vshrl.u32 %v1667, 7
  %v1669 = vsub.s32 0, %v1668
  %v1670 = vrot.slane %v1638, %v1669
  %v1672 = vmul.f32 %v1664, %v1670
  %v1673 = vmul.f32 %v1665, %v1670
  %v1675 = vlaneseq
  %v1676 = vshrl.u32 %v1675, 7
  %v1677 = vsub.s32 0, %v1676
  %v1678 = vrot.slane %v1639, %v1677
  %v1680 = vadd.f32 %v1672, %v1678
  %v1681 = vadd.f32 %v1673, %v1678
  %s1682 = scalar_lea.vmem %s4, 32
  %v1683 = vld [vmem:[%s1682] sm:$0xff]
  %v1684 = vld [vmem:[%s1682 + $0x8] sm:$0xff]
  %v1685 = vld [vmem:[%s1682 + $0x10] sm:$0xff]
  %v1686 = vld [vmem:[%s1682 + $0x18] sm:$0xff]
  %s1687 = scalar_lea.vmem %s5, 1
  %v1688 = vld [vmem:[%s1687] sm:$0x1]
  %s1689 = scalar_lea.vmem %s6, 32
  %v1690 = vld [vmem:[%s1689] sm:$0xff]
  %v1691 = vld [vmem:[%s1689 + $0x8] sm:$0xff]
  %v1692 = vld [vmem:[%s1689 + $0x10] sm:$0xff]
  %v1693 = vld [vmem:[%s1689 + $0x18] sm:$0xff]
  %s1694 = scalar_lea.vmem %s7, 1
  %v1695 = vld [vmem:[%s1694] sm:$0x1]
  %v1697 = vlaneseq
  %v1698 = vshrl.u32 %v1697, 7
  %v1699 = vsub.s32 0, %v1698
  %v1700 = vrot.slane %v1688, %v1699
  %v1703 = vsel %vm177, %v1680, 0
  %v1706 = vsel %vm177, %v1681, 0
  %1708 = vmatprep.subr.mxu0 0.0
  %1709 = vmatpush1.msra.mxu0 0.0
  %1710 = vmatprep.subr.mxu0 0.0
  %1711 = vmatpush1.msra.mxu0 0.0
  %1712 = vmatprep.subr.mxu0 0.0
  %1713 = vmatpush1.msra.mxu0 0.0
  %1714 = vmatprep.subr.mxu0 0.0
  %1715 = vmatpush1.msra.mxu0 0.0
  %1716 = vmatprep.subr.mxu0 0.0
  %1717 = vmatpush1.msra.mxu0 0.0
  %1718 = vmatprep.subr.mxu0 0.0
  %1719 = vmatpush1.msra.mxu0 0.0
  %1720 = vmatprep.subr.mxu0 0.0
  %1721 = vmatpush1.msra.mxu0 0.0
  %1722 = vmatprep.subr.mxu0 0.0
  %1723 = vmatpush1.msra.mxu0 0.0
  %1724 = vmatprep.subr.mxu0 0.0
  %1725 = vmatpush1.msra.mxu0 0.0
  %1726 = vmatprep.subr.mxu0 0.0
  %1727 = vmatpush1.msra.mxu0 0.0
  %1728 = vmatprep.subr.mxu0 0.0
  %1729 = vmatpush1.msra.mxu0 0.0
  %1730 = vmatprep.subr.mxu0 0.0
  %1731 = vmatpush1.msra.mxu0 0.0
  %1732 = vmatprep.subr.mxu0 0.0
  %1733 = vmatpush1.msra.mxu0 %v1686
  %1734 = vmatprep.subr.mxu0 0.0
  %1735 = vmatpush1.msra.mxu0 %v1685
  %1736 = vmatprep.subr.mxu0 0.0
  %1737 = vmatpush1.msra.mxu0 %v1684
  %1738 = vmatprep.subr.mxu0 0.0
  %1739 = vmatpush1.msra.mxu0 %v1683
  %1740 = vmatprep.subr.mxu0 0.0
  %1741 = vmatpush2.msra.mxu0 0.0
  %1742 = vmatprep.subr.mxu0 0.0
  %1743 = vmatpush2.msra.mxu0 0.0
  %1744 = vmatprep.subr.mxu0 0.0
  %1745 = vmatpush2.msra.mxu0 0.0
  %1746 = vmatprep.subr.mxu0 0.0
  %1747 = vmatpush2.msra.mxu0 0.0
  %1748 = vmatprep.subr.mxu0 0.0
  %1749 = vmatpush2.msra.mxu0 0.0
  %1750 = vmatprep.subr.mxu0 0.0
  %1751 = vmatpush2.msra.mxu0 0.0
  %1752 = vmatprep.subr.mxu0 0.0
  %1753 = vmatpush2.msra.mxu0 0.0
  %1754 = vmatprep.subr.mxu0 0.0
  %1755 = vmatpush2.msra.mxu0 0.0
  %1756 = vmatprep.subr.mxu0 0.0
  %1757 = vmatpush2.msra.mxu0 0.0
  %1758 = vmatprep.subr.mxu0 0.0
  %1759 = vmatpush2.msra.mxu0 0.0
  %1760 = vmatprep.subr.mxu0 0.0
  %1761 = vmatpush2.msra.mxu0 0.0
  %1762 = vmatprep.subr.mxu0 0.0
  %1763 = vmatpush2.msra.mxu0 0.0
  %1764 = vmatprep.subr.mxu0 0.0
  %1765 = vmatpush2.msra.mxu0 0.0
  %1766 = vmatprep.subr.mxu0 0.0
  %1767 = vmatpush2.msra.mxu0 0.0
  %1768 = vmatprep.subr.mxu0 0.0
  %1769 = vmatpush2.msra.mxu0 0.0
  %1770 = vmatprep.subr.mxu0 0.0
  %1771 = vmatpush2.msra.mxu0 0.0
  %1772 = vmatprep.mubr.f32.mxu0 0.0
  %1773 = vmatmul.mubr.f32.gmra.mxu0 %v1703
  %v1774 = vpop.f32.mrf.mxu0
  %v1775 = vadd.f32 %v1700, %v1774
  %v1776 = vpop.f32.mrf.mxu0
  %1777 = vmatprep.mubr.f32.mxu0 0.0
  %1778 = vmatmul.mubr.f32.gmra.mxu0 %v1706
  %v1779 = vpop.f32.mrf.mxu0
  %v1780 = vadd.f32 %v1700, %v1779
  %v1781 = vpop.f32.mrf.mxu0
  %1782 = vdwg.mxu0
  %1785 = vrot.lane.b32.xlu0 %v1775, 96
  %v1786 = vpop.permute.xlu0 %1785
  %1787 = vrot.lane.b32.xlu0 %v1780, 96
  %v1788 = vpop.permute.xlu0 %1787
  %v1789 = vsel %vm265, %v1775, 0
  %v1791 = vsel %vm265, %v1780, 0
  %v1793 = vsel %vm265, %v1786, 0
  %v1795 = vsel %vm265, %v1788, 0
  %1797 = vmatprep.subr.mxu0 0.0
  %1798 = vmatpush1.xpose.msra.mxu0 0.0
  %1799 = vmatprep.subr.mxu0 0.0
  %1800 = vmatpush1.xpose.msra.mxu0 0.0
  %1801 = vmatprep.subr.mxu0 0.0
  %1802 = vmatpush1.xpose.msra.mxu0 0.0
  %1803 = vmatprep.subr.mxu0 0.0
  %1804 = vmatpush1.xpose.msra.mxu0 0.0
  %1805 = vmatprep.subr.mxu0 0.0
  %1806 = vmatpush1.xpose.msra.mxu0 0.0
  %1807 = vmatprep.subr.mxu0 0.0
  %1808 = vmatpush1.xpose.msra.mxu0 0.0
  %1809 = vmatprep.subr.mxu0 0.0
  %1810 = vmatpush1.xpose.msra.mxu0 0.0
  %1811 = vmatprep.subr.mxu0 0.0
  %1812 = vmatpush1.xpose.msra.mxu0 0.0
  %1813 = vmatprep.subr.mxu0 0.0
  %1814 = vmatpush1.xpose.msra.mxu0 0.0
  %1815 = vmatprep.subr.mxu0 0.0
  %1816 = vmatpush1.xpose.msra.mxu0 0.0
  %1817 = vmatprep.subr.mxu0 0.0
  %1818 = vmatpush1.xpose.msra.mxu0 0.0
  %1819 = vmatprep.subr.mxu0 0.0
  %1820 = vmatpush1.xpose.msra.mxu0 0.0
  %1821 = vmatprep.subr.mxu0 0.0
  %1822 = vmatpush1.xpose.msra.mxu0 0.0
  %1823 = vmatprep.subr.mxu0 0.0
  %1824 = vmatpush1.xpose.msra.mxu0 0.0
  %1825 = vmatprep.subr.mxu0 0.0
  %1826 = vmatpush1.xpose.msra.mxu0 %v1795
  %1827 = vmatprep.subr.mxu0 0.0
  %1828 = vmatpush1.xpose.msra.mxu0 %v1793
  %1829 = vmatprep.subr.mxu0 0.0
  %1830 = vmatpush2.xpose.msra.mxu0 0.0
  %1831 = vmatprep.subr.mxu0 0.0
  %1832 = vmatpush2.xpose.msra.mxu0 0.0
  %1833 = vmatprep.subr.mxu0 0.0
  %1834 = vmatpush2.xpose.msra.mxu0 0.0
  %1835 = vmatprep.subr.mxu0 0.0
  %1836 = vmatpush2.xpose.msra.mxu0 0.0
  %1837 = vmatprep.subr.mxu0 0.0
  %1838 = vmatpush2.xpose.msra.mxu0 0.0
  %1839 = vmatprep.subr.mxu0 0.0
  %1840 = vmatpush2.xpose.msra.mxu0 0.0
  %1841 = vmatprep.subr.mxu0 0.0
  %1842 = vmatpush2.xpose.msra.mxu0 0.0
  %1843 = vmatprep.subr.mxu0 0.0
  %1844 = vmatpush2.xpose.msra.mxu0 0.0
  %1845 = vmatprep.subr.mxu0 0.0
  %1846 = vmatpush2.xpose.msra.mxu0 0.0
  %1847 = vmatprep.subr.mxu0 0.0
  %1848 = vmatpush2.xpose.msra.mxu0 0.0
  %1849 = vmatprep.subr.mxu0 0.0
  %1850 = vmatpush2.xpose.msra.mxu0 0.0
  %1851 = vmatprep.subr.mxu0 0.0
  %1852 = vmatpush2.xpose.msra.mxu0 0.0
  %1853 = vmatprep.subr.mxu0 0.0
  %1854 = vmatpush2.xpose.msra.mxu0 0.0
  %1855 = vmatprep.subr.mxu0 0.0
  %1856 = vmatpush2.xpose.msra.mxu0 0.0
  %1857 = vmatprep.subr.mxu0 0.0
  %1858 = vmatpush2.xpose.msra.mxu0 0.0
  %1859 = vmatprep.subr.mxu0 0.0
  %1860 = vmatpush2.xpose.msra.mxu0 0.0
  %1861 = vmatprep.mubr.f32.mxu0 0.0
  %1862 = vmatmul.mubr.f32.gmra.mxu0 %v1789
  %v1863 = vpop.f32.mrf.mxu0
  %v1864 = vadd.f32 %v159, %v1863
  %v1865 = vpop.f32.mrf.mxu0
  %1866 = vmatprep.mubr.f32.mxu0 0.0
  %1867 = vmatmul.mubr.f32.gmra.mxu0 %v1791
  %v1868 = vpop.f32.mrf.mxu0
  %v1869 = vadd.f32 %v160, %v1868
  %v1870 = vpop.f32.mrf.mxu0
  %1871 = vdwg.mxu0
  %v1872 = vsel %vm349, %v1864, -inf
  %1873 = vmax.xlane.f32.xlu0 %v1872
  %v1874 = vpop.xlane.xlu0 %1873
  %v1875 = vsel %vm349, %v1869, -inf
  %1876 = vmax.xlane.f32.xlu0 %v1875
  %v1877 = vpop.xlane.xlu0 %1876
  %v1878 = vsub.f32 %v1864, %v1874
  %v1879 = vsub.f32 %v1869, %v1877
  %v1880 = vmul.f32 %v1878, 1.442695
  %v1881 = vpow.pop %v1880
  %v1882 = vmul.f32 %v1879, 1.442695
  %v1883 = vpow.pop %v1882
  %v1884 = vsel %vm349, %v1881, 0.0
  %1885 = vadd.xlane.f32.xlu0 %v1884
  %v1886 = vpop.xlane.xlu0 %1885
  %v1887 = vsel %vm349, %v1883, 0.0
  %1888 = vadd.xlane.f32.xlu0 %v1887
  %v1889 = vpop.xlane.xlu0 %1888
  %v1890 = vrcp.pop %v1886
  %v1891 = vrcp.pop %v1889
  %v1892 = vmul.f32 %v1881, %v1890
  %v1893 = vmul.f32 %v1883, %v1891
  %1894 = vrot.lane.b32.xlu0 %v1775, 64
  %v1895 = vpop.permute.xlu0 %1894
  %1896 = vrot.lane.b32.xlu0 %v1780, 64
  %v1897 = vpop.permute.xlu0 %1896
  %v1901 = vsel %vm349, %v1892, 0
  %v1904 = vsel %vm349, %v1893, 0
  %1906 = vmatprep.subr.mxu0 0.0
  %1907 = vmatpush1.msra.mxu0 0.0
  %1908 = vmatprep.subr.mxu0 0.0
  %1909 = vmatpush1.msra.mxu0 0.0
  %1910 = vmatprep.subr.mxu0 0.0
  %1911 = vmatpush1.msra.mxu0 0.0
  %1912 = vmatprep.subr.mxu0 0.0
  %1913 = vmatpush1.msra.mxu0 0.0
  %1914 = vmatprep.subr.mxu0 0.0
  %1915 = vmatpush1.msra.mxu0 0.0
  %1916 = vmatprep.subr.mxu0 0.0
  %1917 = vmatpush1.msra.mxu0 0.0
  %1918 = vmatprep.subr.mxu0 0.0
  %1919 = vmatpush1.msra.mxu0 0.0
  %1920 = vmatprep.subr.mxu0 0.0
  %1921 = vmatpush1.msra.mxu0 0.0
  %1922 = vmatprep.subr.mxu0 0.0
  %1923 = vmatpush1.msra.mxu0 0.0
  %1924 = vmatprep.subr.mxu0 0.0
  %1925 = vmatpush1.msra.mxu0 0.0
  %1926 = vmatprep.subr.mxu0 0.0
  %1927 = vmatpush1.msra.mxu0 0.0
  %1928 = vmatprep.subr.mxu0 0.0
  %1929 = vmatpush1.msra.mxu0 0.0
  %1930 = vmatprep.subr.mxu0 0.0
  %1931 = vmatpush1.msra.mxu0 0.0
  %1932 = vmatprep.subr.mxu0 0.0
  %1933 = vmatpush1.msra.mxu0 0.0
  %1934 = vmatprep.subr.mxu0 0.0
  %1935 = vmatpush1.msra.mxu0 %v1897
  %1936 = vmatprep.subr.mxu0 0.0
  %1937 = vmatpush1.msra.mxu0 %v1895
  %1938 = vmatprep.subr.mxu0 0.0
  %1939 = vmatpush2.msra.mxu0 0.0
  %1940 = vmatprep.subr.mxu0 0.0
  %1941 = vmatpush2.msra.mxu0 0.0
  %1942 = vmatprep.subr.mxu0 0.0
  %1943 = vmatpush2.msra.mxu0 0.0
  %1944 = vmatprep.subr.mxu0 0.0
  %1945 = vmatpush2.msra.mxu0 0.0
  %1946 = vmatprep.subr.mxu0 0.0
  %1947 = vmatpush2.msra.mxu0 0.0
  %1948 = vmatprep.subr.mxu0 0.0
  %1949 = vmatpush2.msra.mxu0 0.0
  %1950 = vmatprep.subr.mxu0 0.0
  %1951 = vmatpush2.msra.mxu0 0.0
  %1952 = vmatprep.subr.mxu0 0.0
  %1953 = vmatpush2.msra.mxu0 0.0
  %1954 = vmatprep.subr.mxu0 0.0
  %1955 = vmatpush2.msra.mxu0 0.0
  %1956 = vmatprep.subr.mxu0 0.0
  %1957 = vmatpush2.msra.mxu0 0.0
  %1958 = vmatprep.subr.mxu0 0.0
  %1959 = vmatpush2.msra.mxu0 0.0
  %1960 = vmatprep.subr.mxu0 0.0
  %1961 = vmatpush2.msra.mxu0 0.0
  %1962 = vmatprep.subr.mxu0 0.0
  %1963 = vmatpush2.msra.mxu0 0.0
  %1964 = vmatprep.subr.mxu0 0.0
  %1965 = vmatpush2.msra.mxu0 0.0
  %1966 = vmatprep.subr.mxu0 0.0
  %1967 = vmatpush2.msra.mxu0 0.0
  %1968 = vmatprep.subr.mxu0 0.0
  %1969 = vmatpush2.msra.mxu0 0.0
  %1970 = vmatprep.mubr.f32.mxu0 0.0
  %1971 = vmatmul.mubr.f32.gmra.mxu0 %v1901
  %v1972 = vpop.f32.mrf.mxu0
  %v1973 = vadd.f32 0.0, %v1972
  %v1974 = vpop.f32.mrf.mxu0
  %1975 = vmatprep.mubr.f32.mxu0 0.0
  %1976 = vmatmul.mubr.f32.gmra.mxu0 %v1904
  %v1977 = vpop.f32.mrf.mxu0
  %v1978 = vadd.f32 0.0, %v1977
  %v1979 = vpop.f32.mrf.mxu0
  %1980 = vdwg.mxu0
  %v1982 = vsel %vm265, %v1973, 0
  %v1985 = vsel %vm265, %v1978, 0
  %1987 = vmatprep.subr.mxu0 0.0
  %1988 = vmatpush1.msra.mxu0 0.0
  %1989 = vmatprep.subr.mxu0 0.0
  %1990 = vmatpush1.msra.mxu0 0.0
  %1991 = vmatprep.subr.mxu0 0.0
  %1992 = vmatpush1.msra.mxu0 0.0
  %1993 = vmatprep.subr.mxu0 0.0
  %1994 = vmatpush1.msra.mxu0 0.0
  %1995 = vmatprep.subr.mxu0 0.0
  %1996 = vmatpush1.msra.mxu0 0.0
  %1997 = vmatprep.subr.mxu0 0.0
  %1998 = vmatpush1.msra.mxu0 0.0
  %1999 = vmatprep.subr.mxu0 0.0
  %2000 = vmatpush1.msra.mxu0 0.0
  %2001 = vmatprep.subr.mxu0 0.0
  %2002 = vmatpush1.msra.mxu0 0.0
  %2003 = vmatprep.subr.mxu0 0.0
  %2004 = vmatpush1.msra.mxu0 0.0
  %2005 = vmatprep.subr.mxu0 0.0
  %2006 = vmatpush1.msra.mxu0 0.0
  %2007 = vmatprep.subr.mxu0 0.0
  %2008 = vmatpush1.msra.mxu0 0.0
  %2009 = vmatprep.subr.mxu0 0.0
  %2010 = vmatpush1.msra.mxu0 0.0
  %2011 = vmatprep.subr.mxu0 0.0
  %2012 = vmatpush1.msra.mxu0 0.0
  %2013 = vmatprep.subr.mxu0 0.0
  %2014 = vmatpush1.msra.mxu0 0.0
  %2015 = vmatprep.subr.mxu0 0.0
  %2016 = vmatpush1.msra.mxu0 0.0
  %2017 = vmatprep.subr.mxu0 0.0
  %2018 = vmatpush1.msra.mxu0 %v1690
  %2019 = vmatprep.subr.mxu0 0.0
  %2020 = vmatpush2.msra.mxu0 0.0
  %2021 = vmatprep.subr.mxu0 0.0
  %2022 = vmatpush2.msra.mxu0 0.0
  %2023 = vmatprep.subr.mxu0 0.0
  %2024 = vmatpush2.msra.mxu0 0.0
  %2025 = vmatprep.subr.mxu0 0.0
  %2026 = vmatpush2.msra.mxu0 0.0
  %2027 = vmatprep.subr.mxu0 0.0
  %2028 = vmatpush2.msra.mxu0 0.0
  %2029 = vmatprep.subr.mxu0 0.0
  %2030 = vmatpush2.msra.mxu0 0.0
  %2031 = vmatprep.subr.mxu0 0.0
  %2032 = vmatpush2.msra.mxu0 0.0
  %2033 = vmatprep.subr.mxu0 0.0
  %2034 = vmatpush2.msra.mxu0 0.0
  %2035 = vmatprep.subr.mxu0 0.0
  %2036 = vmatpush2.msra.mxu0 0.0
  %2037 = vmatprep.subr.mxu0 0.0
  %2038 = vmatpush2.msra.mxu0 0.0
  %2039 = vmatprep.subr.mxu0 0.0
  %2040 = vmatpush2.msra.mxu0 0.0
  %2041 = vmatprep.subr.mxu0 0.0
  %2042 = vmatpush2.msra.mxu0 0.0
  %2043 = vmatprep.subr.mxu0 0.0
  %2044 = vmatpush2.msra.mxu0 0.0
  %2045 = vmatprep.subr.mxu0 0.0
  %2046 = vmatpush2.msra.mxu0 0.0
  %2047 = vmatprep.subr.mxu0 0.0
  %2048 = vmatpush2.msra.mxu0 0.0
  %2049 = vmatprep.subr.mxu0 0.0
  %2050 = vmatpush2.msra.mxu0 0.0
  %2051 = vmatprep.mubr.f32.mxu0 0.0
  %2052 = vmatmul.mubr.f32.gmra.mxu0 %v1982
  %v2053 = vpop.f32.mrf.mxu0
  %v2054 = vadd.f32 0.0, %v2053
  %v2055 = vpop.f32.mrf.mxu0
  %2056 = vmatprep.mubr.f32.mxu0 0.0
  %2057 = vmatmul.mubr.f32.gmra.mxu0 %v1985
  %v2058 = vpop.f32.mrf.mxu0
  %v2059 = vadd.f32 0.0, %v2058
  %v2060 = vpop.f32.mrf.mxu0
  %2061 = vdwg.mxu0
  %v2063 = vlaneseq
  %v2064 = vshrl.u32 %v2063, 7
  %v2065 = vsub.s32 0, %v2064
  %v2066 = vrot.slane %v1695, %v2065
  %v2068 = vadd.f32 %v2066, %v2054
  %v2069 = vadd.f32 %v2066, %v2059
  %2070 = vrot.lane.b32.xlu0 %v1775, 120
  %v2071 = vpop.permute.xlu0 %2070
  %2072 = vrot.lane.b32.xlu0 %v1780, 120
  %v2073 = vpop.permute.xlu0 %2072
  %2074 = vrot.lane.b32.xlu0 %v1775, 88
  %v2075 = vpop.permute.xlu0 %2074
  %2076 = vrot.lane.b32.xlu0 %v1780, 88
  %v2077 = vpop.permute.xlu0 %2076
  %v2078 = vsel %vm265, %v2071, 0
  %v2080 = vsel %vm265, %v2073, 0
  %v2082 = vsel %vm265, %v2075, 0
  %v2084 = vsel %vm265, %v2077, 0
  %2086 = vmatprep.subr.mxu0 0.0
  %2087 = vmatpush1.xpose.msra.mxu0 0.0
  %2088 = vmatprep.subr.mxu0 0.0
  %2089 = vmatpush1.xpose.msra.mxu0 0.0
  %2090 = vmatprep.subr.mxu0 0.0
  %2091 = vmatpush1.xpose.msra.mxu0 0.0
  %2092 = vmatprep.subr.mxu0 0.0
  %2093 = vmatpush1.xpose.msra.mxu0 0.0
  %2094 = vmatprep.subr.mxu0 0.0
  %2095 = vmatpush1.xpose.msra.mxu0 0.0
  %2096 = vmatprep.subr.mxu0 0.0
  %2097 = vmatpush1.xpose.msra.mxu0 0.0
  %2098 = vmatprep.subr.mxu0 0.0
  %2099 = vmatpush1.xpose.msra.mxu0 0.0
  %2100 = vmatprep.subr.mxu0 0.0
  %2101 = vmatpush1.xpose.msra.mxu0 0.0
  %2102 = vmatprep.subr.mxu0 0.0
  %2103 = vmatpush1.xpose.msra.mxu0 0.0
  %2104 = vmatprep.subr.mxu0 0.0
  %2105 = vmatpush1.xpose.msra.mxu0 0.0
  %2106 = vmatprep.subr.mxu0 0.0
  %2107 = vmatpush1.xpose.msra.mxu0 0.0
  %2108 = vmatprep.subr.mxu0 0.0
  %2109 = vmatpush1.xpose.msra.mxu0 0.0
  %2110 = vmatprep.subr.mxu0 0.0
  %2111 = vmatpush1.xpose.msra.mxu0 0.0
  %2112 = vmatprep.subr.mxu0 0.0
  %2113 = vmatpush1.xpose.msra.mxu0 0.0
  %2114 = vmatprep.subr.mxu0 0.0
  %2115 = vmatpush1.xpose.msra.mxu0 %v2084
  %2116 = vmatprep.subr.mxu0 0.0
  %2117 = vmatpush1.xpose.msra.mxu0 %v2082
  %2118 = vmatprep.subr.mxu0 0.0
  %2119 = vmatpush2.xpose.msra.mxu0 0.0
  %2120 = vmatprep.subr.mxu0 0.0
  %2121 = vmatpush2.xpose.msra.mxu0 0.0
  %2122 = vmatprep.subr.mxu0 0.0
  %2123 = vmatpush2.xpose.msra.mxu0 0.0
  %2124 = vmatprep.subr.mxu0 0.0
  %2125 = vmatpush2.xpose.msra.mxu0 0.0
  %2126 = vmatprep.subr.mxu0 0.0
  %2127 = vmatpush2.xpose.msra.mxu0 0.0
  %2128 = vmatprep.subr.mxu0 0.0
  %2129 = vmatpush2.xpose.msra.mxu0 0.0
  %2130 = vmatprep.subr.mxu0 0.0
  %2131 = vmatpush2.xpose.msra.mxu0 0.0
  %2132 = vmatprep.subr.mxu0 0.0
  %2133 = vmatpush2.xpose.msra.mxu0 0.0
  %2134 = vmatprep.subr.mxu0 0.0
  %2135 = vmatpush2.xpose.msra.mxu0 0.0
  %2136 = vmatprep.subr.mxu0 0.0
  %2137 = vmatpush2.xpose.msra.mxu0 0.0
  %2138 = vmatprep.subr.mxu0 0.0
  %2139 = vmatpush2.xpose.msra.mxu0 0.0
  %2140 = vmatprep.subr.mxu0 0.0
  %2141 = vmatpush2.xpose.msra.mxu0 0.0
  %2142 = vmatprep.subr.mxu0 0.0
  %2143 = vmatpush2.xpose.msra.mxu0 0.0
  %2144 = vmatprep.subr.mxu0 0.0
  %2145 = vmatpush2.xpose.msra.mxu0 0.0
  %2146 = vmatprep.subr.mxu0 0.0
  %2147 = vmatpush2.xpose.msra.mxu0 0.0
  %2148 = vmatprep.subr.mxu0 0.0
  %2149 = vmatpush2.xpose.msra.mxu0 0.0
  %2150 = vmatprep.mubr.f32.mxu0 0.0
  %2151 = vmatmul.mubr.f32.gmra.mxu0 %v2078
  %v2152 = vpop.f32.mrf.mxu0
  %v2153 = vadd.f32 %v159, %v2152
  %v2154 = vpop.f32.mrf.mxu0
  %2155 = vmatprep.mubr.f32.mxu0 0.0
  %2156 = vmatmul.mubr.f32.gmra.mxu0 %v2080
  %v2157 = vpop.f32.mrf.mxu0
  %v2158 = vadd.f32 %v160, %v2157
  %v2159 = vpop.f32.mrf.mxu0
  %2160 = vdwg.mxu0
  %v2161 = vsel %vm349, %v2153, -inf
  %2162 = vmax.xlane.f32.xlu0 %v2161
  %v2163 = vpop.xlane.xlu0 %2162
  %v2164 = vsel %vm349, %v2158, -inf
  %2165 = vmax.xlane.f32.xlu0 %v2164
  %v2166 = vpop.xlane.xlu0 %2165
  %v2167 = vsub.f32 %v2153, %v2163
  %v2168 = vsub.f32 %v2158, %v2166
  %v2169 = vmul.f32 %v2167, 1.442695
  %v2170 = vpow.pop %v2169
  %v2171 = vmul.f32 %v2168, 1.442695
  %v2172 = vpow.pop %v2171
  %v2173 = vsel %vm349, %v2170, 0.0
  %2174 = vadd.xlane.f32.xlu0 %v2173
  %v2175 = vpop.xlane.xlu0 %2174
  %v2176 = vsel %vm349, %v2172, 0.0
  %2177 = vadd.xlane.f32.xlu0 %v2176
  %v2178 = vpop.xlane.xlu0 %2177
  %v2179 = vrcp.pop %v2175
  %v2180 = vrcp.pop %v2178
  %v2181 = vmul.f32 %v2170, %v2179
  %v2182 = vmul.f32 %v2172, %v2180
  %2183 = vrot.lane.b32.xlu0 %v1775, 56
  %v2184 = vpop.permute.xlu0 %2183
  %2185 = vrot.lane.b32.xlu0 %v1780, 56
  %v2186 = vpop.permute.xlu0 %2185
  %v2190 = vsel %vm349, %v2181, 0
  %v2193 = vsel %vm349, %v2182, 0
  %2195 = vmatprep.subr.mxu0 0.0
  %2196 = vmatpush1.msra.mxu0 0.0
  %2197 = vmatprep.subr.mxu0 0.0
  %2198 = vmatpush1.msra.mxu0 0.0
  %2199 = vmatprep.subr.mxu0 0.0
  %2200 = vmatpush1.msra.mxu0 0.0
  %2201 = vmatprep.subr.mxu0 0.0
  %2202 = vmatpush1.msra.mxu0 0.0
  %2203 = vmatprep.subr.mxu0 0.0
  %2204 = vmatpush1.msra.mxu0 0.0
  %2205 = vmatprep.subr.mxu0 0.0
  %2206 = vmatpush1.msra.mxu0 0.0
  %2207 = vmatprep.subr.mxu0 0.0
  %2208 = vmatpush1.msra.mxu0 0.0
  %2209 = vmatprep.subr.mxu0 0.0
  %2210 = vmatpush1.msra.mxu0 0.0
  %2211 = vmatprep.subr.mxu0 0.0
  %2212 = vmatpush1.msra.mxu0 0.0
  %2213 = vmatprep.subr.mxu0 0.0
  %2214 = vmatpush1.msra.mxu0 0.0
  %2215 = vmatprep.subr.mxu0 0.0
  %2216 = vmatpush1.msra.mxu0 0.0
  %2217 = vmatprep.subr.mxu0 0.0
  %2218 = vmatpush1.msra.mxu0 0.0
  %2219 = vmatprep.subr.mxu0 0.0
  %2220 = vmatpush1.msra.mxu0 0.0
  %2221 = vmatprep.subr.mxu0 0.0
  %2222 = vmatpush1.msra.mxu0 0.0
  %2223 = vmatprep.subr.mxu0 0.0
  %2224 = vmatpush1.msra.mxu0 %v2186
  %2225 = vmatprep.subr.mxu0 0.0
  %2226 = vmatpush1.msra.mxu0 %v2184
  %2227 = vmatprep.subr.mxu0 0.0
  %2228 = vmatpush2.msra.mxu0 0.0
  %2229 = vmatprep.subr.mxu0 0.0
  %2230 = vmatpush2.msra.mxu0 0.0
  %2231 = vmatprep.subr.mxu0 0.0
  %2232 = vmatpush2.msra.mxu0 0.0
  %2233 = vmatprep.subr.mxu0 0.0
  %2234 = vmatpush2.msra.mxu0 0.0
  %2235 = vmatprep.subr.mxu0 0.0
  %2236 = vmatpush2.msra.mxu0 0.0
  %2237 = vmatprep.subr.mxu0 0.0
  %2238 = vmatpush2.msra.mxu0 0.0
  %2239 = vmatprep.subr.mxu0 0.0
  %2240 = vmatpush2.msra.mxu0 0.0
  %2241 = vmatprep.subr.mxu0 0.0
  %2242 = vmatpush2.msra.mxu0 0.0
  %2243 = vmatprep.subr.mxu0 0.0
  %2244 = vmatpush2.msra.mxu0 0.0
  %2245 = vmatprep.subr.mxu0 0.0
  %2246 = vmatpush2.msra.mxu0 0.0
  %2247 = vmatprep.subr.mxu0 0.0
  %2248 = vmatpush2.msra.mxu0 0.0
  %2249 = vmatprep.subr.mxu0 0.0
  %2250 = vmatpush2.msra.mxu0 0.0
  %2251 = vmatprep.subr.mxu0 0.0
  %2252 = vmatpush2.msra.mxu0 0.0
  %2253 = vmatprep.subr.mxu0 0.0
  %2254 = vmatpush2.msra.mxu0 0.0
  %2255 = vmatprep.subr.mxu0 0.0
  %2256 = vmatpush2.msra.mxu0 0.0
  %2257 = vmatprep.subr.mxu0 0.0
  %2258 = vmatpush2.msra.mxu0 0.0
  %2259 = vmatprep.mubr.f32.mxu0 0.0
  %2260 = vmatmul.mubr.f32.gmra.mxu0 %v2190
  %v2261 = vpop.f32.mrf.mxu0
  %v2262 = vadd.f32 0.0, %v2261
  %v2263 = vpop.f32.mrf.mxu0
  %2264 = vmatprep.mubr.f32.mxu0 0.0
  %2265 = vmatmul.mubr.f32.gmra.mxu0 %v2193
  %v2266 = vpop.f32.mrf.mxu0
  %v2267 = vadd.f32 0.0, %v2266
  %v2268 = vpop.f32.mrf.mxu0
  %2269 = vdwg.mxu0
  %v2271 = vsel %vm265, %v2262, 0
  %v2274 = vsel %vm265, %v2267, 0
  %2276 = vmatprep.subr.mxu0 0.0
  %2277 = vmatpush1.msra.mxu0 0.0
  %2278 = vmatprep.subr.mxu0 0.0
  %2279 = vmatpush1.msra.mxu0 0.0
  %2280 = vmatprep.subr.mxu0 0.0
  %2281 = vmatpush1.msra.mxu0 0.0
  %2282 = vmatprep.subr.mxu0 0.0
  %2283 = vmatpush1.msra.mxu0 0.0
  %2284 = vmatprep.subr.mxu0 0.0
  %2285 = vmatpush1.msra.mxu0 0.0
  %2286 = vmatprep.subr.mxu0 0.0
  %2287 = vmatpush1.msra.mxu0 0.0
  %2288 = vmatprep.subr.mxu0 0.0
  %2289 = vmatpush1.msra.mxu0 0.0
  %2290 = vmatprep.subr.mxu0 0.0
  %2291 = vmatpush1.msra.mxu0 0.0
  %2292 = vmatprep.subr.mxu0 0.0
  %2293 = vmatpush1.msra.mxu0 0.0
  %2294 = vmatprep.subr.mxu0 0.0
  %2295 = vmatpush1.msra.mxu0 0.0
  %2296 = vmatprep.subr.mxu0 0.0
  %2297 = vmatpush1.msra.mxu0 0.0
  %2298 = vmatprep.subr.mxu0 0.0
  %2299 = vmatpush1.msra.mxu0 0.0
  %2300 = vmatprep.subr.mxu0 0.0
  %2301 = vmatpush1.msra.mxu0 0.0
  %2302 = vmatprep.subr.mxu0 0.0
  %2303 = vmatpush1.msra.mxu0 0.0
  %2304 = vmatprep.subr.mxu0 0.0
  %2305 = vmatpush1.msra.mxu0 0.0
  %2306 = vmatprep.subr.mxu0 0.0
  %2307 = vmatpush1.msra.mxu0 %v1691
  %2308 = vmatprep.subr.mxu0 0.0
  %2309 = vmatpush2.msra.mxu0 0.0
  %2310 = vmatprep.subr.mxu0 0.0
  %2311 = vmatpush2.msra.mxu0 0.0
  %2312 = vmatprep.subr.mxu0 0.0
  %2313 = vmatpush2.msra.mxu0 0.0
  %2314 = vmatprep.subr.mxu0 0.0
  %2315 = vmatpush2.msra.mxu0 0.0
  %2316 = vmatprep.subr.mxu0 0.0
  %2317 = vmatpush2.msra.mxu0 0.0
  %2318 = vmatprep.subr.mxu0 0.0
  %2319 = vmatpush2.msra.mxu0 0.0
  %2320 = vmatprep.subr.mxu0 0.0
  %2321 = vmatpush2.msra.mxu0 0.0
  %2322 = vmatprep.subr.mxu0 0.0
  %2323 = vmatpush2.msra.mxu0 0.0
  %2324 = vmatprep.subr.mxu0 0.0
  %2325 = vmatpush2.msra.mxu0 0.0
  %2326 = vmatprep.subr.mxu0 0.0
  %2327 = vmatpush2.msra.mxu0 0.0
  %2328 = vmatprep.subr.mxu0 0.0
  %2329 = vmatpush2.msra.mxu0 0.0
  %2330 = vmatprep.subr.mxu0 0.0
  %2331 = vmatpush2.msra.mxu0 0.0
  %2332 = vmatprep.subr.mxu0 0.0
  %2333 = vmatpush2.msra.mxu0 0.0
  %2334 = vmatprep.subr.mxu0 0.0
  %2335 = vmatpush2.msra.mxu0 0.0
  %2336 = vmatprep.subr.mxu0 0.0
  %2337 = vmatpush2.msra.mxu0 0.0
  %2338 = vmatprep.subr.mxu0 0.0
  %2339 = vmatpush2.msra.mxu0 0.0
  %2340 = vmatprep.mubr.f32.mxu0 0.0
  %2341 = vmatmul.mubr.f32.gmra.mxu0 %v2271
  %v2342 = vpop.f32.mrf.mxu0
  %v2343 = vadd.f32 0.0, %v2342
  %v2344 = vpop.f32.mrf.mxu0
  %2345 = vmatprep.mubr.f32.mxu0 0.0
  %2346 = vmatmul.mubr.f32.gmra.mxu0 %v2274
  %v2347 = vpop.f32.mrf.mxu0
  %v2348 = vadd.f32 0.0, %v2347
  %v2349 = vpop.f32.mrf.mxu0
  %2350 = vdwg.mxu0
  %v2351 = vadd.f32 %v2068, %v2343
  %v2352 = vadd.f32 %v2069, %v2348
  %2353 = vrot.lane.b32.xlu0 %v1775, 112
  %v2354 = vpop.permute.xlu0 %2353
  %2355 = vrot.lane.b32.xlu0 %v1780, 112
  %v2356 = vpop.permute.xlu0 %2355
  %2357 = vrot.lane.b32.xlu0 %v1775, 80
  %v2358 = vpop.permute.xlu0 %2357
  %2359 = vrot.lane.b32.xlu0 %v1780, 80
  %v2360 = vpop.permute.xlu0 %2359
  %v2361 = vsel %vm265, %v2354, 0
  %v2363 = vsel %vm265, %v2356, 0
  %v2365 = vsel %vm265, %v2358, 0
  %v2367 = vsel %vm265, %v2360, 0
  %2369 = vmatprep.subr.mxu0 0.0
  %2370 = vmatpush1.xpose.msra.mxu0 0.0
  %2371 = vmatprep.subr.mxu0 0.0
  %2372 = vmatpush1.xpose.msra.mxu0 0.0
  %2373 = vmatprep.subr.mxu0 0.0
  %2374 = vmatpush1.xpose.msra.mxu0 0.0
  %2375 = vmatprep.subr.mxu0 0.0
  %2376 = vmatpush1.xpose.msra.mxu0 0.0
  %2377 = vmatprep.subr.mxu0 0.0
  %2378 = vmatpush1.xpose.msra.mxu0 0.0
  %2379 = vmatprep.subr.mxu0 0.0
  %2380 = vmatpush1.xpose.msra.mxu0 0.0
  %2381 = vmatprep.subr.mxu0 0.0
  %2382 = vmatpush1.xpose.msra.mxu0 0.0
  %2383 = vmatprep.subr.mxu0 0.0
  %2384 = vmatpush1.xpose.msra.mxu0 0.0
  %2385 = vmatprep.subr.mxu0 0.0
  %2386 = vmatpush1.xpose.msra.mxu0 0.0
  %2387 = vmatprep.subr.mxu0 0.0
  %2388 = vmatpush1.xpose.msra.mxu0 0.0
  %2389 = vmatprep.subr.mxu0 0.0
  %2390 = vmatpush1.xpose.msra.mxu0 0.0
  %2391 = vmatprep.subr.mxu0 0.0
  %2392 = vmatpush1.xpose.msra.mxu0 0.0
  %2393 = vmatprep.subr.mxu0 0.0
  %2394 = vmatpush1.xpose.msra.mxu0 0.0
  %2395 = vmatprep.subr.mxu0 0.0
  %2396 = vmatpush1.xpose.msra.mxu0 0.0
  %2397 = vmatprep.subr.mxu0 0.0
  %2398 = vmatpush1.xpose.msra.mxu0 %v2367
  %2399 = vmatprep.subr.mxu0 0.0
  %2400 = vmatpush1.xpose.msra.mxu0 %v2365
  %2401 = vmatprep.subr.mxu0 0.0
  %2402 = vmatpush2.xpose.msra.mxu0 0.0
  %2403 = vmatprep.subr.mxu0 0.0
  %2404 = vmatpush2.xpose.msra.mxu0 0.0
  %2405 = vmatprep.subr.mxu0 0.0
  %2406 = vmatpush2.xpose.msra.mxu0 0.0
  %2407 = vmatprep.subr.mxu0 0.0
  %2408 = vmatpush2.xpose.msra.mxu0 0.0
  %2409 = vmatprep.subr.mxu0 0.0
  %2410 = vmatpush2.xpose.msra.mxu0 0.0
  %2411 = vmatprep.subr.mxu0 0.0
  %2412 = vmatpush2.xpose.msra.mxu0 0.0
  %2413 = vmatprep.subr.mxu0 0.0
  %2414 = vmatpush2.xpose.msra.mxu0 0.0
  %2415 = vmatprep.subr.mxu0 0.0
  %2416 = vmatpush2.xpose.msra.mxu0 0.0
  %2417 = vmatprep.subr.mxu0 0.0
  %2418 = vmatpush2.xpose.msra.mxu0 0.0
  %2419 = vmatprep.subr.mxu0 0.0
  %2420 = vmatpush2.xpose.msra.mxu0 0.0
  %2421 = vmatprep.subr.mxu0 0.0
  %2422 = vmatpush2.xpose.msra.mxu0 0.0
  %2423 = vmatprep.subr.mxu0 0.0
  %2424 = vmatpush2.xpose.msra.mxu0 0.0
  %2425 = vmatprep.subr.mxu0 0.0
  %2426 = vmatpush2.xpose.msra.mxu0 0.0
  %2427 = vmatprep.subr.mxu0 0.0
  %2428 = vmatpush2.xpose.msra.mxu0 0.0
  %2429 = vmatprep.subr.mxu0 0.0
  %2430 = vmatpush2.xpose.msra.mxu0 0.0
  %2431 = vmatprep.subr.mxu0 0.0
  %2432 = vmatpush2.xpose.msra.mxu0 0.0
  %2433 = vmatprep.mubr.f32.mxu0 0.0
  %2434 = vmatmul.mubr.f32.gmra.mxu0 %v2361
  %v2435 = vpop.f32.mrf.mxu0
  %v2436 = vadd.f32 %v159, %v2435
  %v2437 = vpop.f32.mrf.mxu0
  %2438 = vmatprep.mubr.f32.mxu0 0.0
  %2439 = vmatmul.mubr.f32.gmra.mxu0 %v2363
  %v2440 = vpop.f32.mrf.mxu0
  %v2441 = vadd.f32 %v160, %v2440
  %v2442 = vpop.f32.mrf.mxu0
  %2443 = vdwg.mxu0
  %v2444 = vsel %vm349, %v2436, -inf
  %2445 = vmax.xlane.f32.xlu0 %v2444
  %v2446 = vpop.xlane.xlu0 %2445
  %v2447 = vsel %vm349, %v2441, -inf
  %2448 = vmax.xlane.f32.xlu0 %v2447
  %v2449 = vpop.xlane.xlu0 %2448
  %v2450 = vsub.f32 %v2436, %v2446
  %v2451 = vsub.f32 %v2441, %v2449
  %v2452 = vmul.f32 %v2450, 1.442695
  %v2453 = vpow.pop %v2452
  %v2454 = vmul.f32 %v2451, 1.442695
  %v2455 = vpow.pop %v2454
  %v2456 = vsel %vm349, %v2453, 0.0
  %2457 = vadd.xlane.f32.xlu0 %v2456
  %v2458 = vpop.xlane.xlu0 %2457
  %v2459 = vsel %vm349, %v2455, 0.0
  %2460 = vadd.xlane.f32.xlu0 %v2459
  %v2461 = vpop.xlane.xlu0 %2460
  %v2462 = vrcp.pop %v2458
  %v2463 = vrcp.pop %v2461
  %v2464 = vmul.f32 %v2453, %v2462
  %v2465 = vmul.f32 %v2455, %v2463
  %2466 = vrot.lane.b32.xlu0 %v1775, 48
  %v2467 = vpop.permute.xlu0 %2466
  %2468 = vrot.lane.b32.xlu0 %v1780, 48
  %v2469 = vpop.permute.xlu0 %2468
  %v2473 = vsel %vm349, %v2464, 0
  %v2476 = vsel %vm349, %v2465, 0
  %2478 = vmatprep.subr.mxu0 0.0
  %2479 = vmatpush1.msra.mxu0 0.0
  %2480 = vmatprep.subr.mxu0 0.0
  %2481 = vmatpush1.msra.mxu0 0.0
  %2482 = vmatprep.subr.mxu0 0.0
  %2483 = vmatpush1.msra.mxu0 0.0
  %2484 = vmatprep.subr.mxu0 0.0
  %2485 = vmatpush1.msra.mxu0 0.0
  %2486 = vmatprep.subr.mxu0 0.0
  %2487 = vmatpush1.msra.mxu0 0.0
  %2488 = vmatprep.subr.mxu0 0.0
  %2489 = vmatpush1.msra.mxu0 0.0
  %2490 = vmatprep.subr.mxu0 0.0
  %2491 = vmatpush1.msra.mxu0 0.0
  %2492 = vmatprep.subr.mxu0 0.0
  %2493 = vmatpush1.msra.mxu0 0.0
  %2494 = vmatprep.subr.mxu0 0.0
  %2495 = vmatpush1.msra.mxu0 0.0
  %2496 = vmatprep.subr.mxu0 0.0
  %2497 = vmatpush1.msra.mxu0 0.0
  %2498 = vmatprep.subr.mxu0 0.0
  %2499 = vmatpush1.msra.mxu0 0.0
  %2500 = vmatprep.subr.mxu0 0.0
  %2501 = vmatpush1.msra.mxu0 0.0
  %2502 = vmatprep.subr.mxu0 0.0
  %2503 = vmatpush1.msra.mxu0 0.0
  %2504 = vmatprep.subr.mxu0 0.0
  %2505 = vmatpush1.msra.mxu0 0.0
  %2506 = vmatprep.subr.mxu0 0.0
  %2507 = vmatpush1.msra.mxu0 %v2469
  %2508 = vmatprep.subr.mxu0 0.0
  %2509 = vmatpush1.msra.mxu0 %v2467
  %2510 = vmatprep.subr.mxu0 0.0
  %2511 = vmatpush2.msra.mxu0 0.0
  %2512 = vmatprep.subr.mxu0 0.0
  %2513 = vmatpush2.msra.mxu0 0.0
  %2514 = vmatprep.subr.mxu0 0.0
  %2515 = vmatpush2.msra.mxu0 0.0
  %2516 = vmatprep.subr.mxu0 0.0
  %2517 = vmatpush2.msra.mxu0 0.0
  %2518 = vmatprep.subr.mxu0 0.0
  %2519 = vmatpush2.msra.mxu0 0.0
  %2520 = vmatprep.subr.mxu0 0.0
  %2521 = vmatpush2.msra.mxu0 0.0
  %2522 = vmatprep.subr.mxu0 0.0
  %2523 = vmatpush2.msra.mxu0 0.0
  %2524 = vmatprep.subr.mxu0 0.0
  %2525 = vmatpush2.msra.mxu0 0.0
  %2526 = vmatprep.subr.mxu0 0.0
  %2527 = vmatpush2.msra.mxu0 0.0
  %2528 = vmatprep.subr.mxu0 0.0
  %2529 = vmatpush2.msra.mxu0 0.0
  %2530 = vmatprep.subr.mxu0 0.0
  %2531 = vmatpush2.msra.mxu0 0.0
  %2532 = vmatprep.subr.mxu0 0.0
  %2533 = vmatpush2.msra.mxu0 0.0
  %2534 = vmatprep.subr.mxu0 0.0
  %2535 = vmatpush2.msra.mxu0 0.0
  %2536 = vmatprep.subr.mxu0 0.0
  %2537 = vmatpush2.msra.mxu0 0.0
  %2538 = vmatprep.subr.mxu0 0.0
  %2539 = vmatpush2.msra.mxu0 0.0
  %2540 = vmatprep.subr.mxu0 0.0
  %2541 = vmatpush2.msra.mxu0 0.0
  %2542 = vmatprep.mubr.f32.mxu0 0.0
  %2543 = vmatmul.mubr.f32.gmra.mxu0 %v2473
  %v2544 = vpop.f32.mrf.mxu0
  %v2545 = vadd.f32 0.0, %v2544
  %v2546 = vpop.f32.mrf.mxu0
  %2547 = vmatprep.mubr.f32.mxu0 0.0
  %2548 = vmatmul.mubr.f32.gmra.mxu0 %v2476
  %v2549 = vpop.f32.mrf.mxu0
  %v2550 = vadd.f32 0.0, %v2549
  %v2551 = vpop.f32.mrf.mxu0
  %2552 = vdwg.mxu0
  %v2554 = vsel %vm265, %v2545, 0
  %v2557 = vsel %vm265, %v2550, 0
  %2559 = vmatprep.subr.mxu0 0.0
  %2560 = vmatpush1.msra.mxu0 0.0
  %2561 = vmatprep.subr.mxu0 0.0
  %2562 = vmatpush1.msra.mxu0 0.0
  %2563 = vmatprep.subr.mxu0 0.0
  %2564 = vmatpush1.msra.mxu0 0.0
  %2565 = vmatprep.subr.mxu0 0.0
  %2566 = vmatpush1.msra.mxu0 0.0
  %2567 = vmatprep.subr.mxu0 0.0
  %2568 = vmatpush1.msra.mxu0 0.0
  %2569 = vmatprep.subr.mxu0 0.0
  %2570 = vmatpush1.msra.mxu0 0.0
  %2571 = vmatprep.subr.mxu0 0.0
  %2572 = vmatpush1.msra.mxu0 0.0
  %2573 = vmatprep.subr.mxu0 0.0
  %2574 = vmatpush1.msra.mxu0 0.0
  %2575 = vmatprep.subr.mxu0 0.0
  %2576 = vmatpush1.msra.mxu0 0.0
  %2577 = vmatprep.subr.mxu0 0.0
  %2578 = vmatpush1.msra.mxu0 0.0
  %2579 = vmatprep.subr.mxu0 0.0
  %2580 = vmatpush1.msra.mxu0 0.0
  %2581 = vmatprep.subr.mxu0 0.0
  %2582 = vmatpush1.msra.mxu0 0.0
  %2583 = vmatprep.subr.mxu0 0.0
  %2584 = vmatpush1.msra.mxu0 0.0
  %2585 = vmatprep.subr.mxu0 0.0
  %2586 = vmatpush1.msra.mxu0 0.0
  %2587 = vmatprep.subr.mxu0 0.0
  %2588 = vmatpush1.msra.mxu0 0.0
  %2589 = vmatprep.subr.mxu0 0.0
  %2590 = vmatpush1.msra.mxu0 %v1692
  %2591 = vmatprep.subr.mxu0 0.0
  %2592 = vmatpush2.msra.mxu0 0.0
  %2593 = vmatprep.subr.mxu0 0.0
  %2594 = vmatpush2.msra.mxu0 0.0
  %2595 = vmatprep.subr.mxu0 0.0
  %2596 = vmatpush2.msra.mxu0 0.0
  %2597 = vmatprep.subr.mxu0 0.0
  %2598 = vmatpush2.msra.mxu0 0.0
  %2599 = vmatprep.subr.mxu0 0.0
  %2600 = vmatpush2.msra.mxu0 0.0
  %2601 = vmatprep.subr.mxu0 0.0
  %2602 = vmatpush2.msra.mxu0 0.0
  %2603 = vmatprep.subr.mxu0 0.0
  %2604 = vmatpush2.msra.mxu0 0.0
  %2605 = vmatprep.subr.mxu0 0.0
  %2606 = vmatpush2.msra.mxu0 0.0
  %2607 = vmatprep.subr.mxu0 0.0
  %2608 = vmatpush2.msra.mxu0 0.0
  %2609 = vmatprep.subr.mxu0 0.0
  %2610 = vmatpush2.msra.mxu0 0.0
  %2611 = vmatprep.subr.mxu0 0.0
  %2612 = vmatpush2.msra.mxu0 0.0
  %2613 = vmatprep.subr.mxu0 0.0
  %2614 = vmatpush2.msra.mxu0 0.0
  %2615 = vmatprep.subr.mxu0 0.0
  %2616 = vmatpush2.msra.mxu0 0.0
  %2617 = vmatprep.subr.mxu0 0.0
  %2618 = vmatpush2.msra.mxu0 0.0
  %2619 = vmatprep.subr.mxu0 0.0
  %2620 = vmatpush2.msra.mxu0 0.0
  %2621 = vmatprep.subr.mxu0 0.0
  %2622 = vmatpush2.msra.mxu0 0.0
  %2623 = vmatprep.mubr.f32.mxu0 0.0
  %2624 = vmatmul.mubr.f32.gmra.mxu0 %v2554
  %v2625 = vpop.f32.mrf.mxu0
  %v2626 = vadd.f32 0.0, %v2625
  %v2627 = vpop.f32.mrf.mxu0
  %2628 = vmatprep.mubr.f32.mxu0 0.0
  %2629 = vmatmul.mubr.f32.gmra.mxu0 %v2557
  %v2630 = vpop.f32.mrf.mxu0
  %v2631 = vadd.f32 0.0, %v2630
  %v2632 = vpop.f32.mrf.mxu0
  %2633 = vdwg.mxu0
  %v2634 = vadd.f32 %v2351, %v2626
  %v2635 = vadd.f32 %v2352, %v2631
  %2636 = vrot.lane.b32.xlu0 %v1775, 104
  %v2637 = vpop.permute.xlu0 %2636
  %2638 = vrot.lane.b32.xlu0 %v1780, 104
  %v2639 = vpop.permute.xlu0 %2638
  %2640 = vrot.lane.b32.xlu0 %v1775, 72
  %v2641 = vpop.permute.xlu0 %2640
  %2642 = vrot.lane.b32.xlu0 %v1780, 72
  %v2643 = vpop.permute.xlu0 %2642
  %v2644 = vsel %vm265, %v2637, 0
  %v2646 = vsel %vm265, %v2639, 0
  %v2648 = vsel %vm265, %v2641, 0
  %v2650 = vsel %vm265, %v2643, 0
  %2652 = vmatprep.subr.mxu0 0.0
  %2653 = vmatpush1.xpose.msra.mxu0 0.0
  %2654 = vmatprep.subr.mxu0 0.0
  %2655 = vmatpush1.xpose.msra.mxu0 0.0
  %2656 = vmatprep.subr.mxu0 0.0
  %2657 = vmatpush1.xpose.msra.mxu0 0.0
  %2658 = vmatprep.subr.mxu0 0.0
  %2659 = vmatpush1.xpose.msra.mxu0 0.0
  %2660 = vmatprep.subr.mxu0 0.0
  %2661 = vmatpush1.xpose.msra.mxu0 0.0
  %2662 = vmatprep.subr.mxu0 0.0
  %2663 = vmatpush1.xpose.msra.mxu0 0.0
  %2664 = vmatprep.subr.mxu0 0.0
  %2665 = vmatpush1.xpose.msra.mxu0 0.0
  %2666 = vmatprep.subr.mxu0 0.0
  %2667 = vmatpush1.xpose.msra.mxu0 0.0
  %2668 = vmatprep.subr.mxu0 0.0
  %2669 = vmatpush1.xpose.msra.mxu0 0.0
  %2670 = vmatprep.subr.mxu0 0.0
  %2671 = vmatpush1.xpose.msra.mxu0 0.0
  %2672 = vmatprep.subr.mxu0 0.0
  %2673 = vmatpush1.xpose.msra.mxu0 0.0
  %2674 = vmatprep.subr.mxu0 0.0
  %2675 = vmatpush1.xpose.msra.mxu0 0.0
  %2676 = vmatprep.subr.mxu0 0.0
  %2677 = vmatpush1.xpose.msra.mxu0 0.0
  %2678 = vmatprep.subr.mxu0 0.0
  %2679 = vmatpush1.xpose.msra.mxu0 0.0
  %2680 = vmatprep.subr.mxu0 0.0
  %2681 = vmatpush1.xpose.msra.mxu0 %v2650
  %2682 = vmatprep.subr.mxu0 0.0
  %2683 = vmatpush1.xpose.msra.mxu0 %v2648
  %2684 = vmatprep.subr.mxu0 0.0
  %2685 = vmatpush2.xpose.msra.mxu0 0.0
  %2686 = vmatprep.subr.mxu0 0.0
  %2687 = vmatpush2.xpose.msra.mxu0 0.0
  %2688 = vmatprep.subr.mxu0 0.0
  %2689 = vmatpush2.xpose.msra.mxu0 0.0
  %2690 = vmatprep.subr.mxu0 0.0
  %2691 = vmatpush2.xpose.msra.mxu0 0.0
  %2692 = vmatprep.subr.mxu0 0.0
  %2693 = vmatpush2.xpose.msra.mxu0 0.0
  %2694 = vmatprep.subr.mxu0 0.0
  %2695 = vmatpush2.xpose.msra.mxu0 0.0
  %2696 = vmatprep.subr.mxu0 0.0
  %2697 = vmatpush2.xpose.msra.mxu0 0.0
  %2698 = vmatprep.subr.mxu0 0.0
  %2699 = vmatpush2.xpose.msra.mxu0 0.0
  %2700 = vmatprep.subr.mxu0 0.0
  %2701 = vmatpush2.xpose.msra.mxu0 0.0
  %2702 = vmatprep.subr.mxu0 0.0
  %2703 = vmatpush2.xpose.msra.mxu0 0.0
  %2704 = vmatprep.subr.mxu0 0.0
  %2705 = vmatpush2.xpose.msra.mxu0 0.0
  %2706 = vmatprep.subr.mxu0 0.0
  %2707 = vmatpush2.xpose.msra.mxu0 0.0
  %2708 = vmatprep.subr.mxu0 0.0
  %2709 = vmatpush2.xpose.msra.mxu0 0.0
  %2710 = vmatprep.subr.mxu0 0.0
  %2711 = vmatpush2.xpose.msra.mxu0 0.0
  %2712 = vmatprep.subr.mxu0 0.0
  %2713 = vmatpush2.xpose.msra.mxu0 0.0
  %2714 = vmatprep.subr.mxu0 0.0
  %2715 = vmatpush2.xpose.msra.mxu0 0.0
  %2716 = vmatprep.mubr.f32.mxu0 0.0
  %2717 = vmatmul.mubr.f32.gmra.mxu0 %v2644
  %v2718 = vpop.f32.mrf.mxu0
  %v2719 = vadd.f32 %v159, %v2718
  %v2720 = vpop.f32.mrf.mxu0
  %2721 = vmatprep.mubr.f32.mxu0 0.0
  %2722 = vmatmul.mubr.f32.gmra.mxu0 %v2646
  %v2723 = vpop.f32.mrf.mxu0
  %v2724 = vadd.f32 %v160, %v2723
  %v2725 = vpop.f32.mrf.mxu0
  %2726 = vdwg.mxu0
  %v2727 = vsel %vm349, %v2719, -inf
  %2728 = vmax.xlane.f32.xlu0 %v2727
  %v2729 = vpop.xlane.xlu0 %2728
  %v2730 = vsel %vm349, %v2724, -inf
  %2731 = vmax.xlane.f32.xlu0 %v2730
  %v2732 = vpop.xlane.xlu0 %2731
  %v2733 = vsub.f32 %v2719, %v2729
  %v2734 = vsub.f32 %v2724, %v2732
  %v2735 = vmul.f32 %v2733, 1.442695
  %v2736 = vpow.pop %v2735
  %v2737 = vmul.f32 %v2734, 1.442695
  %v2738 = vpow.pop %v2737
  %v2739 = vsel %vm349, %v2736, 0.0
  %2740 = vadd.xlane.f32.xlu0 %v2739
  %v2741 = vpop.xlane.xlu0 %2740
  %v2742 = vsel %vm349, %v2738, 0.0
  %2743 = vadd.xlane.f32.xlu0 %v2742
  %v2744 = vpop.xlane.xlu0 %2743
  %v2745 = vrcp.pop %v2741
  %v2746 = vrcp.pop %v2744
  %v2747 = vmul.f32 %v2736, %v2745
  %v2748 = vmul.f32 %v2738, %v2746
  %2749 = vrot.lane.b32.xlu0 %v1775, 40
  %v2750 = vpop.permute.xlu0 %2749
  %2751 = vrot.lane.b32.xlu0 %v1780, 40
  %v2752 = vpop.permute.xlu0 %2751
  %v2756 = vsel %vm349, %v2747, 0
  %v2759 = vsel %vm349, %v2748, 0
  %2761 = vmatprep.subr.mxu0 0.0
  %2762 = vmatpush1.msra.mxu0 0.0
  %2763 = vmatprep.subr.mxu0 0.0
  %2764 = vmatpush1.msra.mxu0 0.0
  %2765 = vmatprep.subr.mxu0 0.0
  %2766 = vmatpush1.msra.mxu0 0.0
  %2767 = vmatprep.subr.mxu0 0.0
  %2768 = vmatpush1.msra.mxu0 0.0
  %2769 = vmatprep.subr.mxu0 0.0
  %2770 = vmatpush1.msra.mxu0 0.0
  %2771 = vmatprep.subr.mxu0 0.0
  %2772 = vmatpush1.msra.mxu0 0.0
  %2773 = vmatprep.subr.mxu0 0.0
  %2774 = vmatpush1.msra.mxu0 0.0
  %2775 = vmatprep.subr.mxu0 0.0
  %2776 = vmatpush1.msra.mxu0 0.0
  %2777 = vmatprep.subr.mxu0 0.0
  %2778 = vmatpush1.msra.mxu0 0.0
  %2779 = vmatprep.subr.mxu0 0.0
  %2780 = vmatpush1.msra.mxu0 0.0
  %2781 = vmatprep.subr.mxu0 0.0
  %2782 = vmatpush1.msra.mxu0 0.0
  %2783 = vmatprep.subr.mxu0 0.0
  %2784 = vmatpush1.msra.mxu0 0.0
  %2785 = vmatprep.subr.mxu0 0.0
  %2786 = vmatpush1.msra.mxu0 0.0
  %2787 = vmatprep.subr.mxu0 0.0
  %2788 = vmatpush1.msra.mxu0 0.0
  %2789 = vmatprep.subr.mxu0 0.0
  %2790 = vmatpush1.msra.mxu0 %v2752
  %2791 = vmatprep.subr.mxu0 0.0
  %2792 = vmatpush1.msra.mxu0 %v2750
  %2793 = vmatprep.subr.mxu0 0.0
  %2794 = vmatpush2.msra.mxu0 0.0
  %2795 = vmatprep.subr.mxu0 0.0
  %2796 = vmatpush2.msra.mxu0 0.0
  %2797 = vmatprep.subr.mxu0 0.0
  %2798 = vmatpush2.msra.mxu0 0.0
  %2799 = vmatprep.subr.mxu0 0.0
  %2800 = vmatpush2.msra.mxu0 0.0
  %2801 = vmatprep.subr.mxu0 0.0
  %2802 = vmatpush2.msra.mxu0 0.0
  %2803 = vmatprep.subr.mxu0 0.0
  %2804 = vmatpush2.msra.mxu0 0.0
  %2805 = vmatprep.subr.mxu0 0.0
  %2806 = vmatpush2.msra.mxu0 0.0
  %2807 = vmatprep.subr.mxu0 0.0
  %2808 = vmatpush2.msra.mxu0 0.0
  %2809 = vmatprep.subr.mxu0 0.0
  %2810 = vmatpush2.msra.mxu0 0.0
  %2811 = vmatprep.subr.mxu0 0.0
  %2812 = vmatpush2.msra.mxu0 0.0
  %2813 = vmatprep.subr.mxu0 0.0
  %2814 = vmatpush2.msra.mxu0 0.0
  %2815 = vmatprep.subr.mxu0 0.0
  %2816 = vmatpush2.msra.mxu0 0.0
  %2817 = vmatprep.subr.mxu0 0.0
  %2818 = vmatpush2.msra.mxu0 0.0
  %2819 = vmatprep.subr.mxu0 0.0
  %2820 = vmatpush2.msra.mxu0 0.0
  %2821 = vmatprep.subr.mxu0 0.0
  %2822 = vmatpush2.msra.mxu0 0.0
  %2823 = vmatprep.subr.mxu0 0.0
  %2824 = vmatpush2.msra.mxu0 0.0
  %2825 = vmatprep.mubr.f32.mxu0 0.0
  %2826 = vmatmul.mubr.f32.gmra.mxu0 %v2756
  %v2827 = vpop.f32.mrf.mxu0
  %v2828 = vadd.f32 0.0, %v2827
  %v2829 = vpop.f32.mrf.mxu0
  %2830 = vmatprep.mubr.f32.mxu0 0.0
  %2831 = vmatmul.mubr.f32.gmra.mxu0 %v2759
  %v2832 = vpop.f32.mrf.mxu0
  %v2833 = vadd.f32 0.0, %v2832
  %v2834 = vpop.f32.mrf.mxu0
  %2835 = vdwg.mxu0
  %v2837 = vsel %vm265, %v2828, 0
  %v2840 = vsel %vm265, %v2833, 0
  %2842 = vmatprep.subr.mxu0 0.0
  %2843 = vmatpush1.msra.mxu0 0.0
  %2844 = vmatprep.subr.mxu0 0.0
  %2845 = vmatpush1.msra.mxu0 0.0
  %2846 = vmatprep.subr.mxu0 0.0
  %2847 = vmatpush1.msra.mxu0 0.0
  %2848 = vmatprep.subr.mxu0 0.0
  %2849 = vmatpush1.msra.mxu0 0.0
  %2850 = vmatprep.subr.mxu0 0.0
  %2851 = vmatpush1.msra.mxu0 0.0
  %2852 = vmatprep.subr.mxu0 0.0
  %2853 = vmatpush1.msra.mxu0 0.0
  %2854 = vmatprep.subr.mxu0 0.0
  %2855 = vmatpush1.msra.mxu0 0.0
  %2856 = vmatprep.subr.mxu0 0.0
  %2857 = vmatpush1.msra.mxu0 0.0
  %2858 = vmatprep.subr.mxu0 0.0
  %2859 = vmatpush1.msra.mxu0 0.0
  %2860 = vmatprep.subr.mxu0 0.0
  %2861 = vmatpush1.msra.mxu0 0.0
  %2862 = vmatprep.subr.mxu0 0.0
  %2863 = vmatpush1.msra.mxu0 0.0
  %2864 = vmatprep.subr.mxu0 0.0
  %2865 = vmatpush1.msra.mxu0 0.0
  %2866 = vmatprep.subr.mxu0 0.0
  %2867 = vmatpush1.msra.mxu0 0.0
  %2868 = vmatprep.subr.mxu0 0.0
  %2869 = vmatpush1.msra.mxu0 0.0
  %2870 = vmatprep.subr.mxu0 0.0
  %2871 = vmatpush1.msra.mxu0 0.0
  %2872 = vmatprep.subr.mxu0 0.0
  %2873 = vmatpush1.msra.mxu0 %v1693
  %2874 = vmatprep.subr.mxu0 0.0
  %2875 = vmatpush2.msra.mxu0 0.0
  %2876 = vmatprep.subr.mxu0 0.0
  %2877 = vmatpush2.msra.mxu0 0.0
  %2878 = vmatprep.subr.mxu0 0.0
  %2879 = vmatpush2.msra.mxu0 0.0
  %2880 = vmatprep.subr.mxu0 0.0
  %2881 = vmatpush2.msra.mxu0 0.0
  %2882 = vmatprep.subr.mxu0 0.0
  %2883 = vmatpush2.msra.mxu0 0.0
  %2884 = vmatprep.subr.mxu0 0.0
  %2885 = vmatpush2.msra.mxu0 0.0
  %2886 = vmatprep.subr.mxu0 0.0
  %2887 = vmatpush2.msra.mxu0 0.0
  %2888 = vmatprep.subr.mxu0 0.0
  %2889 = vmatpush2.msra.mxu0 0.0
  %2890 = vmatprep.subr.mxu0 0.0
  %2891 = vmatpush2.msra.mxu0 0.0
  %2892 = vmatprep.subr.mxu0 0.0
  %2893 = vmatpush2.msra.mxu0 0.0
  %2894 = vmatprep.subr.mxu0 0.0
  %2895 = vmatpush2.msra.mxu0 0.0
  %2896 = vmatprep.subr.mxu0 0.0
  %2897 = vmatpush2.msra.mxu0 0.0
  %2898 = vmatprep.subr.mxu0 0.0
  %2899 = vmatpush2.msra.mxu0 0.0
  %2900 = vmatprep.subr.mxu0 0.0
  %2901 = vmatpush2.msra.mxu0 0.0
  %2902 = vmatprep.subr.mxu0 0.0
  %2903 = vmatpush2.msra.mxu0 0.0
  %2904 = vmatprep.subr.mxu0 0.0
  %2905 = vmatpush2.msra.mxu0 0.0
  %2906 = vmatprep.mubr.f32.mxu0 0.0
  %2907 = vmatmul.mubr.f32.gmra.mxu0 %v2837
  %v2908 = vpop.f32.mrf.mxu0
  %v2909 = vadd.f32 0.0, %v2908
  %v2910 = vpop.f32.mrf.mxu0
  %2911 = vmatprep.mubr.f32.mxu0 0.0
  %2912 = vmatmul.mubr.f32.gmra.mxu0 %v2840
  %v2913 = vpop.f32.mrf.mxu0
  %v2914 = vadd.f32 0.0, %v2913
  %v2915 = vpop.f32.mrf.mxu0
  %2916 = vdwg.mxu0
  %v2917 = vadd.f32 %v2634, %v2909
  %v2918 = vadd.f32 %v2635, %v2914
  %v2919 = vadd.f32 %v1680, %v2917
  %v2920 = vadd.f32 %v1681, %v2918
  %s2921 = scalar_lea.vmem %s8, 1
  %v2922 = vld [vmem:[%s2921] sm:$0x1]
  %s2923 = scalar_lea.vmem %s9, 1
  %v2924 = vld [vmem:[%s2923] sm:$0x1]
  %v2925 = vsel %vm177, %v2919, 0.0
  %2926 = vadd.xlane.f32.xlu0 %v2925
  %v2927 = vpop.xlane.xlu0 %2926
  %v2928 = vsel %vm177, %v2920, 0.0
  %2929 = vadd.xlane.f32.xlu0 %v2928
  %v2930 = vpop.xlane.xlu0 %2929
  %v2931 = vmul.f32 %v2927, %v1407
  %v2932 = vmul.f32 %v2930, %v1407
  %v2933 = vsub.f32 %v2919, %v2931
  %v2934 = vsub.f32 %v2920, %v2932
  %v2935 = vmul.f32 %v2933, %v2933
  %v2936 = vmul.f32 %v2934, %v2934
  %v2937 = vsel %vm177, %v2935, 0.0
  %2938 = vadd.xlane.f32.xlu0 %v2937
  %v2939 = vpop.xlane.xlu0 %2938
  %v2940 = vsel %vm177, %v2936, 0.0
  %2941 = vadd.xlane.f32.xlu0 %v2940
  %v2942 = vpop.xlane.xlu0 %2941
  %v2943 = vmul.f32 %v2939, %v1407
  %v2944 = vmul.f32 %v2942, %v1407
  %v2945 = vadd.f32 %v2943, 1e-05
  %v2946 = vadd.f32 %v2944, 1e-05
  %v2947 = vrsqrt.pop %v2945
  %v2948 = vrsqrt.pop %v2946
  %v2949 = vmul.f32 %v2933, %v2947
  %v2950 = vmul.f32 %v2934, %v2948
  %v2952 = vlaneseq
  %v2953 = vshrl.u32 %v2952, 7
  %v2954 = vsub.s32 0, %v2953
  %v2955 = vrot.slane %v2922, %v2954
  %v2957 = vmul.f32 %v2949, %v2955
  %v2958 = vmul.f32 %v2950, %v2955
  %v2960 = vlaneseq
  %v2961 = vshrl.u32 %v2960, 7
  %v2962 = vsub.s32 0, %v2961
  %v2963 = vrot.slane %v2924, %v2962
  %v2965 = vadd.f32 %v2957, %v2963
  %v2966 = vadd.f32 %v2958, %v2963
  %s2967 = scalar_lea.vmem %s10, 32
  %v2968 = vld [vmem:[%s2967] sm:$0xff]
  %v2969 = vld [vmem:[%s2967 + $0x8] sm:$0xff]
  %v2970 = vld [vmem:[%s2967 + $0x10] sm:$0xff]
  %v2971 = vld [vmem:[%s2967 + $0x18] sm:$0xff]
  %s2972 = scalar_lea.vmem %s11, 1
  %v2973 = vld [vmem:[%s2972] sm:$0x1]
  %v2975 = vlaneseq
  %v2976 = vshrl.u32 %v2975, 7
  %v2977 = vsub.s32 0, %v2976
  %v2978 = vrot.slane %v2973, %v2977
  %v2981 = vsel %vm177, %v2965, 0
  %v2984 = vsel %vm177, %v2966, 0
  %2986 = vmatprep.subr.mxu0 0.0
  %2987 = vmatpush1.msra.mxu0 0.0
  %2988 = vmatprep.subr.mxu0 0.0
  %2989 = vmatpush1.msra.mxu0 0.0
  %2990 = vmatprep.subr.mxu0 0.0
  %2991 = vmatpush1.msra.mxu0 0.0
  %2992 = vmatprep.subr.mxu0 0.0
  %2993 = vmatpush1.msra.mxu0 0.0
  %2994 = vmatprep.subr.mxu0 0.0
  %2995 = vmatpush1.msra.mxu0 0.0
  %2996 = vmatprep.subr.mxu0 0.0
  %2997 = vmatpush1.msra.mxu0 0.0
  %2998 = vmatprep.subr.mxu0 0.0
  %2999 = vmatpush1.msra.mxu0 0.0
  %3000 = vmatprep.subr.mxu0 0.0
  %3001 = vmatpush1.msra.mxu0 0.0
  %3002 = vmatprep.subr.mxu0 0.0
  %3003 = vmatpush1.msra.mxu0 0.0
  %3004 = vmatprep.subr.mxu0 0.0
  %3005 = vmatpush1.msra.mxu0 0.0
  %3006 = vmatprep.subr.mxu0 0.0
  %3007 = vmatpush1.msra.mxu0 0.0
  %3008 = vmatprep.subr.mxu0 0.0
  %3009 = vmatpush1.msra.mxu0 0.0
  %3010 = vmatprep.subr.mxu0 0.0
  %3011 = vmatpush1.msra.mxu0 %v2971
  %3012 = vmatprep.subr.mxu0 0.0
  %3013 = vmatpush1.msra.mxu0 %v2970
  %3014 = vmatprep.subr.mxu0 0.0
  %3015 = vmatpush1.msra.mxu0 %v2969
  %3016 = vmatprep.subr.mxu0 0.0
  %3017 = vmatpush1.msra.mxu0 %v2968
  %3018 = vmatprep.subr.mxu0 0.0
  %3019 = vmatpush2.msra.mxu0 0.0
  %3020 = vmatprep.subr.mxu0 0.0
  %3021 = vmatpush2.msra.mxu0 0.0
  %3022 = vmatprep.subr.mxu0 0.0
  %3023 = vmatpush2.msra.mxu0 0.0
  %3024 = vmatprep.subr.mxu0 0.0
  %3025 = vmatpush2.msra.mxu0 0.0
  %3026 = vmatprep.subr.mxu0 0.0
  %3027 = vmatpush2.msra.mxu0 0.0
  %3028 = vmatprep.subr.mxu0 0.0
  %3029 = vmatpush2.msra.mxu0 0.0
  %3030 = vmatprep.subr.mxu0 0.0
  %3031 = vmatpush2.msra.mxu0 0.0
  %3032 = vmatprep.subr.mxu0 0.0
  %3033 = vmatpush2.msra.mxu0 0.0
  %3034 = vmatprep.subr.mxu0 0.0
  %3035 = vmatpush2.msra.mxu0 0.0
  %3036 = vmatprep.subr.mxu0 0.0
  %3037 = vmatpush2.msra.mxu0 0.0
  %3038 = vmatprep.subr.mxu0 0.0
  %3039 = vmatpush2.msra.mxu0 0.0
  %3040 = vmatprep.subr.mxu0 0.0
  %3041 = vmatpush2.msra.mxu0 0.0
  %3042 = vmatprep.subr.mxu0 0.0
  %3043 = vmatpush2.msra.mxu0 0.0
  %3044 = vmatprep.subr.mxu0 0.0
  %3045 = vmatpush2.msra.mxu0 0.0
  %3046 = vmatprep.subr.mxu0 0.0
  %3047 = vmatpush2.msra.mxu0 0.0
  %3048 = vmatprep.subr.mxu0 0.0
  %3049 = vmatpush2.msra.mxu0 0.0
  %3050 = vmatprep.mubr.f32.mxu0 0.0
  %3051 = vmatmul.mubr.f32.gmra.mxu0 %v2981
  %v3052 = vpop.f32.mrf.mxu0
  %v3053 = vadd.f32 %v2978, %v3052
  %v3054 = vpop.f32.mrf.mxu0
  %3055 = vmatprep.mubr.f32.mxu0 0.0
  %3056 = vmatmul.mubr.f32.gmra.mxu0 %v2984
  %v3057 = vpop.f32.mrf.mxu0
  %v3058 = vadd.f32 %v2978, %v3057
  %v3059 = vpop.f32.mrf.mxu0
  %3060 = vdwg.mxu0
  %v3061 = vmax.f32 %v3053, 0.0
  %v3062 = vmax.f32 %v3058, 0.0
  %s3063 = scalar_lea.vmem %s12, 128
  %v3064 = vld [vmem:[%s3063] sm:$0xff]
  %v3065 = vld [vmem:[%s3063 + $0x8] sm:$0xff]
  %v3066 = vld [vmem:[%s3063 + $0x10] sm:$0xff]
  %v3067 = vld [vmem:[%s3063 + $0x18] sm:$0xff]
  %v3068 = vld [vmem:[%s3063 + $0x20] sm:$0xff]
  %v3069 = vld [vmem:[%s3063 + $0x28] sm:$0xff]
  %v3070 = vld [vmem:[%s3063 + $0x30] sm:$0xff]
  %v3071 = vld [vmem:[%s3063 + $0x38] sm:$0xff]
  %v3072 = vld [vmem:[%s3063 + $0x40] sm:$0xff]
  %v3073 = vld [vmem:[%s3063 + $0x48] sm:$0xff]
  %v3074 = vld [vmem:[%s3063 + $0x50] sm:$0xff]
  %v3075 = vld [vmem:[%s3063 + $0x58] sm:$0xff]
  %v3076 = vld [vmem:[%s3063 + $0x60] sm:$0xff]
  %v3077 = vld [vmem:[%s3063 + $0x68] sm:$0xff]
  %v3078 = vld [vmem:[%s3063 + $0x70] sm:$0xff]
  %v3079 = vld [vmem:[%s3063 + $0x78] sm:$0xff]
  %s3080 = scalar_lea.vmem %s13, 1
  %v3081 = vld [vmem:[%s3080] sm:$0x1]
  %v3083 = vlaneseq
  %v3084 = vshrl.u32 %v3083, 7
  %v3085 = vsub.s32 0, %v3084
  %v3086 = vrot.slane %v3081, %v3085
  %3088 = vmatprep.subr.mxu0 0.0
  %3089 = vmatpush1.msra.mxu0 %v3079
  %3090 = vmatprep.subr.mxu0 0.0
  %3091 = vmatpush1.msra.mxu0 %v3078
  %3092 = vmatprep.subr.mxu0 0.0
  %3093 = vmatpush1.msra.mxu0 %v3077
  %3094 = vmatprep.subr.mxu0 0.0
  %3095 = vmatpush1.msra.mxu0 %v3076
  %3096 = vmatprep.subr.mxu0 0.0
  %3097 = vmatpush1.msra.mxu0 %v3075
  %3098 = vmatprep.subr.mxu0 0.0
  %3099 = vmatpush1.msra.mxu0 %v3074
  %3100 = vmatprep.subr.mxu0 0.0
  %3101 = vmatpush1.msra.mxu0 %v3073
  %3102 = vmatprep.subr.mxu0 0.0
  %3103 = vmatpush1.msra.mxu0 %v3072
  %3104 = vmatprep.subr.mxu0 0.0
  %3105 = vmatpush1.msra.mxu0 %v3071
  %3106 = vmatprep.subr.mxu0 0.0
  %3107 = vmatpush1.msra.mxu0 %v3070
  %3108 = vmatprep.subr.mxu0 0.0
  %3109 = vmatpush1.msra.mxu0 %v3069
  %3110 = vmatprep.subr.mxu0 0.0
  %3111 = vmatpush1.msra.mxu0 %v3068
  %3112 = vmatprep.subr.mxu0 0.0
  %3113 = vmatpush1.msra.mxu0 %v3067
  %3114 = vmatprep.subr.mxu0 0.0
  %3115 = vmatpush1.msra.mxu0 %v3066
  %3116 = vmatprep.subr.mxu0 0.0
  %3117 = vmatpush1.msra.mxu0 %v3065
  %3118 = vmatprep.subr.mxu0 0.0
  %3119 = vmatpush1.msra.mxu0 %v3064
  %3120 = vmatprep.subr.mxu0 0.0
  %3121 = vmatpush2.msra.mxu0 0.0
  %3122 = vmatprep.subr.mxu0 0.0
  %3123 = vmatpush2.msra.mxu0 0.0
  %3124 = vmatprep.subr.mxu0 0.0
  %3125 = vmatpush2.msra.mxu0 0.0
  %3126 = vmatprep.subr.mxu0 0.0
  %3127 = vmatpush2.msra.mxu0 0.0
  %3128 = vmatprep.subr.mxu0 0.0
  %3129 = vmatpush2.msra.mxu0 0.0
  %3130 = vmatprep.subr.mxu0 0.0
  %3131 = vmatpush2.msra.mxu0 0.0
  %3132 = vmatprep.subr.mxu0 0.0
  %3133 = vmatpush2.msra.mxu0 0.0
  %3134 = vmatprep.subr.mxu0 0.0
  %3135 = vmatpush2.msra.mxu0 0.0
  %3136 = vmatprep.subr.mxu0 0.0
  %3137 = vmatpush2.msra.mxu0 0.0
  %3138 = vmatprep.subr.mxu0 0.0
  %3139 = vmatpush2.msra.mxu0 0.0
  %3140 = vmatprep.subr.mxu0 0.0
  %3141 = vmatpush2.msra.mxu0 0.0
  %3142 = vmatprep.subr.mxu0 0.0
  %3143 = vmatpush2.msra.mxu0 0.0
  %3144 = vmatprep.subr.mxu0 0.0
  %3145 = vmatpush2.msra.mxu0 0.0
  %3146 = vmatprep.subr.mxu0 0.0
  %3147 = vmatpush2.msra.mxu0 0.0
  %3148 = vmatprep.subr.mxu0 0.0
  %3149 = vmatpush2.msra.mxu0 0.0
  %3150 = vmatprep.subr.mxu0 0.0
  %3151 = vmatpush2.msra.mxu0 0.0
  %3152 = vmatprep.mubr.f32.mxu0 0.0
  %3153 = vmatmul.mubr.f32.gmra.mxu0 %v3061
  %v3154 = vpop.f32.mrf.mxu0
  %v3155 = vadd.f32 %v3086, %v3154
  %v3156 = vpop.f32.mrf.mxu0
  %3157 = vmatprep.mubr.f32.mxu0 0.0
  %3158 = vmatmul.mubr.f32.gmra.mxu0 %v3062
  %v3159 = vpop.f32.mrf.mxu0
  %v3160 = vadd.f32 %v3086, %v3159
  %v3161 = vpop.f32.mrf.mxu0
  %3162 = vdwg.mxu0
  %v3163 = vadd.f32 %v2965, %v3155
  %v3164 = vadd.f32 %v2966, %v3160
  %s3165 = scalar_lea.vmem %s14, 1
  %v3166 = vld [vmem:[%s3165] sm:$0x1]
  %s3167 = scalar_lea.vmem %s15, 1
  %v3168 = vld [vmem:[%s3167] sm:$0x1]
  %v3169 = vsel %vm177, %v3163, 0.0
  %3170 = vadd.xlane.f32.xlu0 %v3169
  %v3171 = vpop.xlane.xlu0 %3170
  %v3172 = vsel %vm177, %v3164, 0.0
  %3173 = vadd.xlane.f32.xlu0 %v3172
  %v3174 = vpop.xlane.xlu0 %3173
  %v3175 = vmul.f32 %v3171, %v1407
  %v3176 = vmul.f32 %v3174, %v1407
  %v3177 = vsub.f32 %v3163, %v3175
  %v3178 = vsub.f32 %v3164, %v3176
  %v3179 = vmul.f32 %v3177, %v3177
  %v3180 = vmul.f32 %v3178, %v3178
  %v3181 = vsel %vm177, %v3179, 0.0
  %3182 = vadd.xlane.f32.xlu0 %v3181
  %v3183 = vpop.xlane.xlu0 %3182
  %v3184 = vsel %vm177, %v3180, 0.0
  %3185 = vadd.xlane.f32.xlu0 %v3184
  %v3186 = vpop.xlane.xlu0 %3185
  %v3187 = vmul.f32 %v3183, %v1407
  %v3188 = vmul.f32 %v3186, %v1407
  %v3189 = vadd.f32 %v3187, 1e-05
  %v3190 = vadd.f32 %v3188, 1e-05
  %v3191 = vrsqrt.pop %v3189
  %v3192 = vrsqrt.pop %v3190
  %v3193 = vmul.f32 %v3177, %v3191
  %v3194 = vmul.f32 %v3178, %v3192
  %v3196 = vlaneseq
  %v3197 = vshrl.u32 %v3196, 7
  %v3198 = vsub.s32 0, %v3197
  %v3199 = vrot.slane %v3166, %v3198
  %v3201 = vmul.f32 %v3193, %v3199
  %v3202 = vmul.f32 %v3194, %v3199
  %v3204 = vlaneseq
  %v3205 = vshrl.u32 %v3204, 7
  %v3206 = vsub.s32 0, %v3205
  %v3207 = vrot.slane %v3168, %v3206
  %v3209 = vadd.f32 %v3201, %v3207
  %v3210 = vadd.f32 %v3202, %v3207
  %v3211 = vld [vmem:[%s16] sm:$0x3]
  %v3213 = vsel %vm349, %v3211, 0
  %3215 = vmatprep.subr.mxu0 0.0
  %3216 = vmatpush1.msra.mxu0 0.0
  %3217 = vmatprep.subr.mxu0 0.0
  %3218 = vmatpush1.msra.mxu0 0.0
  %3219 = vmatprep.subr.mxu0 0.0
  %3220 = vmatpush1.msra.mxu0 0.0
  %3221 = vmatprep.subr.mxu0 0.0
  %3222 = vmatpush1.msra.mxu0 0.0
  %3223 = vmatprep.subr.mxu0 0.0
  %3224 = vmatpush1.msra.mxu0 0.0
  %3225 = vmatprep.subr.mxu0 0.0
  %3226 = vmatpush1.msra.mxu0 0.0
  %3227 = vmatprep.subr.mxu0 0.0
  %3228 = vmatpush1.msra.mxu0 0.0
  %3229 = vmatprep.subr.mxu0 0.0
  %3230 = vmatpush1.msra.mxu0 0.0
  %3231 = vmatprep.subr.mxu0 0.0
  %3232 = vmatpush1.msra.mxu0 0.0
  %3233 = vmatprep.subr.mxu0 0.0
  %3234 = vmatpush1.msra.mxu0 0.0
  %3235 = vmatprep.subr.mxu0 0.0
  %3236 = vmatpush1.msra.mxu0 0.0
  %3237 = vmatprep.subr.mxu0 0.0
  %3238 = vmatpush1.msra.mxu0 0.0
  %3239 = vmatprep.subr.mxu0 0.0
  %3240 = vmatpush1.msra.mxu0 0.0
  %3241 = vmatprep.subr.mxu0 0.0
  %3242 = vmatpush1.msra.mxu0 0.0
  %3243 = vmatprep.subr.mxu0 0.0
  %3244 = vmatpush1.msra.mxu0 %v3210
  %3245 = vmatprep.subr.mxu0 0.0
  %3246 = vmatpush1.msra.mxu0 %v3209
  %3247 = vmatprep.subr.mxu0 0.0
  %3248 = vmatpush2.msra.mxu0 0.0
  %3249 = vmatprep.subr.mxu0 0.0
  %3250 = vmatpush2.msra.mxu0 0.0
  %3251 = vmatprep.subr.mxu0 0.0
  %3252 = vmatpush2.msra.mxu0 0.0
  %3253 = vmatprep.subr.mxu0 0.0
  %3254 = vmatpush2.msra.mxu0 0.0
  %3255 = vmatprep.subr.mxu0 0.0
  %3256 = vmatpush2.msra.mxu0 0.0
  %3257 = vmatprep.subr.mxu0 0.0
  %3258 = vmatpush2.msra.mxu0 0.0
  %3259 = vmatprep.subr.mxu0 0.0
  %3260 = vmatpush2.msra.mxu0 0.0
  %3261 = vmatprep.subr.mxu0 0.0
  %3262 = vmatpush2.msra.mxu0 0.0
  %3263 = vmatprep.subr.mxu0 0.0
  %3264 = vmatpush2.msra.mxu0 0.0
  %3265 = vmatprep.subr.mxu0 0.0
  %3266 = vmatpush2.msra.mxu0 0.0
  %3267 = vmatprep.subr.mxu0 0.0
  %3268 = vmatpush2.msra.mxu0 0.0
  %3269 = vmatprep.subr.mxu0 0.0
  %3270 = vmatpush2.msra.mxu0 0.0
  %3271 = vmatprep.subr.mxu0 0.0
  %3272 = vmatpush2.msra.mxu0 0.0
  %3273 = vmatprep.subr.mxu0 0.0
  %3274 = vmatpush2.msra.mxu0 0.0
  %3275 = vmatprep.subr.mxu0 0.0
  %3276 = vmatpush2.msra.mxu0 0.0
  %3277 = vmatprep.subr.mxu0 0.0
  %3278 = vmatpush2.msra.mxu0 0.0
  %3279 = vmatprep.mubr.f32.mxu0 0.0
  %3280 = vmatmul.mubr.f32.gmra.mxu0 %v3213
  %v3281 = vpop.f32.mrf.mxu0
  %v3282 = vadd.f32 0.0, %v3281
  %v3283 = vpop.f32.mrf.mxu0
  %3284 = vdwg.mxu0
  %v3285 = vld [vmem:[%s17] sm:$0xff]
  %v3286 = vld [vmem:[%s17 + $0x8] sm:$0xff]
  %v3287 = vld [vmem:[%s17 + $0x10] sm:$0xff]
  %v3288 = vld [vmem:[%s17 + $0x18] sm:$0xff]
  %v3289 = vld [vmem:[%s18] sm:$0x1]
  %v3291 = vlaneseq
  %v3292 = vshrl.u32 %v3291, 7
  %v3293 = vsub.s32 0, %v3292
  %v3294 = vrot.slane %v3289, %v3293
  %v3297 = vsel %vm177, %v3282, 0
  %3299 = vmatprep.subr.mxu0 0.0
  %3300 = vmatpush1.msra.mxu0 0.0
  %3301 = vmatprep.subr.mxu0 0.0
  %3302 = vmatpush1.msra.mxu0 0.0
  %3303 = vmatprep.subr.mxu0 0.0
  %3304 = vmatpush1.msra.mxu0 0.0
  %3305 = vmatprep.subr.mxu0 0.0
  %3306 = vmatpush1.msra.mxu0 0.0
  %3307 = vmatprep.subr.mxu0 0.0
  %3308 = vmatpush1.msra.mxu0 0.0
  %3309 = vmatprep.subr.mxu0 0.0
  %3310 = vmatpush1.msra.mxu0 0.0
  %3311 = vmatprep.subr.mxu0 0.0
  %3312 = vmatpush1.msra.mxu0 0.0
  %3313 = vmatprep.subr.mxu0 0.0
  %3314 = vmatpush1.msra.mxu0 0.0
  %3315 = vmatprep.subr.mxu0 0.0
  %3316 = vmatpush1.msra.mxu0 0.0
  %3317 = vmatprep.subr.mxu0 0.0
  %3318 = vmatpush1.msra.mxu0 0.0
  %3319 = vmatprep.subr.mxu0 0.0
  %3320 = vmatpush1.msra.mxu0 0.0
  %3321 = vmatprep.subr.mxu0 0.0
  %3322 = vmatpush1.msra.mxu0 0.0
  %3323 = vmatprep.subr.mxu0 0.0
  %3324 = vmatpush1.msra.mxu0 %v3288
  %3325 = vmatprep.subr.mxu0 0.0
  %3326 = vmatpush1.msra.mxu0 %v3287
  %3327 = vmatprep.subr.mxu0 0.0
  %3328 = vmatpush1.msra.mxu0 %v3286
  %3329 = vmatprep.subr.mxu0 0.0
  %3330 = vmatpush1.msra.mxu0 %v3285
  %3331 = vmatprep.subr.mxu0 0.0
  %3332 = vmatpush2.msra.mxu0 0.0
  %3333 = vmatprep.subr.mxu0 0.0
  %3334 = vmatpush2.msra.mxu0 0.0
  %3335 = vmatprep.subr.mxu0 0.0
  %3336 = vmatpush2.msra.mxu0 0.0
  %3337 = vmatprep.subr.mxu0 0.0
  %3338 = vmatpush2.msra.mxu0 0.0
  %3339 = vmatprep.subr.mxu0 0.0
  %3340 = vmatpush2.msra.mxu0 0.0
  %3341 = vmatprep.subr.mxu0 0.0
  %3342 = vmatpush2.msra.mxu0 0.0
  %3343 = vmatprep.subr.mxu0 0.0
  %3344 = vmatpush2.msra.mxu0 0.0
  %3345 = vmatprep.subr.mxu0 0.0
  %3346 = vmatpush2.msra.mxu0 0.0
  %3347 = vmatprep.subr.mxu0 0.0
  %3348 = vmatpush2.msra.mxu0 0.0
  %3349 = vmatprep.subr.mxu0 0.0
  %3350 = vmatpush2.msra.mxu0 0.0
  %3351 = vmatprep.subr.mxu0 0.0
  %3352 = vmatpush2.msra.mxu0 0.0
  %3353 = vmatprep.subr.mxu0 0.0
  %3354 = vmatpush2.msra.mxu0 0.0
  %3355 = vmatprep.subr.mxu0 0.0
  %3356 = vmatpush2.msra.mxu0 0.0
  %3357 = vmatprep.subr.mxu0 0.0
  %3358 = vmatpush2.msra.mxu0 0.0
  %3359 = vmatprep.subr.mxu0 0.0
  %3360 = vmatpush2.msra.mxu0 0.0
  %3361 = vmatprep.subr.mxu0 0.0
  %3362 = vmatpush2.msra.mxu0 0.0
  %3363 = vmatprep.mubr.f32.mxu0 0.0
  %3364 = vmatmul.mubr.f32.gmra.mxu0 %v3297
  %v3365 = vpop.f32.mrf.mxu0
  %v3366 = vadd.f32 %v3294, %v3365
  %v3367 = vpop.f32.mrf.mxu0
  %3368 = vdwg.mxu0
  %vm3369 = vcmp.ge.f32.partialorder %v3366, 0.0
  %v3370 = vmul.f32 %v3366, 0.01
  %v3371 = vsel %vm3369, %v3366, %v3370
  %v3372 = vld [vmem:[%s19] sm:$0xff]
  %v3373 = vld [vmem:[%s19 + $0x8] sm:$0xff]
  %v3374 = vld [vmem:[%s20] sm:$0x1]
  %v3376 = vlaneseq
  %v3377 = vshrl.u32 %v3376, 7
  %v3378 = vsub.s32 0, %v3377
  %v3379 = vrot.slane %v3374, %v3378
  %v3382 = vsel %vm349, %v3371, 0
  %3384 = vmatprep.subr.mxu0 0.0
  %3385 = vmatpush1.msra.mxu0 0.0
  %3386 = vmatprep.subr.mxu0 0.0
  %3387 = vmatpush1.msra.mxu0 0.0
  %3388 = vmatprep.subr.mxu0 0.0
  %3389 = vmatpush1.msra.mxu0 0.0
  %3390 = vmatprep.subr.mxu0 0.0
  %3391 = vmatpush1.msra.mxu0 0.0
  %3392 = vmatprep.subr.mxu0 0.0
  %3393 = vmatpush1.msra.mxu0 0.0
  %3394 = vmatprep.subr.mxu0 0.0
  %3395 = vmatpush1.msra.mxu0 0.0
  %3396 = vmatprep.subr.mxu0 0.0
  %3397 = vmatpush1.msra.mxu0 0.0
  %3398 = vmatprep.subr.mxu0 0.0
  %3399 = vmatpush1.msra.mxu0 0.0
  %3400 = vmatprep.subr.mxu0 0.0
  %3401 = vmatpush1.msra.mxu0 0.0
  %3402 = vmatprep.subr.mxu0 0.0
  %3403 = vmatpush1.msra.mxu0 0.0
  %3404 = vmatprep.subr.mxu0 0.0
  %3405 = vmatpush1.msra.mxu0 0.0
  %3406 = vmatprep.subr.mxu0 0.0
  %3407 = vmatpush1.msra.mxu0 0.0
  %3408 = vmatprep.subr.mxu0 0.0
  %3409 = vmatpush1.msra.mxu0 0.0
  %3410 = vmatprep.subr.mxu0 0.0
  %3411 = vmatpush1.msra.mxu0 0.0
  %3412 = vmatprep.subr.mxu0 0.0
  %3413 = vmatpush1.msra.mxu0 %v3373
  %3414 = vmatprep.subr.mxu0 0.0
  %3415 = vmatpush1.msra.mxu0 %v3372
  %3416 = vmatprep.subr.mxu0 0.0
  %3417 = vmatpush2.msra.mxu0 0.0
  %3418 = vmatprep.subr.mxu0 0.0
  %3419 = vmatpush2.msra.mxu0 0.0
  %3420 = vmatprep.subr.mxu0 0.0
  %3421 = vmatpush2.msra.mxu0 0.0
  %3422 = vmatprep.subr.mxu0 0.0
  %3423 = vmatpush2.msra.mxu0 0.0
  %3424 = vmatprep.subr.mxu0 0.0
  %3425 = vmatpush2.msra.mxu0 0.0
  %3426 = vmatprep.subr.mxu0 0.0
  %3427 = vmatpush2.msra.mxu0 0.0
  %3428 = vmatprep.subr.mxu0 0.0
  %3429 = vmatpush2.msra.mxu0 0.0
  %3430 = vmatprep.subr.mxu0 0.0
  %3431 = vmatpush2.msra.mxu0 0.0
  %3432 = vmatprep.subr.mxu0 0.0
  %3433 = vmatpush2.msra.mxu0 0.0
  %3434 = vmatprep.subr.mxu0 0.0
  %3435 = vmatpush2.msra.mxu0 0.0
  %3436 = vmatprep.subr.mxu0 0.0
  %3437 = vmatpush2.msra.mxu0 0.0
  %3438 = vmatprep.subr.mxu0 0.0
  %3439 = vmatpush2.msra.mxu0 0.0
  %3440 = vmatprep.subr.mxu0 0.0
  %3441 = vmatpush2.msra.mxu0 0.0
  %3442 = vmatprep.subr.mxu0 0.0
  %3443 = vmatpush2.msra.mxu0 0.0
  %3444 = vmatprep.subr.mxu0 0.0
  %3445 = vmatpush2.msra.mxu0 0.0
  %3446 = vmatprep.subr.mxu0 0.0
  %3447 = vmatpush2.msra.mxu0 0.0
  %3448 = vmatprep.mubr.f32.mxu0 0.0
  %3449 = vmatmul.mubr.f32.gmra.mxu0 %v3382
  %v3450 = vpop.f32.mrf.mxu0
  %v3451 = vadd.f32 %v3379, %v3450
  %v3452 = vpop.f32.mrf.mxu0
  %3453 = vdwg.mxu0
  %3454 = vst [vmem:[%s21] sm:$0x3] %v3451
  // Predicated region
  $region86: #{transformer_forward.1} parent=0 // pred_check
    _
  $region87: #{transformer_forward.1} parent=0 // pred_check_branch
    %3456 = sbr.rel (0) target = $region89
  $region88: #{transformer_forward.1} parent=0 // pred_region
    _
  $region89: #{transformer_forward.1} parent=0 // pred_fallthru
    _
  // Predicated region
  $region90: #{transformer_forward.1} parent=0 // pred_check
    _
  $region91: #{transformer_forward.1} parent=0 // pred_check_branch
    %3458 = sbr.rel (0) target = $region93
  $region92: #{transformer_forward.1} parent=0 // pred_region
    _
  $region93: #{transformer_forward.1} parent=0 // pred_fallthru
    _

</llo_original>
